<compile_context>
chip_gen: v7x
topology: tpu7x:2x2x1
jax: 0.10.0
libtpu: 0.0.40
codegen_flags: <defaults>
</compile_context>

<pallas_src>
import math

import jax
import jax.numpy as jnp
from jax import lax
from jax.experimental import pallas as pl
from jax.experimental.pallas import tpu as pltpu

N_NODES = 177      # hard-coded in EdgeBase_GATConv.update: view(1, 177, out_channels)
IN_CH = 128
OUT_CH = 128
EDGE_DIM = 1
HEADS = 1          # heads == 1, so the head axis / mean(dim=1) is an identity
NEG_SLOPE = 0.2


def edge_gat_kernel(x_ref, wext_ref, att_e_ref, eattr_ref,
                    src_ref, tgt_ref, tgt_row_ref, eupd_ref, bias_ref, out_ref):
    E = src_ref.shape[0]
    N = x_ref.shape[0]
    F = out_ref.shape[1]

    # extended node projection on MXU: h_ext = x @ [W | W@att_i | W@att_j]   [N, F+2]
    h_ext = jnp.dot(x_ref[...], wext_ref[...], preferred_element_type=jnp.float32)

    # --- build gather/scatter one-hots in-register (never DMA'd from HBM) ---
    src = src_ref[...]                                   # [E, 1] int32
    tgt = tgt_ref[...]                                   # [E, 1] int32
    tgt_row = tgt_row_ref[...]                           # [1, E] int32
    iota_en = lax.broadcasted_iota(jnp.int32, (E, N), 1)
    iota_ne = lax.broadcasted_iota(jnp.int32, (N, E), 0)
    gsrc = (iota_en == src).astype(jnp.float32)          # [E, N] one-hot of edge source
    gtgt_b = iota_en == tgt                              # [E, N] one-hot of edge target
    gtgt = gtgt_b.astype(jnp.float32)
    stgt = (iota_ne == tgt_row).astype(jnp.float32)      # [N, E] scatter matrix (= gtgt^T)

    # --- attention logits ----------------------------------------------------
    # a_i = (h @ att_i)[tgt]   via a tiny matvec on the folded column F of h_ext
    a_i = jnp.dot(gtgt, h_ext[:, F:F + 1], preferred_element_type=jnp.float32)   # [E, 1]
    # one gather gives both the source features and (h @ att_j)[src]
    x_j_ext = jnp.dot(gsrc, h_ext, preferred_element_type=jnp.float32)           # [E, F+2]
    x_j = x_j_ext[:, :F]                                                          # [E, F]
    a_j = x_j_ext[:, F + 1:F + 2]                                                 # [E, 1]

    eattr = eattr_ref[...]                                                        # [E, 1]
    alpha = a_i + a_j + eattr * att_e_ref[...]                                    # [E, 1]
    alpha = jnp.where(alpha >= 0, alpha, NEG_SLOPE * alpha)                       # leaky_relu(0.2)

    # --- softmax_sx: segment softmax grouped by target node ------------------
    neg_big = jnp.float32(-1e30)                                  # finite sentinel (0*(-1e30)=0)
    masked = jnp.where(gtgt_b, alpha, neg_big)                    # [E, N]
    max_per_node = jnp.max(masked, axis=0, keepdims=True)         # [1, N]
    # MXU gather-back (NT matmul: contract the lane dims of gtgt and max_per_node)
    max_e = lax.dot_general(gtgt, max_per_node,
                            dimension_numbers=(((1,), (1,)), ((), ())),
                            preferred_element_type=jnp.float32)   # [E, 1]
    ex = jnp.exp(alpha - max_e)                                   # [E, 1]
    sum_per_node = jnp.dot(stgt, ex, preferred_element_type=jnp.float32)      # [N, 1]
    sum_e = jnp.dot(gtgt, sum_per_node, preferred_element_type=jnp.float32)   # [E, 1]
    alpha_sm = ex / (sum_e + 1e-16)

    # --- message = cat([x_j, edge_attr]) * alpha ; scatter-add ; update ------
    msg = jnp.concatenate([x_j, eattr], axis=1) * alpha_sm                     # [E, F+1]
    aggr = jnp.dot(stgt, msg, preferred_element_type=jnp.float32)              # [N, F+1]
    out_ref[...] = (jnp.dot(aggr, eupd_ref[...], preferred_element_type=jnp.float32)
                    + bias_ref[...])


def edge_gnn_forward(x, params, src, tgt):
    """x: [B, N, C]; src/tgt: [E] int32. Returns [1, 177, OUT_CH] (batch 0 only)."""
    x0 = x[0]
    src_col = src.astype(jnp.int32).reshape(-1, 1)      # [E, 1]
    tgt_col = tgt.astype(jnp.int32).reshape(-1, 1)      # [E, 1]
    tgt_row = tgt.astype(jnp.int32).reshape(1, -1)      # [1, E] (for the scatter matrix)
    E = int(src_col.shape[0])
    N, F = N_NODES, OUT_CH

    # host-side fold of att_i / att_j into the node projection
    w_ext = jnp.concatenate(
        [params['weight'],
         params['weight'] @ params['att_i'],
         params['weight'] @ params['att_j']], axis=1)    # [IN_CH, F+2]
    eupd = params['edge_update1']                        # [F+1, F] (unsplit)

    args = (x0, w_ext, params['att_e'], params['edge_attr'],
            src_col, tgt_col, tgt_row, eupd, params['bias'])

    # advisory cost hint: tiny MXU work, a few hundred KB of HBM traffic
    matmul_flops = 2 * (N * IN_CH * (F + 2)   # x @ W_ext
                        + E * N               # gtgt @ h_ext[:, F]
                        + E * N * (F + 2)     # gsrc @ h_ext (x_j / a_j gather)
                        + E * N               # gtgt @ max_per_node^T
                        + N * E               # stgt @ ex
                        + E * N               # gtgt @ sum_per_node
                        + N * E * (F + 1)     # stgt @ msg
                        + N * (F + 1) * F)    # aggr @ edge_update1
    bytes_accessed = sum(int(a.size) * int(a.dtype.itemsize) for a in args) + N * F * 4
    cost = pl.CostEstimate(flops=int(matmul_flops),
                           transcendentals=int(E),
                           bytes_accessed=int(bytes_accessed))

    vmem = pl.BlockSpec(memory_space=pltpu.MemorySpace.VMEM)
    out = pl.pallas_call(
        edge_gat_kernel,
        out_shape=jax.ShapeDtypeStruct((N, F), jnp.float32),
        in_specs=[vmem] * len(args),
        out_specs=vmem,
        cost_estimate=cost,
    )(*args)
    return out.reshape(1, N, F)


# TODO(synk): lin0..lin4 and the locally created `pconv = nn.Linear(in_channels, 1)`
# are never used in Edge_GNNNet.forward / EdgeBase_GATConv.forward (dead code in
# the reference module), so they are intentionally not implemented.


if __name__ == "__main__":
    key = jax.random.PRNGKey(0)
    k = jax.random.split(key, 8)
    B = 2
    E = 400

    # deterministic graph
    src = jax.random.randint(k[0], (E,), 0, N_NODES)
    tgt = jax.random.randint(k[1], (E,), 0, N_NODES)
    edge_attr = jax.random.normal(k[2], (E, EDGE_DIM), dtype=jnp.float32)

    # parameters, glorot-initialized like reset_parameters()
    def glorot(rng, shape, fan_in, fan_out):
        stdv = math.sqrt(6.0 / (fan_in + fan_out))
        return jax.random.uniform(rng, shape, jnp.float32, -stdv, stdv)

    weight = glorot(k[3], (IN_CH, HEADS * OUT_CH), IN_CH, HEADS * OUT_CH)
    att = glorot(k[4], (1, HEADS, 2 * OUT_CH + EDGE_DIM), 1, 2 * OUT_CH + EDGE_DIM)
    edge_update1 = glorot(k[5], (OUT_CH + EDGE_DIM, OUT_CH), OUT_CH + EDGE_DIM, OUT_CH)
    bias = jnp.zeros((OUT_CH,), jnp.float32)

    params = dict(
        weight=weight,
        att_i=att[0, 0, :OUT_CH].reshape(OUT_CH, 1),
        att_j=att[0, 0, OUT_CH:2 * OUT_CH].reshape(OUT_CH, 1),
        att_e=att[0, 0, 2 * OUT_CH:].reshape(1, 1),
        edge_attr=edge_attr,
        edge_update1=edge_update1,
        bias=bias.reshape(1, OUT_CH),
    )

    x = jax.random.normal(k[6], (B, N_NODES, IN_CH), dtype=jnp.float32)

    out = edge_gnn_forward(x, params, src, tgt)
    out = jax.block_until_ready(out)

    # pure-JAX reference of the exact PyTorch semantics
    h = x[0] @ weight
    xj, xi = h[src], h[tgt]
    a = (xi @ params['att_i'] + xj @ params['att_j'] + edge_attr * params['att_e'])[:, 0]
    a = jnp.where(a >= 0, a, NEG_SLOPE * a)
    amax = jax.ops.segment_max(a, tgt, num_segments=N_NODES)
    aexp = jnp.exp(a - amax[tgt])
    asum = jax.ops.segment_sum(aexp, tgt, num_segments=N_NODES)
    alpha = aexp / (asum[tgt] + 1e-16)
    msg = jnp.concatenate([xj, edge_attr], axis=-1) * alpha[:, None]
    aggr = jax.ops.segment_sum(msg, tgt, num_segments=N_NODES)
    ref = (aggr @ edge_update1 + bias).reshape(1, N_NODES, OUT_CH)

    assert out.shape == (1, N_NODES, OUT_CH)
    assert jnp.allclose(out, ref, rtol=2e-3, atol=2e-3), float(jnp.max(jnp.abs(out - ref)))

    print("KERNEL_OK")
</pallas_src>

<mosaic_0001>
module attributes {stable_mosaic.version = 11 : i64} {
  func.func @edge_gat_kernel(%arg0: memref<177x128xf32, #tpu.memory_space<vmem>>, %arg1: memref<128x130xf32, #tpu.memory_space<vmem>>, %arg2: memref<1x1xf32, #tpu.memory_space<vmem>>, %arg3: memref<400x1xf32, #tpu.memory_space<vmem>>, %arg4: memref<400x1xi32, #tpu.memory_space<vmem>>, %arg5: memref<400x1xi32, #tpu.memory_space<vmem>>, %arg6: memref<1x400xi32, #tpu.memory_space<vmem>>, %arg7: memref<129x128xf32, #tpu.memory_space<vmem>>, %arg8: memref<1x128xf32, #tpu.memory_space<vmem>>, %arg9: memref<177x128xf32, #tpu.memory_space<vmem>>) attributes {dimension_semantics = [], scalar_prefetch = 0 : i64, scratch_operands = 0 : i64, tpu.core_type = #tpu.core_type<tc>} {
    %c0 = arith.constant 0 : index
    %c0_0 = arith.constant 0 : index
    %0 = vector.load %arg0[%c0, %c0_0] : memref<177x128xf32, #tpu.memory_space<vmem>>, vector<177x128xf32>
    %c0_1 = arith.constant 0 : index
    %c0_2 = arith.constant 0 : index
    %1 = vector.load %arg1[%c0_1, %c0_2] : memref<128x130xf32, #tpu.memory_space<vmem>>, vector<128x130xf32>
    %cst = arith.constant dense<0.000000e+00> : vector<177x130xf32>
    %2 = tpu.matmul %0, %1, %cst {dimension_numbers = #tpu.dot_dimension_numbers<[1], [0], [0], [1], [0, 0, 1, 1], [], []>} : vector<177x128xf32>, vector<128x130xf32>, vector<177x130xf32> -> vector<177x130xf32>
    %c0_3 = arith.constant 0 : index
    %c0_4 = arith.constant 0 : index
    %3 = vector.load %arg4[%c0_3, %c0_4] : memref<400x1xi32, #tpu.memory_space<vmem>>, vector<400x1xi32>
    %c0_5 = arith.constant 0 : index
    %c0_6 = arith.constant 0 : index
    %4 = vector.load %arg5[%c0_5, %c0_6] : memref<400x1xi32, #tpu.memory_space<vmem>>, vector<400x1xi32>
    %c0_7 = arith.constant 0 : index
    %c0_8 = arith.constant 0 : index
    %5 = vector.load %arg6[%c0_7, %c0_8] : memref<1x400xi32, #tpu.memory_space<vmem>>, vector<1x400xi32>
    %6 = tpu.iota {dimensions = array<i32: 1>} : vector<400x177xi32>
    %7 = tpu.iota {dimensions = array<i32: 0>} : vector<177x400xi32>
    %8 = vector.broadcast %3 : vector<400x1xi32> to vector<400x177xi32>
    %9 = arith.cmpi eq, %6, %8 : vector<400x177xi32>
    %10 = arith.extui %9 : vector<400x177xi1> to vector<400x177xi32>
    %11 = arith.sitofp %10 : vector<400x177xi32> to vector<400x177xf32>
    %12 = vector.broadcast %4 : vector<400x1xi32> to vector<400x177xi32>
    %13 = arith.cmpi eq, %6, %12 : vector<400x177xi32>
    %14 = arith.extui %13 : vector<400x177xi1> to vector<400x177xi32>
    %15 = arith.sitofp %14 : vector<400x177xi32> to vector<400x177xf32>
    %16 = vector.broadcast %5 : vector<1x400xi32> to vector<177x400xi32>
    %17 = arith.cmpi eq, %7, %16 : vector<177x400xi32>
    %18 = arith.extui %17 : vector<177x400xi1> to vector<177x400xi32>
    %19 = arith.sitofp %18 : vector<177x400xi32> to vector<177x400xf32>
    %20 = vector.extract_strided_slice %2 {offsets = [0, 128], sizes = [177, 1], strides = [1, 1]} : vector<177x130xf32> to vector<177x1xf32>
    %cst_9 = arith.constant dense<0.000000e+00> : vector<400x1xf32>
    %21 = tpu.matmul %15, %20, %cst_9 {dimension_numbers = #tpu.dot_dimension_numbers<[1], [0], [0], [1], [0, 0, 1, 1], [], []>} : vector<400x177xf32>, vector<177x1xf32>, vector<400x1xf32> -> vector<400x1xf32>
    %cst_10 = arith.constant dense<0.000000e+00> : vector<400x130xf32>
    %22 = tpu.matmul %11, %2, %cst_10 {dimension_numbers = #tpu.dot_dimension_numbers<[1], [0], [0], [1], [0, 0, 1, 1], [], []>} : vector<400x177xf32>, vector<177x130xf32>, vector<400x130xf32> -> vector<400x130xf32>
    %23 = vector.extract_strided_slice %22 {offsets = [0, 0], sizes = [400, 128], strides = [1, 1]} : vector<400x130xf32> to vector<400x128xf32>
    %24 = vector.extract_strided_slice %22 {offsets = [0, 129], sizes = [400, 1], strides = [1, 1]} : vector<400x130xf32> to vector<400x1xf32>
    %c0_11 = arith.constant 0 : index
    %c0_12 = arith.constant 0 : index
    %25 = vector.load %arg3[%c0_11, %c0_12] : memref<400x1xf32, #tpu.memory_space<vmem>>, vector<400x1xf32>
    %26 = arith.addf %21, %24 : vector<400x1xf32>
    %c0_13 = arith.constant 0 : index
    %c0_14 = arith.constant 0 : index
    %27 = vector.load %arg2[%c0_13, %c0_14] : memref<1x1xf32, #tpu.memory_space<vmem>>, vector<1x1xf32>
    %28 = vector.broadcast %27 : vector<1x1xf32> to vector<400x1xf32>
    %29 = arith.mulf %25, %28 : vector<400x1xf32>
    %30 = arith.addf %26, %29 : vector<400x1xf32>
    %cst_15 = arith.constant 0.000000e+00 : f32
    %31 = vector.broadcast %cst_15 : f32 to vector<400x1xf32>
    %32 = arith.cmpf oge, %30, %31 : vector<400x1xf32>
    %cst_16 = arith.constant 2.000000e-01 : f32
    %33 = vector.broadcast %cst_16 : f32 to vector<400x1xf32>
    %34 = arith.mulf %33, %30 : vector<400x1xf32>
    %35 = arith.select %32, %30, %34 : vector<400x1xi1>, vector<400x1xf32>
    %cst_17 = arith.constant -1.000000e+30 : f32
    %36 = vector.shape_cast %35 : vector<400x1xf32> to vector<400x1xf32>
    %37 = vector.broadcast %36 : vector<400x1xf32> to vector<400x177xf32>
    %38 = vector.broadcast %cst_17 : f32 to vector<400x177xf32>
    %39 = arith.select %13, %37, %38 : vector<400x177xi1>, vector<400x177xf32>
    %cst_18 = arith.constant dense<0xFF800000> : vector<177xf32>
    %40 = vector.multi_reduction <maximumf>, %39, %cst_18 [0] : vector<400x177xf32> to vector<177xf32>
    %41 = vector.shape_cast %40 : vector<177xf32> to vector<1x177xf32>
    %cst_19 = arith.constant dense<0.000000e+00> : vector<400x1xf32>
    %42 = tpu.matmul %15, %41, %cst_19 {dimension_numbers = #tpu.dot_dimension_numbers<[1], [1], [0], [0], [0, 0, 1, 0], [], []>} : vector<400x177xf32>, vector<1x177xf32>, vector<400x1xf32> -> vector<400x1xf32>
    %43 = arith.subf %35, %42 : vector<400x1xf32>
    %44 = math.exp %43 : vector<400x1xf32>
    %cst_20 = arith.constant dense<0.000000e+00> : vector<177x1xf32>
    %45 = tpu.matmul %19, %44, %cst_20 {dimension_numbers = #tpu.dot_dimension_numbers<[1], [0], [0], [1], [0, 0, 1, 1], [], []>} : vector<177x400xf32>, vector<400x1xf32>, vector<177x1xf32> -> vector<177x1xf32>
    %cst_21 = arith.constant dense<0.000000e+00> : vector<400x1xf32>
    %46 = tpu.matmul %15, %45, %cst_21 {dimension_numbers = #tpu.dot_dimension_numbers<[1], [0], [0], [1], [0, 0, 1, 1], [], []>} : vector<400x177xf32>, vector<177x1xf32>, vector<400x1xf32> -> vector<400x1xf32>
    %cst_22 = arith.constant 1.000000e-16 : f32
    %47 = vector.broadcast %cst_22 : f32 to vector<400x1xf32>
    %48 = arith.addf %46, %47 : vector<400x1xf32>
    %49 = arith.divf %44, %48 : vector<400x1xf32>
    %50 = tpu.concatenate %23, %25 in 1 : vector<400x128xf32>, vector<400x1xf32> -> vector<400x129xf32>
    %51 = vector.broadcast %49 : vector<400x1xf32> to vector<400x129xf32>
    %52 = arith.mulf %50, %51 : vector<400x129xf32>
    %cst_23 = arith.constant dense<0.000000e+00> : vector<177x129xf32>
    %53 = tpu.matmul %19, %52, %cst_23 {dimension_numbers = #tpu.dot_dimension_numbers<[1], [0], [0], [1], [0, 0, 1, 1], [], []>} : vector<177x400xf32>, vector<400x129xf32>, vector<177x129xf32> -> vector<177x129xf32>
    %c0_24 = arith.constant 0 : index
    %c0_25 = arith.constant 0 : index
    %54 = vector.load %arg7[%c0_24, %c0_25] : memref<129x128xf32, #tpu.memory_space<vmem>>, vector<129x128xf32>
    %cst_26 = arith.constant dense<0.000000e+00> : vector<177x128xf32>
    %55 = tpu.matmul %53, %54, %cst_26 {dimension_numbers = #tpu.dot_dimension_numbers<[1], [0], [0], [1], [0, 0, 1, 1], [], []>} : vector<177x129xf32>, vector<129x128xf32>, vector<177x128xf32> -> vector<177x128xf32>
    %c0_27 = arith.constant 0 : index
    %c0_28 = arith.constant 0 : index
    %56 = vector.load %arg8[%c0_27, %c0_28] : memref<1x128xf32, #tpu.memory_space<vmem>>, vector<1x128xf32>
    %57 = vector.broadcast %56 : vector<1x128xf32> to vector<177x128xf32>
    %58 = arith.addf %55, %57 : vector<177x128xf32>
    %c0_29 = arith.constant 0 : index
    %c0_30 = arith.constant 0 : index
    %59 = vector.load %arg9[%c0_29, %c0_30] : memref<177x128xf32, #tpu.memory_space<vmem>>, vector<177x128xf32>
    tpu.vector_store %arg9[%c0_29, %c0_30], %58 {strides = array<i32>} : memref<177x128xf32, #tpu.memory_space<vmem>>, vector<177x128xf32>,
    return
  }
}

</mosaic_0001>

<llo_original>
// kernel: tpu_custom_call.1
$region0: #{tpu_custom_call.1}
  #allocation0 [shape = 'u32[]', space=smem, size = 0x4, offset = 0x4, fixed_abs, tag = 'smem constant byte address 0x4 - core index']
  #allocation1 [shape = 'u32[144,128]{1,0:T(1,128)}', space=vmem, size = 0x12000, scoped, tag = 'internal scratch']
  #allocation2 [shape = 'f32[1,1]{1,0:T(1,128)S(1)}', space=vmem, size = 0x200, scoped, tag = 'scoped memory for tpu_custom_call.1']
  %s0 = inlined_call_operand.vmem [shape: f32[177,128], index: 0, kind: input, shape index: {}]
  %s1 = inlined_call_operand.vmem [shape: f32[128,130], index: 1, kind: input, shape index: {}]
  %s2 = inlined_call_operand.<no memory space> [shape: f32[1,1], index: 2, kind: input, shape index: {}]
  %s3 = inlined_call_operand.vmem [shape: f32[400,1], index: 3, kind: input, shape index: {}]
  %s4 = inlined_call_operand.vmem [shape: s32[400,1], index: 4, kind: input, shape index: {}]
  %s5 = inlined_call_operand.vmem [shape: s32[400,1], index: 5, kind: input, shape index: {}]
  %s6 = inlined_call_operand.vmem [shape: s32[1,400], index: 6, kind: input, shape index: {}]
  %s7 = inlined_call_operand.vmem [shape: f32[129,128], index: 7, kind: input, shape index: {}]
  %s8 = inlined_call_operand.vmem [shape: f32[1,128], index: 8, kind: input, shape index: {}]
  %s9 = inlined_call_operand.hbm [shape: f32[177,128], index: 9, kind: output, shape index: {}]
  %s10 = sld [smem:[#allocation0]]
  $region46: #{tpu_custom_call.1} parent=0
    _
  %s12 = ssub.s32 1, %s10
  %s13 = scalar_select 0, %s12, %s10
  %v14 = vstv %s2
  %15 = vst [vmem:[#allocation2] sm:$0x1] %v14
  $region1: #{tpu_custom_call.1} parent=0
    #allocation3 [shape = 'u8[94208]{0}', space=vmem, size = 0x17000, scoped, tag = 'output window, operand 0, single buffered']
    #allocation4 [shape = 's32[1]{0}', space=sflag, size = 0x4, scoped, tag = 'scoped memory for tpu_custom_call.1']
    %16 = vsyncpa [#allocation4], 0
    // Predicated region
    $region2: #{tpu_custom_call.1} parent=1 // pred_check
      _
    $region3: #{tpu_custom_call.1} parent=1 // pred_check_branch
      %18 = sbr.rel (0) target = $region5
    $region4: #{tpu_custom_call.1} parent=1 // pred_region
      _
    $region5: #{tpu_custom_call.1} parent=1 // pred_fallthru
      _
    // Predicated region
    $region6: #{tpu_custom_call.1} parent=1 // pred_check
      _
    $region7: #{tpu_custom_call.1} parent=1 // pred_check_branch
      %20 = sbr.rel (0) target = $region9
    $region8: #{tpu_custom_call.1} parent=1 // pred_region
      _
    $region9: #{tpu_custom_call.1} parent=1 // pred_fallthru
      _
    // Predicated region
    $region10: #{tpu_custom_call.1} parent=1 // pred_check
      _
    $region11: #{tpu_custom_call.1} parent=1 // pred_check_branch
      %22 = sbr.rel (0) target = $region13
    $region12: #{tpu_custom_call.1} parent=1 // pred_region
      _
    $region13: #{tpu_custom_call.1} parent=1 // pred_fallthru
      _
    // Predicated region
    $region14: #{tpu_custom_call.1} parent=1 // pred_check
      _
    $region15: #{tpu_custom_call.1} parent=1 // pred_check_branch
      %24 = sbr.rel (0) target = $region17
    $region16: #{tpu_custom_call.1} parent=1 // pred_region
      _
    $region17: #{tpu_custom_call.1} parent=1 // pred_fallthru
      _
    // Predicated region
    $region18: #{tpu_custom_call.1} parent=1 // pred_check
      _
    $region19: #{tpu_custom_call.1} parent=1 // pred_check_branch
      %26 = sbr.rel (0) target = $region21
    $region20: #{tpu_custom_call.1} parent=1 // pred_region
      _
    $region21: #{tpu_custom_call.1} parent=1 // pred_fallthru
      _
    // Predicated region
    $region22: #{tpu_custom_call.1} parent=1 // pred_check
      _
    $region23: #{tpu_custom_call.1} parent=1 // pred_check_branch
      %28 = sbr.rel (0) target = $region25
    $region24: #{tpu_custom_call.1} parent=1 // pred_region
      _
    $region25: #{tpu_custom_call.1} parent=1 // pred_fallthru
      _
    // Predicated region
    $region26: #{tpu_custom_call.1} parent=1 // pred_check
      _
    $region27: #{tpu_custom_call.1} parent=1 // pred_check_branch
      %30 = sbr.rel (0) target = $region29
    $region28: #{tpu_custom_call.1} parent=1 // pred_region
      _
    $region29: #{tpu_custom_call.1} parent=1 // pred_fallthru
      _
    // Predicated region
    $region30: #{tpu_custom_call.1} parent=1 // pred_check
      _
    $region31: #{tpu_custom_call.1} parent=1 // pred_check_branch
      %32 = sbr.rel (0) target = $region33
    $region32: #{tpu_custom_call.1} parent=1 // pred_region
      _
    $region33: #{tpu_custom_call.1} parent=1 // pred_fallthru
      _
    // Predicated region
    $region34: #{tpu_custom_call.1} parent=1 // pred_check
      _
    $region35: #{tpu_custom_call.1} parent=1 // pred_check_branch
      %34 = sbr.rel (0) target = $region37
    $region36: #{tpu_custom_call.1} parent=1 // pred_region
      _
    $region37: #{tpu_custom_call.1} parent=1 // pred_fallthru
      _
    %v35 = vld [vmem:[%s0] sm:$0xff]
    %v36 = vld [vmem:[%s0 + $0x8] sm:$0xff]
    %v37 = vld [vmem:[%s0 + $0x10] sm:$0xff]
    %v38 = vld [vmem:[%s0 + $0x18] sm:$0xff]
    %v39 = vld [vmem:[%s0 + $0x20] sm:$0xff]
    %v40 = vld [vmem:[%s0 + $0x28] sm:$0xff]
    %v41 = vld [vmem:[%s0 + $0x30] sm:$0xff]
    %v42 = vld [vmem:[%s0 + $0x38] sm:$0xff]
    %v43 = vld [vmem:[%s0 + $0x40] sm:$0xff]
    %v44 = vld [vmem:[%s0 + $0x48] sm:$0xff]
    %v45 = vld [vmem:[%s0 + $0x50] sm:$0xff]
    %v46 = vld [vmem:[%s0 + $0x58] sm:$0xff]
    %v47 = vld [vmem:[%s0 + $0x60] sm:$0xff]
    %v48 = vld [vmem:[%s0 + $0x68] sm:$0xff]
    %v49 = vld [vmem:[%s0 + $0x70] sm:$0xff]
    %v50 = vld [vmem:[%s0 + $0x78] sm:$0xff]
    %v51 = vld [vmem:[%s0 + $0x80] sm:$0xff]
    %v52 = vld [vmem:[%s0 + $0x88] sm:$0xff]
    %v53 = vld [vmem:[%s0 + $0x90] sm:$0xff]
    %v54 = vld [vmem:[%s0 + $0x98] sm:$0xff]
    %v55 = vld [vmem:[%s0 + $0xa0] sm:$0xff]
    %v56 = vld [vmem:[%s0 + $0xa8] sm:$0xff]
    %v57 = vld [vmem:[%s0 + $0xb0] sm:$0x1]
    %v58 = vld [vmem:[%s1] sm:$0xff]
    %v59 = vld [vmem:[%s1 + $0x8] sm:$0xff]
    %v60 = vld [vmem:[%s1 + $0x10] sm:$0xff]
    %v61 = vld [vmem:[%s1 + $0x18] sm:$0xff]
    %v62 = vld [vmem:[%s1 + $0x20] sm:$0xff]
    %v63 = vld [vmem:[%s1 + $0x28] sm:$0xff]
    %v64 = vld [vmem:[%s1 + $0x30] sm:$0xff]
    %v65 = vld [vmem:[%s1 + $0x38] sm:$0xff]
    %v66 = vld [vmem:[%s1 + $0x40] sm:$0xff]
    %v67 = vld [vmem:[%s1 + $0x48] sm:$0xff]
    %v68 = vld [vmem:[%s1 + $0x50] sm:$0xff]
    %v69 = vld [vmem:[%s1 + $0x58] sm:$0xff]
    %v70 = vld [vmem:[%s1 + $0x60] sm:$0xff]
    %v71 = vld [vmem:[%s1 + $0x68] sm:$0xff]
    %v72 = vld [vmem:[%s1 + $0x70] sm:$0xff]
    %v73 = vld [vmem:[%s1 + $0x78] sm:$0xff]
    %v74 = vld [vmem:[%s1 + $0x80] sm:$0xff]
    %v75 = vld [vmem:[%s1 + $0x88] sm:$0xff]
    %v76 = vld [vmem:[%s1 + $0x90] sm:$0xff]
    %v77 = vld [vmem:[%s1 + $0x98] sm:$0xff]
    %v78 = vld [vmem:[%s1 + $0xa0] sm:$0xff]
    %v79 = vld [vmem:[%s1 + $0xa8] sm:$0xff]
    %v80 = vld [vmem:[%s1 + $0xb0] sm:$0xff]
    %v81 = vld [vmem:[%s1 + $0xb8] sm:$0xff]
    %v82 = vld [vmem:[%s1 + $0xc0] sm:$0xff]
    %v83 = vld [vmem:[%s1 + $0xc8] sm:$0xff]
    %v84 = vld [vmem:[%s1 + $0xd0] sm:$0xff]
    %v85 = vld [vmem:[%s1 + $0xd8] sm:$0xff]
    %v86 = vld [vmem:[%s1 + $0xe0] sm:$0xff]
    %v87 = vld [vmem:[%s1 + $0xe8] sm:$0xff]
    %v88 = vld [vmem:[%s1 + $0xf0] sm:$0xff]
    %v89 = vld [vmem:[%s1 + $0xf8] sm:$0xff]
    %90 = vmatprep.subr.mxu0 %v59
    %91 = vmatpush1.msra.mxu0 %v58
    %92 = vmatprep.subr.mxu0 %v61
    %93 = vmatpush1.msra.mxu0 %v60
    %94 = vmatprep.subr.mxu0 %v63
    %95 = vmatpush1.msra.mxu0 %v62
    %96 = vmatprep.subr.mxu0 %v65
    %97 = vmatpush1.msra.mxu0 %v64
    %98 = vmatprep.subr.mxu0 %v67
    %99 = vmatpush1.msra.mxu0 %v66
    %100 = vmatprep.subr.mxu0 %v69
    %101 = vmatpush1.msra.mxu0 %v68
    %102 = vmatprep.subr.mxu0 %v71
    %103 = vmatpush1.msra.mxu0 %v70
    %104 = vmatprep.subr.mxu0 %v73
    %105 = vmatpush1.msra.mxu0 %v72
    %106 = vmatprep.subr.mxu0 %v75
    %107 = vmatpush1.msra.mxu0 %v74
    %108 = vmatprep.subr.mxu0 %v77
    %109 = vmatpush1.msra.mxu0 %v76
    %110 = vmatprep.subr.mxu0 %v79
    %111 = vmatpush1.msra.mxu0 %v78
    %112 = vmatprep.subr.mxu0 %v81
    %113 = vmatpush1.msra.mxu0 %v80
    %114 = vmatprep.subr.mxu0 %v83
    %115 = vmatpush1.msra.mxu0 %v82
    %116 = vmatprep.subr.mxu0 %v85
    %117 = vmatpush1.msra.mxu0 %v84
    %118 = vmatprep.subr.mxu0 %v87
    %119 = vmatpush1.msra.mxu0 %v86
    %120 = vmatprep.subr.mxu0 %v89
    %121 = vmatpush1.msra.mxu0 %v88
    %122 = vmatprep.subr.mxu0 0.0
    %123 = vmatpush1.msra.mxu0 0.0
    %124 = vmatprep.subr.mxu0 0.0
    %125 = vmatpush1.msra.mxu0 0.0
    %126 = vmatprep.subr.mxu0 0.0
    %127 = vmatpush1.msra.mxu0 0.0
    %128 = vmatprep.subr.mxu0 0.0
    %129 = vmatpush1.msra.mxu0 0.0
    %130 = vmatprep.subr.mxu0 0.0
    %131 = vmatpush1.msra.mxu0 0.0
    %132 = vmatprep.subr.mxu0 0.0
    %133 = vmatpush1.msra.mxu0 0.0
    %134 = vmatprep.subr.mxu0 0.0
    %135 = vmatpush1.msra.mxu0 0.0
    %136 = vmatprep.subr.mxu0 0.0
    %137 = vmatpush1.msra.mxu0 0.0
    %138 = vmatprep.subr.mxu0 0.0
    %139 = vmatpush1.msra.mxu0 0.0
    %140 = vmatprep.subr.mxu0 0.0
    %141 = vmatpush1.msra.mxu0 0.0
    %142 = vmatprep.subr.mxu0 0.0
    %143 = vmatpush1.msra.mxu0 0.0
    %144 = vmatprep.subr.mxu0 0.0
    %145 = vmatpush1.msra.mxu0 0.0
    %146 = vmatprep.subr.mxu0 0.0
    %147 = vmatpush1.msra.mxu0 0.0
    %148 = vmatprep.subr.mxu0 0.0
    %149 = vmatpush1.msra.mxu0 0.0
    %150 = vmatprep.subr.mxu0 0.0
    %151 = vmatpush1.msra.mxu0 0.0
    %152 = vmatprep.subr.mxu0 0.0
    %153 = vmatpush1.msra.mxu0 0.0
    %154 = vmatprep.mubr.f32.mxu0 0.0
    %155 = vmatmul.mubr.f32.gmra.mrb[0].mxu0 %v35
    %v156 = vpop.f32.mrb[0].mxu0
    %v157 = vadd.f32 0.0, %v156
    %v158 = vpop.f32.mrb[0].mxu0
    %v159 = vadd.f32 0.0, %v158
    %160 = vmatprep.mubr.f32.mxu0 0.0
    %161 = vmatmul.mubr.f32.gmra.mrb[0].mxu0 %v36
    %v162 = vpop.f32.mrb[0].mxu0
    %v163 = vadd.f32 0.0, %v162
    %v164 = vpop.f32.mrb[0].mxu0
    %v165 = vadd.f32 0.0, %v164
    %166 = vmatprep.mubr.f32.mxu0 0.0
    %167 = vmatmul.mubr.f32.gmra.mrb[0].mxu0 %v37
    %v168 = vpop.f32.mrb[0].mxu0
    %v169 = vadd.f32 0.0, %v168
    %v170 = vpop.f32.mrb[0].mxu0
    %v171 = vadd.f32 0.0, %v170
    %172 = vmatprep.mubr.f32.mxu0 0.0
    %173 = vmatmul.mubr.f32.gmra.mrb[0].mxu0 %v38
    %v174 = vpop.f32.mrb[0].mxu0
    %v175 = vadd.f32 0.0, %v174
    %v176 = vpop.f32.mrb[0].mxu0
    %v177 = vadd.f32 0.0, %v176
    %178 = vmatprep.mubr.f32.mxu0 0.0
    %179 = vmatmul.mubr.f32.gmra.mrb[0].mxu0 %v39
    %v180 = vpop.f32.mrb[0].mxu0
    %v181 = vadd.f32 0.0, %v180
    %v182 = vpop.f32.mrb[0].mxu0
    %v183 = vadd.f32 0.0, %v182
    %184 = vmatprep.mubr.f32.mxu0 0.0
    %185 = vmatmul.mubr.f32.gmra.mrb[0].mxu0 %v40
    %v186 = vpop.f32.mrb[0].mxu0
    %v187 = vadd.f32 0.0, %v186
    %v188 = vpop.f32.mrb[0].mxu0
    %v189 = vadd.f32 0.0, %v188
    %190 = vmatprep.mubr.f32.mxu0 0.0
    %191 = vmatmul.mubr.f32.gmra.mrb[0].mxu0 %v41
    %v192 = vpop.f32.mrb[0].mxu0
    %v193 = vadd.f32 0.0, %v192
    %v194 = vpop.f32.mrb[0].mxu0
    %v195 = vadd.f32 0.0, %v194
    %196 = vmatprep.mubr.f32.mxu0 0.0
    %197 = vmatmul.mubr.f32.gmra.mrb[0].mxu0 %v42
    %v198 = vpop.f32.mrb[0].mxu0
    %v199 = vadd.f32 0.0, %v198
    %v200 = vpop.f32.mrb[0].mxu0
    %v201 = vadd.f32 0.0, %v200
    %202 = vmatprep.mubr.f32.mxu0 0.0
    %203 = vmatmul.mubr.f32.gmra.mrb[0].mxu0 %v43
    %v204 = vpop.f32.mrb[0].mxu0
    %v205 = vadd.f32 0.0, %v204
    %v206 = vpop.f32.mrb[0].mxu0
    %v207 = vadd.f32 0.0, %v206
    %208 = vmatprep.mubr.f32.mxu0 0.0
    %209 = vmatmul.mubr.f32.gmra.mrb[0].mxu0 %v44
    %v210 = vpop.f32.mrb[0].mxu0
    %v211 = vadd.f32 0.0, %v210
    %v212 = vpop.f32.mrb[0].mxu0
    %v213 = vadd.f32 0.0, %v212
    %214 = vmatprep.mubr.f32.mxu0 0.0
    %215 = vmatmul.mubr.f32.gmra.mrb[0].mxu0 %v45
    %v216 = vpop.f32.mrb[0].mxu0
    %v217 = vadd.f32 0.0, %v216
    %v218 = vpop.f32.mrb[0].mxu0
    %v219 = vadd.f32 0.0, %v218
    %220 = vmatprep.mubr.f32.mxu0 0.0
    %221 = vmatmul.mubr.f32.gmra.mrb[0].mxu0 %v46
    %v222 = vpop.f32.mrb[0].mxu0
    %v223 = vadd.f32 0.0, %v222
    %v224 = vpop.f32.mrb[0].mxu0
    %v225 = vadd.f32 0.0, %v224
    %226 = vmatprep.mubr.f32.mxu0 0.0
    %227 = vmatmul.mubr.f32.gmra.mrb[0].mxu0 %v47
    %v228 = vpop.f32.mrb[0].mxu0
    %v229 = vadd.f32 0.0, %v228
    %v230 = vpop.f32.mrb[0].mxu0
    %v231 = vadd.f32 0.0, %v230
    %232 = vmatprep.mubr.f32.mxu0 0.0
    %233 = vmatmul.mubr.f32.gmra.mrb[0].mxu0 %v48
    %v234 = vpop.f32.mrb[0].mxu0
    %v235 = vadd.f32 0.0, %v234
    %v236 = vpop.f32.mrb[0].mxu0
    %v237 = vadd.f32 0.0, %v236
    %238 = vmatprep.mubr.f32.mxu0 0.0
    %239 = vmatmul.mubr.f32.gmra.mrb[0].mxu0 %v49
    %v240 = vpop.f32.mrb[0].mxu0
    %v241 = vadd.f32 0.0, %v240
    %v242 = vpop.f32.mrb[0].mxu0
    %v243 = vadd.f32 0.0, %v242
    %244 = vmatprep.mubr.f32.mxu0 0.0
    %245 = vmatmul.mubr.f32.gmra.mrb[0].mxu0 %v50
    %v246 = vpop.f32.mrb[0].mxu0
    %v247 = vadd.f32 0.0, %v246
    %v248 = vpop.f32.mrb[0].mxu0
    %v249 = vadd.f32 0.0, %v248
    %250 = vmatprep.mubr.f32.mxu0 0.0
    %251 = vmatmul.mubr.f32.gmra.mrb[0].mxu0 %v51
    %v252 = vpop.f32.mrb[0].mxu0
    %v253 = vadd.f32 0.0, %v252
    %v254 = vpop.f32.mrb[0].mxu0
    %v255 = vadd.f32 0.0, %v254
    %256 = vmatprep.mubr.f32.mxu0 0.0
    %257 = vmatmul.mubr.f32.gmra.mrb[0].mxu0 %v52
    %v258 = vpop.f32.mrb[0].mxu0
    %v259 = vadd.f32 0.0, %v258
    %v260 = vpop.f32.mrb[0].mxu0
    %v261 = vadd.f32 0.0, %v260
    %262 = vmatprep.mubr.f32.mxu0 0.0
    %263 = vmatmul.mubr.f32.gmra.mrb[0].mxu0 %v53
    %v264 = vpop.f32.mrb[0].mxu0
    %v265 = vadd.f32 0.0, %v264
    %v266 = vpop.f32.mrb[0].mxu0
    %v267 = vadd.f32 0.0, %v266
    %268 = vmatprep.mubr.f32.mxu0 0.0
    %269 = vmatmul.mubr.f32.gmra.mrb[0].mxu0 %v54
    %v270 = vpop.f32.mrb[0].mxu0
    %v271 = vadd.f32 0.0, %v270
    %v272 = vpop.f32.mrb[0].mxu0
    %v273 = vadd.f32 0.0, %v272
    %274 = vmatprep.mubr.f32.mxu0 0.0
    %275 = vmatmul.mubr.f32.gmra.mrb[0].mxu0 %v55
    %v276 = vpop.f32.mrb[0].mxu0
    %v277 = vadd.f32 0.0, %v276
    %v278 = vpop.f32.mrb[0].mxu0
    %v279 = vadd.f32 0.0, %v278
    %280 = vmatprep.mubr.f32.mxu0 0.0
    %281 = vmatmul.mubr.f32.gmra.mrb[0].mxu0 %v56
    %v282 = vpop.f32.mrb[0].mxu0
    %v283 = vadd.f32 0.0, %v282
    %v284 = vpop.f32.mrb[0].mxu0
    %v285 = vadd.f32 0.0, %v284
    %286 = vmatprep.mubr.f32.mxu0 0.0
    %287 = vmatmul.mubr.f32.gmra.mrb[0].mxu0 %v57
    %v288 = vpop.f32.mrb[0].mxu0
    %v289 = vadd.f32 0.0, %v288
    %v290 = vpop.f32.mrb[0].mxu0
    %v291 = vadd.f32 0.0, %v290
    %292 = vdwg.mxu0
    %v293 = vld [vmem:[%s4] sm:$0xff]
    %v294 = vld [vmem:[%s4 + $0x8] sm:$0xff]
    %v295 = vld [vmem:[%s4 + $0x10] sm:$0xff]
    %v296 = vld [vmem:[%s4 + $0x18] sm:$0xff]
    %v297 = vld [vmem:[%s4 + $0x20] sm:$0xff]
    %v298 = vld [vmem:[%s4 + $0x28] sm:$0xff]
    %v299 = vld [vmem:[%s4 + $0x30] sm:$0xff]
    %v300 = vld [vmem:[%s4 + $0x38] sm:$0xff]
    %v301 = vld [vmem:[%s4 + $0x40] sm:$0xff]
    %v302 = vld [vmem:[%s4 + $0x48] sm:$0xff]
    %v303 = vld [vmem:[%s4 + $0x50] sm:$0xff]
    %v304 = vld [vmem:[%s4 + $0x58] sm:$0xff]
    %v305 = vld [vmem:[%s4 + $0x60] sm:$0xff]
    %v306 = vld [vmem:[%s4 + $0x68] sm:$0xff]
    %v307 = vld [vmem:[%s4 + $0x70] sm:$0xff]
    %v308 = vld [vmem:[%s4 + $0x78] sm:$0xff]
    %v309 = vld [vmem:[%s4 + $0x80] sm:$0xff]
    %v310 = vld [vmem:[%s4 + $0x88] sm:$0xff]
    %v311 = vld [vmem:[%s4 + $0x90] sm:$0xff]
    %v312 = vld [vmem:[%s4 + $0x98] sm:$0xff]
    %v313 = vld [vmem:[%s4 + $0xa0] sm:$0xff]
    %v314 = vld [vmem:[%s4 + $0xa8] sm:$0xff]
    %v315 = vld [vmem:[%s4 + $0xb0] sm:$0xff]
    %v316 = vld [vmem:[%s4 + $0xb8] sm:$0xff]
    %v317 = vld [vmem:[%s4 + $0xc0] sm:$0xff]
    %v318 = vld [vmem:[%s4 + $0xc8] sm:$0xff]
    %v319 = vld [vmem:[%s4 + $0xd0] sm:$0xff]
    %v320 = vld [vmem:[%s4 + $0xd8] sm:$0xff]
    %v321 = vld [vmem:[%s4 + $0xe0] sm:$0xff]
    %v322 = vld [vmem:[%s4 + $0xe8] sm:$0xff]
    %v323 = vld [vmem:[%s4 + $0xf0] sm:$0xff]
    %v324 = vld [vmem:[%s4 + $0xf8] sm:$0xff]
    %v325 = vld [vmem:[%s4 + $0x100] sm:$0xff]
    %v326 = vld [vmem:[%s4 + $0x108] sm:$0xff]
    %v327 = vld [vmem:[%s4 + $0x110] sm:$0xff]
    %v328 = vld [vmem:[%s4 + $0x118] sm:$0xff]
    %v329 = vld [vmem:[%s4 + $0x120] sm:$0xff]
    %v330 = vld [vmem:[%s4 + $0x128] sm:$0xff]
    %v331 = vld [vmem:[%s4 + $0x130] sm:$0xff]
    %v332 = vld [vmem:[%s4 + $0x138] sm:$0xff]
    %v333 = vld [vmem:[%s4 + $0x140] sm:$0xff]
    %v334 = vld [vmem:[%s4 + $0x148] sm:$0xff]
    %v335 = vld [vmem:[%s4 + $0x150] sm:$0xff]
    %v336 = vld [vmem:[%s4 + $0x158] sm:$0xff]
    %v337 = vld [vmem:[%s4 + $0x160] sm:$0xff]
    %v338 = vld [vmem:[%s4 + $0x168] sm:$0xff]
    %v339 = vld [vmem:[%s4 + $0x170] sm:$0xff]
    %v340 = vld [vmem:[%s4 + $0x178] sm:$0xff]
    %v341 = vld [vmem:[%s4 + $0x180] sm:$0xff]
    %v342 = vld [vmem:[%s4 + $0x188] sm:$0xff]
    %v343 = vld [vmem:[%s5] sm:$0xff]
    %v344 = vld [vmem:[%s5 + $0x8] sm:$0xff]
    %v345 = vld [vmem:[%s5 + $0x10] sm:$0xff]
    %v346 = vld [vmem:[%s5 + $0x18] sm:$0xff]
    %v347 = vld [vmem:[%s5 + $0x20] sm:$0xff]
    %v348 = vld [vmem:[%s5 + $0x28] sm:$0xff]
    %v349 = vld [vmem:[%s5 + $0x30] sm:$0xff]
    %v350 = vld [vmem:[%s5 + $0x38] sm:$0xff]
    %v351 = vld [vmem:[%s5 + $0x40] sm:$0xff]
    %v352 = vld [vmem:[%s5 + $0x48] sm:$0xff]
    %v353 = vld [vmem:[%s5 + $0x50] sm:$0xff]
    %v354 = vld [vmem:[%s5 + $0x58] sm:$0xff]
    %v355 = vld [vmem:[%s5 + $0x60] sm:$0xff]
    %v356 = vld [vmem:[%s5 + $0x68] sm:$0xff]
    %v357 = vld [vmem:[%s5 + $0x70] sm:$0xff]
    %v358 = vld [vmem:[%s5 + $0x78] sm:$0xff]
    %v359 = vld [vmem:[%s5 + $0x80] sm:$0xff]
    %v360 = vld [vmem:[%s5 + $0x88] sm:$0xff]
    %v361 = vld [vmem:[%s5 + $0x90] sm:$0xff]
    %v362 = vld [vmem:[%s5 + $0x98] sm:$0xff]
    %v363 = vld [vmem:[%s5 + $0xa0] sm:$0xff]
    %v364 = vld [vmem:[%s5 + $0xa8] sm:$0xff]
    %v365 = vld [vmem:[%s5 + $0xb0] sm:$0xff]
    %v366 = vld [vmem:[%s5 + $0xb8] sm:$0xff]
    %v367 = vld [vmem:[%s5 + $0xc0] sm:$0xff]
    %v368 = vld [vmem:[%s5 + $0xc8] sm:$0xff]
    %v369 = vld [vmem:[%s5 + $0xd0] sm:$0xff]
    %v370 = vld [vmem:[%s5 + $0xd8] sm:$0xff]
    %v371 = vld [vmem:[%s5 + $0xe0] sm:$0xff]
    %v372 = vld [vmem:[%s5 + $0xe8] sm:$0xff]
    %v373 = vld [vmem:[%s5 + $0xf0] sm:$0xff]
    %v374 = vld [vmem:[%s5 + $0xf8] sm:$0xff]
    %v375 = vld [vmem:[%s5 + $0x100] sm:$0xff]
    %v376 = vld [vmem:[%s5 + $0x108] sm:$0xff]
    %v377 = vld [vmem:[%s5 + $0x110] sm:$0xff]
    %v378 = vld [vmem:[%s5 + $0x118] sm:$0xff]
    %v379 = vld [vmem:[%s5 + $0x120] sm:$0xff]
    %v380 = vld [vmem:[%s5 + $0x128] sm:$0xff]
    %v381 = vld [vmem:[%s5 + $0x130] sm:$0xff]
    %v382 = vld [vmem:[%s5 + $0x138] sm:$0xff]
    %v383 = vld [vmem:[%s5 + $0x140] sm:$0xff]
    %v384 = vld [vmem:[%s5 + $0x148] sm:$0xff]
    %v385 = vld [vmem:[%s5 + $0x150] sm:$0xff]
    %v386 = vld [vmem:[%s5 + $0x158] sm:$0xff]
    %v387 = vld [vmem:[%s5 + $0x160] sm:$0xff]
    %v388 = vld [vmem:[%s5 + $0x168] sm:$0xff]
    %v389 = vld [vmem:[%s5 + $0x170] sm:$0xff]
    %v390 = vld [vmem:[%s5 + $0x178] sm:$0xff]
    %v391 = vld [vmem:[%s5 + $0x180] sm:$0xff]
    %v392 = vld [vmem:[%s5 + $0x188] sm:$0xff]
    %v393 = vld [vmem:[%s6] sm:$0xf]
    %v394 = vlaneseq
    %v395 = vand.u32 %v394, 127
    %v396 = vadd.s32 %v395, 128
    %v397 = vlaneseq
    %v398 = vshrl.u32 %v397, 7
    %v399 = vadd.s32 %v398, 8
    %v400 = vadd.s32 %v398, 16
    %v401 = vadd.s32 %v398, 24
    %v402 = vadd.s32 %v398, 32
    %v403 = vadd.s32 %v398, 40
    %v404 = vadd.s32 %v398, 48
    %v405 = vadd.s32 %v398, 56
    %v406 = vadd.s32 %v398, 64
    %v407 = vadd.s32 %v398, 72
    %v408 = vadd.s32 %v398, 80
    %v409 = vadd.s32 %v398, 88
    %v410 = vadd.s32 %v398, 96
    %v411 = vadd.s32 %v398, 104
    %v412 = vadd.s32 %v398, 112
    %v413 = vadd.s32 %v398, 120
    %v414 = vadd.s32 %v398, 128
    %v415 = vadd.s32 %v398, 136
    %v416 = vadd.s32 %v398, 144
    %v417 = vadd.s32 %v398, 152
    %v418 = vadd.s32 %v398, 160
    %v419 = vadd.s32 %v398, 168
    %v420 = vadd.s32 %v398, 176
    %421 = vset.pattern.permute.xlu0 0
    %422 = vperm.xlu0 %421, %v293
    %v423 = vpop.permute.xlu0 %422
    %424 = vset.pattern.permute.xlu0 0
    %425 = vperm.xlu0 %424, %v294
    %v426 = vpop.permute.xlu0 %425
    %427 = vset.pattern.permute.xlu0 0
    %428 = vperm.xlu0 %427, %v295
    %v429 = vpop.permute.xlu0 %428
    %430 = vset.pattern.permute.xlu0 0
    %431 = vperm.xlu0 %430, %v296
    %v432 = vpop.permute.xlu0 %431
    %433 = vset.pattern.permute.xlu0 0
    %434 = vperm.xlu0 %433, %v297
    %v435 = vpop.permute.xlu0 %434
    %436 = vset.pattern.permute.xlu0 0
    %437 = vperm.xlu0 %436, %v298
    %v438 = vpop.permute.xlu0 %437
    %439 = vset.pattern.permute.xlu0 0
    %440 = vperm.xlu0 %439, %v299
    %v441 = vpop.permute.xlu0 %440
    %442 = vset.pattern.permute.xlu0 0
    %443 = vperm.xlu0 %442, %v300
    %v444 = vpop.permute.xlu0 %443
    %445 = vset.pattern.permute.xlu0 0
    %446 = vperm.xlu0 %445, %v301
    %v447 = vpop.permute.xlu0 %446
    %448 = vset.pattern.permute.xlu0 0
    %449 = vperm.xlu0 %448, %v302
    %v450 = vpop.permute.xlu0 %449
    %451 = vset.pattern.permute.xlu0 0
    %452 = vperm.xlu0 %451, %v303
    %v453 = vpop.permute.xlu0 %452
    %454 = vset.pattern.permute.xlu0 0
    %455 = vperm.xlu0 %454, %v304
    %v456 = vpop.permute.xlu0 %455
    %457 = vset.pattern.permute.xlu0 0
    %458 = vperm.xlu0 %457, %v305
    %v459 = vpop.permute.xlu0 %458
    %460 = vset.pattern.permute.xlu0 0
    %461 = vperm.xlu0 %460, %v306
    %v462 = vpop.permute.xlu0 %461
    %463 = vset.pattern.permute.xlu0 0
    %464 = vperm.xlu0 %463, %v307
    %v465 = vpop.permute.xlu0 %464
    %466 = vset.pattern.permute.xlu0 0
    %467 = vperm.xlu0 %466, %v308
    %v468 = vpop.permute.xlu0 %467
    %469 = vset.pattern.permute.xlu0 0
    %470 = vperm.xlu0 %469, %v309
    %v471 = vpop.permute.xlu0 %470
    %472 = vset.pattern.permute.xlu0 0
    %473 = vperm.xlu0 %472, %v310
    %v474 = vpop.permute.xlu0 %473
    %475 = vset.pattern.permute.xlu0 0
    %476 = vperm.xlu0 %475, %v311
    %v477 = vpop.permute.xlu0 %476
    %478 = vset.pattern.permute.xlu0 0
    %479 = vperm.xlu0 %478, %v312
    %v480 = vpop.permute.xlu0 %479
    %481 = vset.pattern.permute.xlu0 0
    %482 = vperm.xlu0 %481, %v313
    %v483 = vpop.permute.xlu0 %482
    %484 = vset.pattern.permute.xlu0 0
    %485 = vperm.xlu0 %484, %v314
    %v486 = vpop.permute.xlu0 %485
    %487 = vset.pattern.permute.xlu0 0
    %488 = vperm.xlu0 %487, %v315
    %v489 = vpop.permute.xlu0 %488
    %490 = vset.pattern.permute.xlu0 0
    %491 = vperm.xlu0 %490, %v316
    %v492 = vpop.permute.xlu0 %491
    %493 = vset.pattern.permute.xlu0 0
    %494 = vperm.xlu0 %493, %v317
    %v495 = vpop.permute.xlu0 %494
    %496 = vset.pattern.permute.xlu0 0
    %497 = vperm.xlu0 %496, %v318
    %v498 = vpop.permute.xlu0 %497
    %499 = vset.pattern.permute.xlu0 0
    %500 = vperm.xlu0 %499, %v319
    %v501 = vpop.permute.xlu0 %500
    %502 = vset.pattern.permute.xlu0 0
    %503 = vperm.xlu0 %502, %v320
    %v504 = vpop.permute.xlu0 %503
    %505 = vset.pattern.permute.xlu0 0
    %506 = vperm.xlu0 %505, %v321
    %v507 = vpop.permute.xlu0 %506
    %508 = vset.pattern.permute.xlu0 0
    %509 = vperm.xlu0 %508, %v322
    %v510 = vpop.permute.xlu0 %509
    %511 = vset.pattern.permute.xlu0 0
    %512 = vperm.xlu0 %511, %v323
    %v513 = vpop.permute.xlu0 %512
    %514 = vset.pattern.permute.xlu0 0
    %515 = vperm.xlu0 %514, %v324
    %v516 = vpop.permute.xlu0 %515
    %517 = vset.pattern.permute.xlu0 0
    %518 = vperm.xlu0 %517, %v325
    %v519 = vpop.permute.xlu0 %518
    %520 = vset.pattern.permute.xlu0 0
    %521 = vperm.xlu0 %520, %v326
    %v522 = vpop.permute.xlu0 %521
    %523 = vset.pattern.permute.xlu0 0
    %524 = vperm.xlu0 %523, %v327
    %v525 = vpop.permute.xlu0 %524
    %526 = vset.pattern.permute.xlu0 0
    %527 = vperm.xlu0 %526, %v328
    %v528 = vpop.permute.xlu0 %527
    %529 = vset.pattern.permute.xlu0 0
    %530 = vperm.xlu0 %529, %v329
    %v531 = vpop.permute.xlu0 %530
    %532 = vset.pattern.permute.xlu0 0
    %533 = vperm.xlu0 %532, %v330
    %v534 = vpop.permute.xlu0 %533
    %535 = vset.pattern.permute.xlu0 0
    %536 = vperm.xlu0 %535, %v331
    %v537 = vpop.permute.xlu0 %536
    %538 = vset.pattern.permute.xlu0 0
    %539 = vperm.xlu0 %538, %v332
    %v540 = vpop.permute.xlu0 %539
    %541 = vset.pattern.permute.xlu0 0
    %542 = vperm.xlu0 %541, %v333
    %v543 = vpop.permute.xlu0 %542
    %544 = vset.pattern.permute.xlu0 0
    %545 = vperm.xlu0 %544, %v334
    %v546 = vpop.permute.xlu0 %545
    %547 = vset.pattern.permute.xlu0 0
    %548 = vperm.xlu0 %547, %v335
    %v549 = vpop.permute.xlu0 %548
    %550 = vset.pattern.permute.xlu0 0
    %551 = vperm.xlu0 %550, %v336
    %v552 = vpop.permute.xlu0 %551
    %553 = vset.pattern.permute.xlu0 0
    %554 = vperm.xlu0 %553, %v337
    %v555 = vpop.permute.xlu0 %554
    %556 = vset.pattern.permute.xlu0 0
    %557 = vperm.xlu0 %556, %v338
    %v558 = vpop.permute.xlu0 %557
    %559 = vset.pattern.permute.xlu0 0
    %560 = vperm.xlu0 %559, %v339
    %v561 = vpop.permute.xlu0 %560
    %562 = vset.pattern.permute.xlu0 0
    %563 = vperm.xlu0 %562, %v340
    %v564 = vpop.permute.xlu0 %563
    %565 = vset.pattern.permute.xlu0 0
    %566 = vperm.xlu0 %565, %v341
    %v567 = vpop.permute.xlu0 %566
    %568 = vset.pattern.permute.xlu0 0
    %569 = vperm.xlu0 %568, %v342
    %v570 = vpop.permute.xlu0 %569
    %vm571 = vcmp.eq.s32.totalorder %v395, %v423
    %vm572 = vcmp.eq.s32.totalorder %v396, %v423
    %vm573 = vcmp.eq.s32.totalorder %v395, %v426
    %vm574 = vcmp.eq.s32.totalorder %v396, %v426
    %vm575 = vcmp.eq.s32.totalorder %v395, %v429
    %vm576 = vcmp.eq.s32.totalorder %v396, %v429
    %vm577 = vcmp.eq.s32.totalorder %v395, %v432
    %vm578 = vcmp.eq.s32.totalorder %v396, %v432
    %vm579 = vcmp.eq.s32.totalorder %v395, %v435
    %vm580 = vcmp.eq.s32.totalorder %v396, %v435
    %vm581 = vcmp.eq.s32.totalorder %v395, %v438
    %vm582 = vcmp.eq.s32.totalorder %v396, %v438
    %vm583 = vcmp.eq.s32.totalorder %v395, %v441
    %vm584 = vcmp.eq.s32.totalorder %v396, %v441
    %vm585 = vcmp.eq.s32.totalorder %v395, %v444
    %vm586 = vcmp.eq.s32.totalorder %v396, %v444
    %vm587 = vcmp.eq.s32.totalorder %v395, %v447
    %vm588 = vcmp.eq.s32.totalorder %v396, %v447
    %vm589 = vcmp.eq.s32.totalorder %v395, %v450
    %vm590 = vcmp.eq.s32.totalorder %v396, %v450
    %vm591 = vcmp.eq.s32.totalorder %v395, %v453
    %vm592 = vcmp.eq.s32.totalorder %v396, %v453
    %vm593 = vcmp.eq.s32.totalorder %v395, %v456
    %vm594 = vcmp.eq.s32.totalorder %v396, %v456
    %vm595 = vcmp.eq.s32.totalorder %v395, %v459
    %vm596 = vcmp.eq.s32.totalorder %v396, %v459
    %vm597 = vcmp.eq.s32.totalorder %v395, %v462
    %vm598 = vcmp.eq.s32.totalorder %v396, %v462
    %vm599 = vcmp.eq.s32.totalorder %v395, %v465
    %vm600 = vcmp.eq.s32.totalorder %v396, %v465
    %vm601 = vcmp.eq.s32.totalorder %v395, %v468
    %vm602 = vcmp.eq.s32.totalorder %v396, %v468
    %vm603 = vcmp.eq.s32.totalorder %v395, %v471
    %vm604 = vcmp.eq.s32.totalorder %v396, %v471
    %vm605 = vcmp.eq.s32.totalorder %v395, %v474
    %vm606 = vcmp.eq.s32.totalorder %v396, %v474
    %vm607 = vcmp.eq.s32.totalorder %v395, %v477
    %vm608 = vcmp.eq.s32.totalorder %v396, %v477
    %vm609 = vcmp.eq.s32.totalorder %v395, %v480
    %vm610 = vcmp.eq.s32.totalorder %v396, %v480
    %vm611 = vcmp.eq.s32.totalorder %v395, %v483
    %vm612 = vcmp.eq.s32.totalorder %v396, %v483
    %vm613 = vcmp.eq.s32.totalorder %v395, %v486
    %vm614 = vcmp.eq.s32.totalorder %v396, %v486
    %vm615 = vcmp.eq.s32.totalorder %v395, %v489
    %vm616 = vcmp.eq.s32.totalorder %v396, %v489
    %vm617 = vcmp.eq.s32.totalorder %v395, %v492
    %vm618 = vcmp.eq.s32.totalorder %v396, %v492
    %vm619 = vcmp.eq.s32.totalorder %v395, %v495
    %vm620 = vcmp.eq.s32.totalorder %v396, %v495
    %vm621 = vcmp.eq.s32.totalorder %v395, %v498
    %vm622 = vcmp.eq.s32.totalorder %v396, %v498
    %vm623 = vcmp.eq.s32.totalorder %v395, %v501
    %vm624 = vcmp.eq.s32.totalorder %v396, %v501
    %vm625 = vcmp.eq.s32.totalorder %v395, %v504
    %vm626 = vcmp.eq.s32.totalorder %v396, %v504
    %vm627 = vcmp.eq.s32.totalorder %v395, %v507
    %vm628 = vcmp.eq.s32.totalorder %v396, %v507
    %vm629 = vcmp.eq.s32.totalorder %v395, %v510
    %vm630 = vcmp.eq.s32.totalorder %v396, %v510
    %vm631 = vcmp.eq.s32.totalorder %v395, %v513
    %vm632 = vcmp.eq.s32.totalorder %v396, %v513
    %vm633 = vcmp.eq.s32.totalorder %v395, %v516
    %vm634 = vcmp.eq.s32.totalorder %v396, %v516
    %vm635 = vcmp.eq.s32.totalorder %v395, %v519
    %vm636 = vcmp.eq.s32.totalorder %v396, %v519
    %vm637 = vcmp.eq.s32.totalorder %v395, %v522
    %vm638 = vcmp.eq.s32.totalorder %v396, %v522
    %vm639 = vcmp.eq.s32.totalorder %v395, %v525
    %vm640 = vcmp.eq.s32.totalorder %v396, %v525
    %vm641 = vcmp.eq.s32.totalorder %v395, %v528
    %vm642 = vcmp.eq.s32.totalorder %v396, %v528
    %vm643 = vcmp.eq.s32.totalorder %v395, %v531
    %vm644 = vcmp.eq.s32.totalorder %v396, %v531
    %vm645 = vcmp.eq.s32.totalorder %v395, %v534
    %vm646 = vcmp.eq.s32.totalorder %v396, %v534
    %vm647 = vcmp.eq.s32.totalorder %v395, %v537
    %vm648 = vcmp.eq.s32.totalorder %v396, %v537
    %vm649 = vcmp.eq.s32.totalorder %v395, %v540
    %vm650 = vcmp.eq.s32.totalorder %v396, %v540
    %vm651 = vcmp.eq.s32.totalorder %v395, %v543
    %vm652 = vcmp.eq.s32.totalorder %v396, %v543
    %vm653 = vcmp.eq.s32.totalorder %v395, %v546
    %vm654 = vcmp.eq.s32.totalorder %v396, %v546
    %vm655 = vcmp.eq.s32.totalorder %v395, %v549
    %vm656 = vcmp.eq.s32.totalorder %v396, %v549
    %vm657 = vcmp.eq.s32.totalorder %v395, %v552
    %vm658 = vcmp.eq.s32.totalorder %v396, %v552
    %vm659 = vcmp.eq.s32.totalorder %v395, %v555
    %vm660 = vcmp.eq.s32.totalorder %v396, %v555
    %vm661 = vcmp.eq.s32.totalorder %v395, %v558
    %vm662 = vcmp.eq.s32.totalorder %v396, %v558
    %vm663 = vcmp.eq.s32.totalorder %v395, %v561
    %vm664 = vcmp.eq.s32.totalorder %v396, %v561
    %vm665 = vcmp.eq.s32.totalorder %v395, %v564
    %vm666 = vcmp.eq.s32.totalorder %v396, %v564
    %vm667 = vcmp.eq.s32.totalorder %v395, %v567
    %vm668 = vcmp.eq.s32.totalorder %v396, %v567
    %vm669 = vcmp.eq.s32.totalorder %v395, %v570
    %vm670 = vcmp.eq.s32.totalorder %v396, %v570
    %v671 = vsel %vm571, 1, 0
    %v672 = vsel %vm572, 1, 0
    %v673 = vsel %vm573, 1, 0
    %v674 = vsel %vm574, 1, 0
    %v675 = vsel %vm575, 1, 0
    %v676 = vsel %vm576, 1, 0
    %v677 = vsel %vm577, 1, 0
    %v678 = vsel %vm578, 1, 0
    %v679 = vsel %vm579, 1, 0
    %v680 = vsel %vm580, 1, 0
    %v681 = vsel %vm581, 1, 0
    %v682 = vsel %vm582, 1, 0
    %v683 = vsel %vm583, 1, 0
    %v684 = vsel %vm584, 1, 0
    %v685 = vsel %vm585, 1, 0
    %v686 = vsel %vm586, 1, 0
    %v687 = vsel %vm587, 1, 0
    %v688 = vsel %vm588, 1, 0
    %v689 = vsel %vm589, 1, 0
    %v690 = vsel %vm590, 1, 0
    %v691 = vsel %vm591, 1, 0
    %v692 = vsel %vm592, 1, 0
    %v693 = vsel %vm593, 1, 0
    %v694 = vsel %vm594, 1, 0
    %v695 = vsel %vm595, 1, 0
    %v696 = vsel %vm596, 1, 0
    %v697 = vsel %vm597, 1, 0
    %v698 = vsel %vm598, 1, 0
    %v699 = vsel %vm599, 1, 0
    %v700 = vsel %vm600, 1, 0
    %v701 = vsel %vm601, 1, 0
    %v702 = vsel %vm602, 1, 0
    %v703 = vsel %vm603, 1, 0
    %v704 = vsel %vm604, 1, 0
    %v705 = vsel %vm605, 1, 0
    %v706 = vsel %vm606, 1, 0
    %v707 = vsel %vm607, 1, 0
    %v708 = vsel %vm608, 1, 0
    %v709 = vsel %vm609, 1, 0
    %v710 = vsel %vm610, 1, 0
    %v711 = vsel %vm611, 1, 0
    %v712 = vsel %vm612, 1, 0
    %v713 = vsel %vm613, 1, 0
    %v714 = vsel %vm614, 1, 0
    %v715 = vsel %vm615, 1, 0
    %v716 = vsel %vm616, 1, 0
    %v717 = vsel %vm617, 1, 0
    %v718 = vsel %vm618, 1, 0
    %v719 = vsel %vm619, 1, 0
    %v720 = vsel %vm620, 1, 0
    %v721 = vsel %vm621, 1, 0
    %v722 = vsel %vm622, 1, 0
    %v723 = vsel %vm623, 1, 0
    %v724 = vsel %vm624, 1, 0
    %v725 = vsel %vm625, 1, 0
    %v726 = vsel %vm626, 1, 0
    %v727 = vsel %vm627, 1, 0
    %v728 = vsel %vm628, 1, 0
    %v729 = vsel %vm629, 1, 0
    %v730 = vsel %vm630, 1, 0
    %v731 = vsel %vm631, 1, 0
    %v732 = vsel %vm632, 1, 0
    %v733 = vsel %vm633, 1, 0
    %v734 = vsel %vm634, 1, 0
    %v735 = vsel %vm635, 1, 0
    %v736 = vsel %vm636, 1, 0
    %v737 = vsel %vm637, 1, 0
    %v738 = vsel %vm638, 1, 0
    %v739 = vsel %vm639, 1, 0
    %v740 = vsel %vm640, 1, 0
    %v741 = vsel %vm641, 1, 0
    %v742 = vsel %vm642, 1, 0
    %v743 = vsel %vm643, 1, 0
    %v744 = vsel %vm644, 1, 0
    %v745 = vsel %vm645, 1, 0
    %v746 = vsel %vm646, 1, 0
    %v747 = vsel %vm647, 1, 0
    %v748 = vsel %vm648, 1, 0
    %v749 = vsel %vm649, 1, 0
    %v750 = vsel %vm650, 1, 0
    %v751 = vsel %vm651, 1, 0
    %v752 = vsel %vm652, 1, 0
    %v753 = vsel %vm653, 1, 0
    %v754 = vsel %vm654, 1, 0
    %v755 = vsel %vm655, 1, 0
    %v756 = vsel %vm656, 1, 0
    %v757 = vsel %vm657, 1, 0
    %v758 = vsel %vm658, 1, 0
    %v759 = vsel %vm659, 1, 0
    %v760 = vsel %vm660, 1, 0
    %v761 = vsel %vm661, 1, 0
    %v762 = vsel %vm662, 1, 0
    %v763 = vsel %vm663, 1, 0
    %v764 = vsel %vm664, 1, 0
    %v765 = vsel %vm665, 1, 0
    %v766 = vsel %vm666, 1, 0
    %v767 = vsel %vm667, 1, 0
    %v768 = vsel %vm668, 1, 0
    %v769 = vsel %vm669, 1, 0
    %v770 = vsel %vm670, 1, 0
    %v771 = vcvt.s32.f32 %v671
    %v772 = vcvt.s32.f32 %v672
    %v773 = vcvt.s32.f32 %v673
    %v774 = vcvt.s32.f32 %v674
    %v775 = vcvt.s32.f32 %v675
    %v776 = vcvt.s32.f32 %v676
    %v777 = vcvt.s32.f32 %v677
    %v778 = vcvt.s32.f32 %v678
    %v779 = vcvt.s32.f32 %v679
    %v780 = vcvt.s32.f32 %v680
    %v781 = vcvt.s32.f32 %v681
    %v782 = vcvt.s32.f32 %v682
    %v783 = vcvt.s32.f32 %v683
    %v784 = vcvt.s32.f32 %v684
    %v785 = vcvt.s32.f32 %v685
    %v786 = vcvt.s32.f32 %v686
    %v787 = vcvt.s32.f32 %v687
    %v788 = vcvt.s32.f32 %v688
    %v789 = vcvt.s32.f32 %v689
    %v790 = vcvt.s32.f32 %v690
    %v791 = vcvt.s32.f32 %v691
    %v792 = vcvt.s32.f32 %v692
    %v793 = vcvt.s32.f32 %v693
    %v794 = vcvt.s32.f32 %v694
    %v795 = vcvt.s32.f32 %v695
    %v796 = vcvt.s32.f32 %v696
    %v797 = vcvt.s32.f32 %v697
    %v798 = vcvt.s32.f32 %v698
    %v799 = vcvt.s32.f32 %v699
    %v800 = vcvt.s32.f32 %v700
    %v801 = vcvt.s32.f32 %v701
    %v802 = vcvt.s32.f32 %v702
    %v803 = vcvt.s32.f32 %v703
    %v804 = vcvt.s32.f32 %v704
    %v805 = vcvt.s32.f32 %v705
    %v806 = vcvt.s32.f32 %v706
    %v807 = vcvt.s32.f32 %v707
    %v808 = vcvt.s32.f32 %v708
    %v809 = vcvt.s32.f32 %v709
    %v810 = vcvt.s32.f32 %v710
    %v811 = vcvt.s32.f32 %v711
    %v812 = vcvt.s32.f32 %v712
    %v813 = vcvt.s32.f32 %v713
    %v814 = vcvt.s32.f32 %v714
    %v815 = vcvt.s32.f32 %v715
    %v816 = vcvt.s32.f32 %v716
    %v817 = vcvt.s32.f32 %v717
    %v818 = vcvt.s32.f32 %v718
    %v819 = vcvt.s32.f32 %v719
    %v820 = vcvt.s32.f32 %v720
    %v821 = vcvt.s32.f32 %v721
    %v822 = vcvt.s32.f32 %v722
    %v823 = vcvt.s32.f32 %v723
    %v824 = vcvt.s32.f32 %v724
    %v825 = vcvt.s32.f32 %v725
    %v826 = vcvt.s32.f32 %v726
    %v827 = vcvt.s32.f32 %v727
    %v828 = vcvt.s32.f32 %v728
    %v829 = vcvt.s32.f32 %v729
    %v830 = vcvt.s32.f32 %v730
    %v831 = vcvt.s32.f32 %v731
    %v832 = vcvt.s32.f32 %v732
    %v833 = vcvt.s32.f32 %v733
    %v834 = vcvt.s32.f32 %v734
    %v835 = vcvt.s32.f32 %v735
    %v836 = vcvt.s32.f32 %v736
    %v837 = vcvt.s32.f32 %v737
    %v838 = vcvt.s32.f32 %v738
    %v839 = vcvt.s32.f32 %v739
    %v840 = vcvt.s32.f32 %v740
    %v841 = vcvt.s32.f32 %v741
    %v842 = vcvt.s32.f32 %v742
    %v843 = vcvt.s32.f32 %v743
    %v844 = vcvt.s32.f32 %v744
    %v845 = vcvt.s32.f32 %v745
    %v846 = vcvt.s32.f32 %v746
    %v847 = vcvt.s32.f32 %v747
    %v848 = vcvt.s32.f32 %v748
    %v849 = vcvt.s32.f32 %v749
    %v850 = vcvt.s32.f32 %v750
    %v851 = vcvt.s32.f32 %v751
    %v852 = vcvt.s32.f32 %v752
    %v853 = vcvt.s32.f32 %v753
    %v854 = vcvt.s32.f32 %v754
    %v855 = vcvt.s32.f32 %v755
    %v856 = vcvt.s32.f32 %v756
    %v857 = vcvt.s32.f32 %v757
    %v858 = vcvt.s32.f32 %v758
    %v859 = vcvt.s32.f32 %v759
    %v860 = vcvt.s32.f32 %v760
    %v861 = vcvt.s32.f32 %v761
    %v862 = vcvt.s32.f32 %v762
    %v863 = vcvt.s32.f32 %v763
    %v864 = vcvt.s32.f32 %v764
    %v865 = vcvt.s32.f32 %v765
    %v866 = vcvt.s32.f32 %v766
    %v867 = vcvt.s32.f32 %v767
    %v868 = vcvt.s32.f32 %v768
    %v869 = vcvt.s32.f32 %v769
    %v870 = vcvt.s32.f32 %v770
    %871 = vset.pattern.permute.xlu0 0
    %872 = vperm.xlu0 %871, %v343
    %v873 = vpop.permute.xlu0 %872
    %874 = vset.pattern.permute.xlu0 0
    %875 = vperm.xlu0 %874, %v344
    %v876 = vpop.permute.xlu0 %875
    %877 = vset.pattern.permute.xlu0 0
    %878 = vperm.xlu0 %877, %v345
    %v879 = vpop.permute.xlu0 %878
    %880 = vset.pattern.permute.xlu0 0
    %881 = vperm.xlu0 %880, %v346
    %v882 = vpop.permute.xlu0 %881
    %883 = vset.pattern.permute.xlu0 0
    %884 = vperm.xlu0 %883, %v347
    %v885 = vpop.permute.xlu0 %884
    %886 = vset.pattern.permute.xlu0 0
    %887 = vperm.xlu0 %886, %v348
    %v888 = vpop.permute.xlu0 %887
    %889 = vset.pattern.permute.xlu0 0
    %890 = vperm.xlu0 %889, %v349
    %v891 = vpop.permute.xlu0 %890
    %892 = vset.pattern.permute.xlu0 0
    %893 = vperm.xlu0 %892, %v350
    %v894 = vpop.permute.xlu0 %893
    %895 = vset.pattern.permute.xlu0 0
    %896 = vperm.xlu0 %895, %v351
    %v897 = vpop.permute.xlu0 %896
    %898 = vset.pattern.permute.xlu0 0
    %899 = vperm.xlu0 %898, %v352
    %v900 = vpop.permute.xlu0 %899
    %901 = vset.pattern.permute.xlu0 0
    %902 = vperm.xlu0 %901, %v353
    %v903 = vpop.permute.xlu0 %902
    %904 = vset.pattern.permute.xlu0 0
    %905 = vperm.xlu0 %904, %v354
    %v906 = vpop.permute.xlu0 %905
    %907 = vset.pattern.permute.xlu0 0
    %908 = vperm.xlu0 %907, %v355
    %v909 = vpop.permute.xlu0 %908
    %910 = vset.pattern.permute.xlu0 0
    %911 = vperm.xlu0 %910, %v356
    %v912 = vpop.permute.xlu0 %911
    %913 = vset.pattern.permute.xlu0 0
    %914 = vperm.xlu0 %913, %v357
    %v915 = vpop.permute.xlu0 %914
    %916 = vset.pattern.permute.xlu0 0
    %917 = vperm.xlu0 %916, %v358
    %v918 = vpop.permute.xlu0 %917
    %919 = vset.pattern.permute.xlu0 0
    %920 = vperm.xlu0 %919, %v359
    %v921 = vpop.permute.xlu0 %920
    %922 = vset.pattern.permute.xlu0 0
    %923 = vperm.xlu0 %922, %v360
    %v924 = vpop.permute.xlu0 %923
    %925 = vset.pattern.permute.xlu0 0
    %926 = vperm.xlu0 %925, %v361
    %v927 = vpop.permute.xlu0 %926
    %928 = vset.pattern.permute.xlu0 0
    %929 = vperm.xlu0 %928, %v362
    %v930 = vpop.permute.xlu0 %929
    %931 = vset.pattern.permute.xlu0 0
    %932 = vperm.xlu0 %931, %v363
    %v933 = vpop.permute.xlu0 %932
    %934 = vset.pattern.permute.xlu0 0
    %935 = vperm.xlu0 %934, %v364
    %v936 = vpop.permute.xlu0 %935
    %937 = vset.pattern.permute.xlu0 0
    %938 = vperm.xlu0 %937, %v365
    %v939 = vpop.permute.xlu0 %938
    %940 = vset.pattern.permute.xlu0 0
    %941 = vperm.xlu0 %940, %v366
    %v942 = vpop.permute.xlu0 %941
    %943 = vset.pattern.permute.xlu0 0
    %944 = vperm.xlu0 %943, %v367
    %v945 = vpop.permute.xlu0 %944
    %946 = vset.pattern.permute.xlu0 0
    %947 = vperm.xlu0 %946, %v368
    %v948 = vpop.permute.xlu0 %947
    %949 = vset.pattern.permute.xlu0 0
    %950 = vperm.xlu0 %949, %v369
    %v951 = vpop.permute.xlu0 %950
    %952 = vset.pattern.permute.xlu0 0
    %953 = vperm.xlu0 %952, %v370
    %v954 = vpop.permute.xlu0 %953
    %955 = vset.pattern.permute.xlu0 0
    %956 = vperm.xlu0 %955, %v371
    %v957 = vpop.permute.xlu0 %956
    %958 = vset.pattern.permute.xlu0 0
    %959 = vperm.xlu0 %958, %v372
    %v960 = vpop.permute.xlu0 %959
    %961 = vset.pattern.permute.xlu0 0
    %962 = vperm.xlu0 %961, %v373
    %v963 = vpop.permute.xlu0 %962
    %964 = vset.pattern.permute.xlu0 0
    %965 = vperm.xlu0 %964, %v374
    %v966 = vpop.permute.xlu0 %965
    %967 = vset.pattern.permute.xlu0 0
    %968 = vperm.xlu0 %967, %v375
    %v969 = vpop.permute.xlu0 %968
    %970 = vset.pattern.permute.xlu0 0
    %971 = vperm.xlu0 %970, %v376
    %v972 = vpop.permute.xlu0 %971
    %973 = vset.pattern.permute.xlu0 0
    %974 = vperm.xlu0 %973, %v377
    %v975 = vpop.permute.xlu0 %974
    %976 = vset.pattern.permute.xlu0 0
    %977 = vperm.xlu0 %976, %v378
    %v978 = vpop.permute.xlu0 %977
    %979 = vset.pattern.permute.xlu0 0
    %980 = vperm.xlu0 %979, %v379
    %v981 = vpop.permute.xlu0 %980
    %982 = vset.pattern.permute.xlu0 0
    %983 = vperm.xlu0 %982, %v380
    %v984 = vpop.permute.xlu0 %983
    %985 = vset.pattern.permute.xlu0 0
    %986 = vperm.xlu0 %985, %v381
    %v987 = vpop.permute.xlu0 %986
    %988 = vset.pattern.permute.xlu0 0
    %989 = vperm.xlu0 %988, %v382
    %v990 = vpop.permute.xlu0 %989
    %991 = vset.pattern.permute.xlu0 0
    %992 = vperm.xlu0 %991, %v383
    %v993 = vpop.permute.xlu0 %992
    %994 = vset.pattern.permute.xlu0 0
    %995 = vperm.xlu0 %994, %v384
    %v996 = vpop.permute.xlu0 %995
    %997 = vset.pattern.permute.xlu0 0
    %998 = vperm.xlu0 %997, %v385
    %v999 = vpop.permute.xlu0 %998
    %1000 = vset.pattern.permute.xlu0 0
    %1001 = vperm.xlu0 %1000, %v386
    %v1002 = vpop.permute.xlu0 %1001
    %1003 = vset.pattern.permute.xlu0 0
    %1004 = vperm.xlu0 %1003, %v387
    %v1005 = vpop.permute.xlu0 %1004
    %1006 = vset.pattern.permute.xlu0 0
    %1007 = vperm.xlu0 %1006, %v388
    %v1008 = vpop.permute.xlu0 %1007
    %1009 = vset.pattern.permute.xlu0 0
    %1010 = vperm.xlu0 %1009, %v389
    %v1011 = vpop.permute.xlu0 %1010
    %1012 = vset.pattern.permute.xlu0 0
    %1013 = vperm.xlu0 %1012, %v390
    %v1014 = vpop.permute.xlu0 %1013
    %1015 = vset.pattern.permute.xlu0 0
    %1016 = vperm.xlu0 %1015, %v391
    %v1017 = vpop.permute.xlu0 %1016
    %1018 = vset.pattern.permute.xlu0 0
    %1019 = vperm.xlu0 %1018, %v392
    %v1020 = vpop.permute.xlu0 %1019
    %vm1021 = vcmp.eq.s32.totalorder %v395, %v873
    %vm1022 = vcmp.eq.s32.totalorder %v396, %v873
    %vm1023 = vcmp.eq.s32.totalorder %v395, %v876
    %vm1024 = vcmp.eq.s32.totalorder %v396, %v876
    %vm1025 = vcmp.eq.s32.totalorder %v395, %v879
    %vm1026 = vcmp.eq.s32.totalorder %v396, %v879
    %vm1027 = vcmp.eq.s32.totalorder %v395, %v882
    %vm1028 = vcmp.eq.s32.totalorder %v396, %v882
    %vm1029 = vcmp.eq.s32.totalorder %v395, %v885
    %vm1030 = vcmp.eq.s32.totalorder %v396, %v885
    %vm1031 = vcmp.eq.s32.totalorder %v395, %v888
    %vm1032 = vcmp.eq.s32.totalorder %v396, %v888
    %vm1033 = vcmp.eq.s32.totalorder %v395, %v891
    %vm1034 = vcmp.eq.s32.totalorder %v396, %v891
    %vm1035 = vcmp.eq.s32.totalorder %v395, %v894
    %vm1036 = vcmp.eq.s32.totalorder %v396, %v894
    %vm1037 = vcmp.eq.s32.totalorder %v395, %v897
    %vm1038 = vcmp.eq.s32.totalorder %v396, %v897
    %vm1039 = vcmp.eq.s32.totalorder %v395, %v900
    %vm1040 = vcmp.eq.s32.totalorder %v396, %v900
    %vm1041 = vcmp.eq.s32.totalorder %v395, %v903
    %vm1042 = vcmp.eq.s32.totalorder %v396, %v903
    %vm1043 = vcmp.eq.s32.totalorder %v395, %v906
    %vm1044 = vcmp.eq.s32.totalorder %v396, %v906
    %vm1045 = vcmp.eq.s32.totalorder %v395, %v909
    %vm1046 = vcmp.eq.s32.totalorder %v396, %v909
    %vm1047 = vcmp.eq.s32.totalorder %v395, %v912
    %vm1048 = vcmp.eq.s32.totalorder %v396, %v912
    %vm1049 = vcmp.eq.s32.totalorder %v395, %v915
    %vm1050 = vcmp.eq.s32.totalorder %v396, %v915
    %vm1051 = vcmp.eq.s32.totalorder %v395, %v918
    %vm1052 = vcmp.eq.s32.totalorder %v396, %v918
    %vm1053 = vcmp.eq.s32.totalorder %v395, %v921
    %vm1054 = vcmp.eq.s32.totalorder %v396, %v921
    %vm1055 = vcmp.eq.s32.totalorder %v395, %v924
    %vm1056 = vcmp.eq.s32.totalorder %v396, %v924
    %vm1057 = vcmp.eq.s32.totalorder %v395, %v927
    %vm1058 = vcmp.eq.s32.totalorder %v396, %v927
    %vm1059 = vcmp.eq.s32.totalorder %v395, %v930
    %vm1060 = vcmp.eq.s32.totalorder %v396, %v930
    %vm1061 = vcmp.eq.s32.totalorder %v395, %v933
    %vm1062 = vcmp.eq.s32.totalorder %v396, %v933
    %vm1063 = vcmp.eq.s32.totalorder %v395, %v936
    %vm1064 = vcmp.eq.s32.totalorder %v396, %v936
    %vm1065 = vcmp.eq.s32.totalorder %v395, %v939
    %vm1066 = vcmp.eq.s32.totalorder %v396, %v939
    %vm1067 = vcmp.eq.s32.totalorder %v395, %v942
    %vm1068 = vcmp.eq.s32.totalorder %v396, %v942
    %vm1069 = vcmp.eq.s32.totalorder %v395, %v945
    %vm1070 = vcmp.eq.s32.totalorder %v396, %v945
    %vm1071 = vcmp.eq.s32.totalorder %v395, %v948
    %vm1072 = vcmp.eq.s32.totalorder %v396, %v948
    %vm1073 = vcmp.eq.s32.totalorder %v395, %v951
    %vm1074 = vcmp.eq.s32.totalorder %v396, %v951
    %vm1075 = vcmp.eq.s32.totalorder %v395, %v954
    %vm1076 = vcmp.eq.s32.totalorder %v396, %v954
    %vm1077 = vcmp.eq.s32.totalorder %v395, %v957
    %vm1078 = vcmp.eq.s32.totalorder %v396, %v957
    %vm1079 = vcmp.eq.s32.totalorder %v395, %v960
    %vm1080 = vcmp.eq.s32.totalorder %v396, %v960
    %vm1081 = vcmp.eq.s32.totalorder %v395, %v963
    %vm1082 = vcmp.eq.s32.totalorder %v396, %v963
    %vm1083 = vcmp.eq.s32.totalorder %v395, %v966
    %vm1084 = vcmp.eq.s32.totalorder %v396, %v966
    %vm1085 = vcmp.eq.s32.totalorder %v395, %v969
    %vm1086 = vcmp.eq.s32.totalorder %v396, %v969
    %vm1087 = vcmp.eq.s32.totalorder %v395, %v972
    %vm1088 = vcmp.eq.s32.totalorder %v396, %v972
    %vm1089 = vcmp.eq.s32.totalorder %v395, %v975
    %vm1090 = vcmp.eq.s32.totalorder %v396, %v975
    %vm1091 = vcmp.eq.s32.totalorder %v395, %v978
    %vm1092 = vcmp.eq.s32.totalorder %v396, %v978
    %vm1093 = vcmp.eq.s32.totalorder %v395, %v981
    %vm1094 = vcmp.eq.s32.totalorder %v396, %v981
    %vm1095 = vcmp.eq.s32.totalorder %v395, %v984
    %vm1096 = vcmp.eq.s32.totalorder %v396, %v984
    %vm1097 = vcmp.eq.s32.totalorder %v395, %v987
    %vm1098 = vcmp.eq.s32.totalorder %v396, %v987
    %vm1099 = vcmp.eq.s32.totalorder %v395, %v990
    %vm1100 = vcmp.eq.s32.totalorder %v396, %v990
    %vm1101 = vcmp.eq.s32.totalorder %v395, %v993
    %vm1102 = vcmp.eq.s32.totalorder %v396, %v993
    %vm1103 = vcmp.eq.s32.totalorder %v395, %v996
    %vm1104 = vcmp.eq.s32.totalorder %v396, %v996
    %vm1105 = vcmp.eq.s32.totalorder %v395, %v999
    %vm1106 = vcmp.eq.s32.totalorder %v396, %v999
    %vm1107 = vcmp.eq.s32.totalorder %v395, %v1002
    %vm1108 = vcmp.eq.s32.totalorder %v396, %v1002
    %vm1109 = vcmp.eq.s32.totalorder %v395, %v1005
    %vm1110 = vcmp.eq.s32.totalorder %v396, %v1005
    %vm1111 = vcmp.eq.s32.totalorder %v395, %v1008
    %vm1112 = vcmp.eq.s32.totalorder %v396, %v1008
    %vm1113 = vcmp.eq.s32.totalorder %v395, %v1011
    %vm1114 = vcmp.eq.s32.totalorder %v396, %v1011
    %vm1115 = vcmp.eq.s32.totalorder %v395, %v1014
    %vm1116 = vcmp.eq.s32.totalorder %v396, %v1014
    %vm1117 = vcmp.eq.s32.totalorder %v395, %v1017
    %vm1118 = vcmp.eq.s32.totalorder %v396, %v1017
    %vm1119 = vcmp.eq.s32.totalorder %v395, %v1020
    %vm1120 = vcmp.eq.s32.totalorder %v396, %v1020
    %v1121 = vsel %vm1021, 1, 0
    %v1122 = vsel %vm1022, 1, 0
    %v1123 = vsel %vm1023, 1, 0
    %v1124 = vsel %vm1024, 1, 0
    %v1125 = vsel %vm1025, 1, 0
    %v1126 = vsel %vm1026, 1, 0
    %v1127 = vsel %vm1027, 1, 0
    %v1128 = vsel %vm1028, 1, 0
    %v1129 = vsel %vm1029, 1, 0
    %v1130 = vsel %vm1030, 1, 0
    %v1131 = vsel %vm1031, 1, 0
    %v1132 = vsel %vm1032, 1, 0
    %v1133 = vsel %vm1033, 1, 0
    %v1134 = vsel %vm1034, 1, 0
    %v1135 = vsel %vm1035, 1, 0
    %v1136 = vsel %vm1036, 1, 0
    %v1137 = vsel %vm1037, 1, 0
    %v1138 = vsel %vm1038, 1, 0
    %v1139 = vsel %vm1039, 1, 0
    %v1140 = vsel %vm1040, 1, 0
    %v1141 = vsel %vm1041, 1, 0
    %v1142 = vsel %vm1042, 1, 0
    %v1143 = vsel %vm1043, 1, 0
    %v1144 = vsel %vm1044, 1, 0
    %v1145 = vsel %vm1045, 1, 0
    %v1146 = vsel %vm1046, 1, 0
    %v1147 = vsel %vm1047, 1, 0
    %v1148 = vsel %vm1048, 1, 0
    %v1149 = vsel %vm1049, 1, 0
    %v1150 = vsel %vm1050, 1, 0
    %v1151 = vsel %vm1051, 1, 0
    %v1152 = vsel %vm1052, 1, 0
    %v1153 = vsel %vm1053, 1, 0
    %v1154 = vsel %vm1054, 1, 0
    %v1155 = vsel %vm1055, 1, 0
    %v1156 = vsel %vm1056, 1, 0
    %v1157 = vsel %vm1057, 1, 0
    %v1158 = vsel %vm1058, 1, 0
    %v1159 = vsel %vm1059, 1, 0
    %v1160 = vsel %vm1060, 1, 0
    %v1161 = vsel %vm1061, 1, 0
    %v1162 = vsel %vm1062, 1, 0
    %v1163 = vsel %vm1063, 1, 0
    %v1164 = vsel %vm1064, 1, 0
    %v1165 = vsel %vm1065, 1, 0
    %v1166 = vsel %vm1066, 1, 0
    %v1167 = vsel %vm1067, 1, 0
    %v1168 = vsel %vm1068, 1, 0
    %v1169 = vsel %vm1069, 1, 0
    %v1170 = vsel %vm1070, 1, 0
    %v1171 = vsel %vm1071, 1, 0
    %v1172 = vsel %vm1072, 1, 0
    %v1173 = vsel %vm1073, 1, 0
    %v1174 = vsel %vm1074, 1, 0
    %v1175 = vsel %vm1075, 1, 0
    %v1176 = vsel %vm1076, 1, 0
    %v1177 = vsel %vm1077, 1, 0
    %v1178 = vsel %vm1078, 1, 0
    %v1179 = vsel %vm1079, 1, 0
    %v1180 = vsel %vm1080, 1, 0
    %v1181 = vsel %vm1081, 1, 0
    %v1182 = vsel %vm1082, 1, 0
    %v1183 = vsel %vm1083, 1, 0
    %v1184 = vsel %vm1084, 1, 0
    %v1185 = vsel %vm1085, 1, 0
    %v1186 = vsel %vm1086, 1, 0
    %v1187 = vsel %vm1087, 1, 0
    %v1188 = vsel %vm1088, 1, 0
    %v1189 = vsel %vm1089, 1, 0
    %v1190 = vsel %vm1090, 1, 0
    %v1191 = vsel %vm1091, 1, 0
    %v1192 = vsel %vm1092, 1, 0
    %v1193 = vsel %vm1093, 1, 0
    %v1194 = vsel %vm1094, 1, 0
    %v1195 = vsel %vm1095, 1, 0
    %v1196 = vsel %vm1096, 1, 0
    %v1197 = vsel %vm1097, 1, 0
    %v1198 = vsel %vm1098, 1, 0
    %v1199 = vsel %vm1099, 1, 0
    %v1200 = vsel %vm1100, 1, 0
    %v1201 = vsel %vm1101, 1, 0
    %v1202 = vsel %vm1102, 1, 0
    %v1203 = vsel %vm1103, 1, 0
    %v1204 = vsel %vm1104, 1, 0
    %v1205 = vsel %vm1105, 1, 0
    %v1206 = vsel %vm1106, 1, 0
    %v1207 = vsel %vm1107, 1, 0
    %v1208 = vsel %vm1108, 1, 0
    %v1209 = vsel %vm1109, 1, 0
    %v1210 = vsel %vm1110, 1, 0
    %v1211 = vsel %vm1111, 1, 0
    %v1212 = vsel %vm1112, 1, 0
    %v1213 = vsel %vm1113, 1, 0
    %v1214 = vsel %vm1114, 1, 0
    %v1215 = vsel %vm1115, 1, 0
    %v1216 = vsel %vm1116, 1, 0
    %v1217 = vsel %vm1117, 1, 0
    %v1218 = vsel %vm1118, 1, 0
    %v1219 = vsel %vm1119, 1, 0
    %v1220 = vsel %vm1120, 1, 0
    %v1221 = vcvt.s32.f32 %v1121
    %v1222 = vcvt.s32.f32 %v1122
    %v1223 = vcvt.s32.f32 %v1123
    %v1224 = vcvt.s32.f32 %v1124
    %v1225 = vcvt.s32.f32 %v1125
    %v1226 = vcvt.s32.f32 %v1126
    %v1227 = vcvt.s32.f32 %v1127
    %v1228 = vcvt.s32.f32 %v1128
    %v1229 = vcvt.s32.f32 %v1129
    %v1230 = vcvt.s32.f32 %v1130
    %v1231 = vcvt.s32.f32 %v1131
    %v1232 = vcvt.s32.f32 %v1132
    %v1233 = vcvt.s32.f32 %v1133
    %v1234 = vcvt.s32.f32 %v1134
    %v1235 = vcvt.s32.f32 %v1135
    %v1236 = vcvt.s32.f32 %v1136
    %v1237 = vcvt.s32.f32 %v1137
    %v1238 = vcvt.s32.f32 %v1138
    %v1239 = vcvt.s32.f32 %v1139
    %v1240 = vcvt.s32.f32 %v1140
    %v1241 = vcvt.s32.f32 %v1141
    %v1242 = vcvt.s32.f32 %v1142
    %v1243 = vcvt.s32.f32 %v1143
    %v1244 = vcvt.s32.f32 %v1144
    %v1245 = vcvt.s32.f32 %v1145
    %v1246 = vcvt.s32.f32 %v1146
    %v1247 = vcvt.s32.f32 %v1147
    %v1248 = vcvt.s32.f32 %v1148
    %v1249 = vcvt.s32.f32 %v1149
    %v1250 = vcvt.s32.f32 %v1150
    %v1251 = vcvt.s32.f32 %v1151
    %v1252 = vcvt.s32.f32 %v1152
    %v1253 = vcvt.s32.f32 %v1153
    %v1254 = vcvt.s32.f32 %v1154
    %v1255 = vcvt.s32.f32 %v1155
    %v1256 = vcvt.s32.f32 %v1156
    %v1257 = vcvt.s32.f32 %v1157
    %v1258 = vcvt.s32.f32 %v1158
    %v1259 = vcvt.s32.f32 %v1159
    %v1260 = vcvt.s32.f32 %v1160
    %v1261 = vcvt.s32.f32 %v1161
    %v1262 = vcvt.s32.f32 %v1162
    %v1263 = vcvt.s32.f32 %v1163
    %v1264 = vcvt.s32.f32 %v1164
    %v1265 = vcvt.s32.f32 %v1165
    %v1266 = vcvt.s32.f32 %v1166
    %v1267 = vcvt.s32.f32 %v1167
    %v1268 = vcvt.s32.f32 %v1168
    %v1269 = vcvt.s32.f32 %v1169
    %v1270 = vcvt.s32.f32 %v1170
    %v1271 = vcvt.s32.f32 %v1171
    %v1272 = vcvt.s32.f32 %v1172
    %v1273 = vcvt.s32.f32 %v1173
    %v1274 = vcvt.s32.f32 %v1174
    %v1275 = vcvt.s32.f32 %v1175
    %v1276 = vcvt.s32.f32 %v1176
    %v1277 = vcvt.s32.f32 %v1177
    %v1278 = vcvt.s32.f32 %v1178
    %v1279 = vcvt.s32.f32 %v1179
    %v1280 = vcvt.s32.f32 %v1180
    %v1281 = vcvt.s32.f32 %v1181
    %v1282 = vcvt.s32.f32 %v1182
    %v1283 = vcvt.s32.f32 %v1183
    %v1284 = vcvt.s32.f32 %v1184
    %v1285 = vcvt.s32.f32 %v1185
    %v1286 = vcvt.s32.f32 %v1186
    %v1287 = vcvt.s32.f32 %v1187
    %v1288 = vcvt.s32.f32 %v1188
    %v1289 = vcvt.s32.f32 %v1189
    %v1290 = vcvt.s32.f32 %v1190
    %v1291 = vcvt.s32.f32 %v1191
    %v1292 = vcvt.s32.f32 %v1192
    %v1293 = vcvt.s32.f32 %v1193
    %v1294 = vcvt.s32.f32 %v1194
    %v1295 = vcvt.s32.f32 %v1195
    %v1296 = vcvt.s32.f32 %v1196
    %v1297 = vcvt.s32.f32 %v1197
    %v1298 = vcvt.s32.f32 %v1198
    %v1299 = vcvt.s32.f32 %v1199
    %v1300 = vcvt.s32.f32 %v1200
    %v1301 = vcvt.s32.f32 %v1201
    %v1302 = vcvt.s32.f32 %v1202
    %v1303 = vcvt.s32.f32 %v1203
    %v1304 = vcvt.s32.f32 %v1204
    %v1305 = vcvt.s32.f32 %v1205
    %v1306 = vcvt.s32.f32 %v1206
    %v1307 = vcvt.s32.f32 %v1207
    %v1308 = vcvt.s32.f32 %v1208
    %v1309 = vcvt.s32.f32 %v1209
    %v1310 = vcvt.s32.f32 %v1210
    %v1311 = vcvt.s32.f32 %v1211
    %v1312 = vcvt.s32.f32 %v1212
    %v1313 = vcvt.s32.f32 %v1213
    %v1314 = vcvt.s32.f32 %v1214
    %v1315 = vcvt.s32.f32 %v1215
    %v1316 = vcvt.s32.f32 %v1216
    %v1317 = vcvt.s32.f32 %v1217
    %v1318 = vcvt.s32.f32 %v1218
    %v1319 = vcvt.s32.f32 %v1219
    %v1320 = vcvt.s32.f32 %v1220
    %v1321 = vlaneseq
    %v1322 = vshrl.u32 %v1321, 7
    %v1323 = vsub.s32 0, %v1322
    %v1324 = vrot.slane %v393, %v1323
    %v1325 = vlaneseq
    %v1326 = vshrl.u32 %v1325, 7
    %v1327 = vsub.s32 1, %v1326
    %v1328 = vrot.slane %v393, %v1327
    %v1329 = vlaneseq
    %v1330 = vshrl.u32 %v1329, 7
    %v1331 = vsub.s32 2, %v1330
    %v1332 = vrot.slane %v393, %v1331
    %v1333 = vlaneseq
    %v1334 = vshrl.u32 %v1333, 7
    %v1335 = vsub.s32 3, %v1334
    %v1336 = vrot.slane %v393, %v1335
    %vm1337 = vcmp.eq.s32.totalorder %v398, %v1324
    %vm1338 = vcmp.eq.s32.totalorder %v398, %v1328
    %vm1339 = vcmp.eq.s32.totalorder %v398, %v1332
    %vm1340 = vcmp.eq.s32.totalorder %v398, %v1336
    %vm1341 = vcmp.eq.s32.totalorder %v399, %v1324
    %vm1342 = vcmp.eq.s32.totalorder %v399, %v1328
    %vm1343 = vcmp.eq.s32.totalorder %v399, %v1332
    %vm1344 = vcmp.eq.s32.totalorder %v399, %v1336
    %vm1345 = vcmp.eq.s32.totalorder %v400, %v1324
    %vm1346 = vcmp.eq.s32.totalorder %v400, %v1328
    %vm1347 = vcmp.eq.s32.totalorder %v400, %v1332
    %vm1348 = vcmp.eq.s32.totalorder %v400, %v1336
    %vm1349 = vcmp.eq.s32.totalorder %v401, %v1324
    %vm1350 = vcmp.eq.s32.totalorder %v401, %v1328
    %vm1351 = vcmp.eq.s32.totalorder %v401, %v1332
    %vm1352 = vcmp.eq.s32.totalorder %v401, %v1336
    %vm1353 = vcmp.eq.s32.totalorder %v402, %v1324
    %vm1354 = vcmp.eq.s32.totalorder %v402, %v1328
    %vm1355 = vcmp.eq.s32.totalorder %v402, %v1332
    %vm1356 = vcmp.eq.s32.totalorder %v402, %v1336
    %vm1357 = vcmp.eq.s32.totalorder %v403, %v1324
    %vm1358 = vcmp.eq.s32.totalorder %v403, %v1328
    %vm1359 = vcmp.eq.s32.totalorder %v403, %v1332
    %vm1360 = vcmp.eq.s32.totalorder %v403, %v1336
    %vm1361 = vcmp.eq.s32.totalorder %v404, %v1324
    %vm1362 = vcmp.eq.s32.totalorder %v404, %v1328
    %vm1363 = vcmp.eq.s32.totalorder %v404, %v1332
    %vm1364 = vcmp.eq.s32.totalorder %v404, %v1336
    %vm1365 = vcmp.eq.s32.totalorder %v405, %v1324
    %vm1366 = vcmp.eq.s32.totalorder %v405, %v1328
    %vm1367 = vcmp.eq.s32.totalorder %v405, %v1332
    %vm1368 = vcmp.eq.s32.totalorder %v405, %v1336
    %vm1369 = vcmp.eq.s32.totalorder %v406, %v1324
    %vm1370 = vcmp.eq.s32.totalorder %v406, %v1328
    %vm1371 = vcmp.eq.s32.totalorder %v406, %v1332
    %vm1372 = vcmp.eq.s32.totalorder %v406, %v1336
    %vm1373 = vcmp.eq.s32.totalorder %v407, %v1324
    %vm1374 = vcmp.eq.s32.totalorder %v407, %v1328
    %vm1375 = vcmp.eq.s32.totalorder %v407, %v1332
    %vm1376 = vcmp.eq.s32.totalorder %v407, %v1336
    %vm1377 = vcmp.eq.s32.totalorder %v408, %v1324
    %vm1378 = vcmp.eq.s32.totalorder %v408, %v1328
    %vm1379 = vcmp.eq.s32.totalorder %v408, %v1332
    %vm1380 = vcmp.eq.s32.totalorder %v408, %v1336
    %vm1381 = vcmp.eq.s32.totalorder %v409, %v1324
    %vm1382 = vcmp.eq.s32.totalorder %v409, %v1328
    %vm1383 = vcmp.eq.s32.totalorder %v409, %v1332
    %vm1384 = vcmp.eq.s32.totalorder %v409, %v1336
    %vm1385 = vcmp.eq.s32.totalorder %v410, %v1324
    %vm1386 = vcmp.eq.s32.totalorder %v410, %v1328
    %vm1387 = vcmp.eq.s32.totalorder %v410, %v1332
    %vm1388 = vcmp.eq.s32.totalorder %v410, %v1336
    %vm1389 = vcmp.eq.s32.totalorder %v411, %v1324
    %vm1390 = vcmp.eq.s32.totalorder %v411, %v1328
    %vm1391 = vcmp.eq.s32.totalorder %v411, %v1332
    %vm1392 = vcmp.eq.s32.totalorder %v411, %v1336
    %vm1393 = vcmp.eq.s32.totalorder %v412, %v1324
    %vm1394 = vcmp.eq.s32.totalorder %v412, %v1328
    %vm1395 = vcmp.eq.s32.totalorder %v412, %v1332
    %vm1396 = vcmp.eq.s32.totalorder %v412, %v1336
    %vm1397 = vcmp.eq.s32.totalorder %v413, %v1324
    %vm1398 = vcmp.eq.s32.totalorder %v413, %v1328
    %vm1399 = vcmp.eq.s32.totalorder %v413, %v1332
    %vm1400 = vcmp.eq.s32.totalorder %v413, %v1336
    %vm1401 = vcmp.eq.s32.totalorder %v414, %v1324
    %vm1402 = vcmp.eq.s32.totalorder %v414, %v1328
    %vm1403 = vcmp.eq.s32.totalorder %v414, %v1332
    %vm1404 = vcmp.eq.s32.totalorder %v414, %v1336
    %vm1405 = vcmp.eq.s32.totalorder %v415, %v1324
    %vm1406 = vcmp.eq.s32.totalorder %v415, %v1328
    %vm1407 = vcmp.eq.s32.totalorder %v415, %v1332
    %vm1408 = vcmp.eq.s32.totalorder %v415, %v1336
    %vm1409 = vcmp.eq.s32.totalorder %v416, %v1324
    %vm1410 = vcmp.eq.s32.totalorder %v416, %v1328
    %vm1411 = vcmp.eq.s32.totalorder %v416, %v1332
    %vm1412 = vcmp.eq.s32.totalorder %v416, %v1336
    %vm1413 = vcmp.eq.s32.totalorder %v417, %v1324
    %vm1414 = vcmp.eq.s32.totalorder %v417, %v1328
    %vm1415 = vcmp.eq.s32.totalorder %v417, %v1332
    %vm1416 = vcmp.eq.s32.totalorder %v417, %v1336
    %vm1417 = vcmp.eq.s32.totalorder %v418, %v1324
    %vm1418 = vcmp.eq.s32.totalorder %v418, %v1328
    %vm1419 = vcmp.eq.s32.totalorder %v418, %v1332
    %vm1420 = vcmp.eq.s32.totalorder %v418, %v1336
    %vm1421 = vcmp.eq.s32.totalorder %v419, %v1324
    %vm1422 = vcmp.eq.s32.totalorder %v419, %v1328
    %vm1423 = vcmp.eq.s32.totalorder %v419, %v1332
    %vm1424 = vcmp.eq.s32.totalorder %v419, %v1336
    %vm1425 = vcmp.eq.s32.totalorder %v420, %v1324
    %vm1426 = vcmp.eq.s32.totalorder %v420, %v1328
    %vm1427 = vcmp.eq.s32.totalorder %v420, %v1332
    %vm1428 = vcmp.eq.s32.totalorder %v420, %v1336
    %v1429 = vsel %vm1337, 1, 0
    %v1430 = vsel %vm1338, 1, 0
    %v1431 = vsel %vm1339, 1, 0
    %v1432 = vsel %vm1340, 1, 0
    %v1433 = vsel %vm1341, 1, 0
    %v1434 = vsel %vm1342, 1, 0
    %v1435 = vsel %vm1343, 1, 0
    %v1436 = vsel %vm1344, 1, 0
    %v1437 = vsel %vm1345, 1, 0
    %v1438 = vsel %vm1346, 1, 0
    %v1439 = vsel %vm1347, 1, 0
    %v1440 = vsel %vm1348, 1, 0
    %v1441 = vsel %vm1349, 1, 0
    %v1442 = vsel %vm1350, 1, 0
    %v1443 = vsel %vm1351, 1, 0
    %v1444 = vsel %vm1352, 1, 0
    %v1445 = vsel %vm1353, 1, 0
    %v1446 = vsel %vm1354, 1, 0
    %v1447 = vsel %vm1355, 1, 0
    %v1448 = vsel %vm1356, 1, 0
    %v1449 = vsel %vm1357, 1, 0
    %v1450 = vsel %vm1358, 1, 0
    %v1451 = vsel %vm1359, 1, 0
    %v1452 = vsel %vm1360, 1, 0
    %v1453 = vsel %vm1361, 1, 0
    %v1454 = vsel %vm1362, 1, 0
    %v1455 = vsel %vm1363, 1, 0
    %v1456 = vsel %vm1364, 1, 0
    %v1457 = vsel %vm1365, 1, 0
    %v1458 = vsel %vm1366, 1, 0
    %v1459 = vsel %vm1367, 1, 0
    %v1460 = vsel %vm1368, 1, 0
    %v1461 = vsel %vm1369, 1, 0
    %v1462 = vsel %vm1370, 1, 0
    %v1463 = vsel %vm1371, 1, 0
    %v1464 = vsel %vm1372, 1, 0
    %v1465 = vsel %vm1373, 1, 0
    %v1466 = vsel %vm1374, 1, 0
    %v1467 = vsel %vm1375, 1, 0
    %v1468 = vsel %vm1376, 1, 0
    %v1469 = vsel %vm1377, 1, 0
    %v1470 = vsel %vm1378, 1, 0
    %v1471 = vsel %vm1379, 1, 0
    %v1472 = vsel %vm1380, 1, 0
    %v1473 = vsel %vm1381, 1, 0
    %v1474 = vsel %vm1382, 1, 0
    %v1475 = vsel %vm1383, 1, 0
    %v1476 = vsel %vm1384, 1, 0
    %v1477 = vsel %vm1385, 1, 0
    %v1478 = vsel %vm1386, 1, 0
    %v1479 = vsel %vm1387, 1, 0
    %v1480 = vsel %vm1388, 1, 0
    %v1481 = vsel %vm1389, 1, 0
    %v1482 = vsel %vm1390, 1, 0
    %v1483 = vsel %vm1391, 1, 0
    %v1484 = vsel %vm1392, 1, 0
    %v1485 = vsel %vm1393, 1, 0
    %v1486 = vsel %vm1394, 1, 0
    %v1487 = vsel %vm1395, 1, 0
    %v1488 = vsel %vm1396, 1, 0
    %v1489 = vsel %vm1397, 1, 0
    %v1490 = vsel %vm1398, 1, 0
    %v1491 = vsel %vm1399, 1, 0
    %v1492 = vsel %vm1400, 1, 0
    %v1493 = vsel %vm1401, 1, 0
    %v1494 = vsel %vm1402, 1, 0
    %v1495 = vsel %vm1403, 1, 0
    %v1496 = vsel %vm1404, 1, 0
    %v1497 = vsel %vm1405, 1, 0
    %v1498 = vsel %vm1406, 1, 0
    %v1499 = vsel %vm1407, 1, 0
    %v1500 = vsel %vm1408, 1, 0
    %v1501 = vsel %vm1409, 1, 0
    %v1502 = vsel %vm1410, 1, 0
    %v1503 = vsel %vm1411, 1, 0
    %v1504 = vsel %vm1412, 1, 0
    %v1505 = vsel %vm1413, 1, 0
    %v1506 = vsel %vm1414, 1, 0
    %v1507 = vsel %vm1415, 1, 0
    %v1508 = vsel %vm1416, 1, 0
    %v1509 = vsel %vm1417, 1, 0
    %v1510 = vsel %vm1418, 1, 0
    %v1511 = vsel %vm1419, 1, 0
    %v1512 = vsel %vm1420, 1, 0
    %v1513 = vsel %vm1421, 1, 0
    %v1514 = vsel %vm1422, 1, 0
    %v1515 = vsel %vm1423, 1, 0
    %v1516 = vsel %vm1424, 1, 0
    %v1517 = vsel %vm1425, 1, 0
    %v1518 = vsel %vm1426, 1, 0
    %v1519 = vsel %vm1427, 1, 0
    %v1520 = vsel %vm1428, 1, 0
    %v1521 = vcvt.s32.f32 %v1429
    %v1522 = vcvt.s32.f32 %v1430
    %v1523 = vcvt.s32.f32 %v1431
    %v1524 = vcvt.s32.f32 %v1432
    %v1525 = vcvt.s32.f32 %v1433
    %v1526 = vcvt.s32.f32 %v1434
    %v1527 = vcvt.s32.f32 %v1435
    %v1528 = vcvt.s32.f32 %v1436
    %v1529 = vcvt.s32.f32 %v1437
    %v1530 = vcvt.s32.f32 %v1438
    %v1531 = vcvt.s32.f32 %v1439
    %v1532 = vcvt.s32.f32 %v1440
    %v1533 = vcvt.s32.f32 %v1441
    %v1534 = vcvt.s32.f32 %v1442
    %v1535 = vcvt.s32.f32 %v1443
    %v1536 = vcvt.s32.f32 %v1444
    %v1537 = vcvt.s32.f32 %v1445
    %v1538 = vcvt.s32.f32 %v1446
    %v1539 = vcvt.s32.f32 %v1447
    %v1540 = vcvt.s32.f32 %v1448
    %v1541 = vcvt.s32.f32 %v1449
    %v1542 = vcvt.s32.f32 %v1450
    %v1543 = vcvt.s32.f32 %v1451
    %v1544 = vcvt.s32.f32 %v1452
    %v1545 = vcvt.s32.f32 %v1453
    %v1546 = vcvt.s32.f32 %v1454
    %v1547 = vcvt.s32.f32 %v1455
    %v1548 = vcvt.s32.f32 %v1456
    %v1549 = vcvt.s32.f32 %v1457
    %v1550 = vcvt.s32.f32 %v1458
    %v1551 = vcvt.s32.f32 %v1459
    %v1552 = vcvt.s32.f32 %v1460
    %v1553 = vcvt.s32.f32 %v1461
    %v1554 = vcvt.s32.f32 %v1462
    %v1555 = vcvt.s32.f32 %v1463
    %v1556 = vcvt.s32.f32 %v1464
    %v1557 = vcvt.s32.f32 %v1465
    %v1558 = vcvt.s32.f32 %v1466
    %v1559 = vcvt.s32.f32 %v1467
    %v1560 = vcvt.s32.f32 %v1468
    %v1561 = vcvt.s32.f32 %v1469
    %v1562 = vcvt.s32.f32 %v1470
    %v1563 = vcvt.s32.f32 %v1471
    %v1564 = vcvt.s32.f32 %v1472
    %v1565 = vcvt.s32.f32 %v1473
    %v1566 = vcvt.s32.f32 %v1474
    %v1567 = vcvt.s32.f32 %v1475
    %v1568 = vcvt.s32.f32 %v1476
    %v1569 = vcvt.s32.f32 %v1477
    %v1570 = vcvt.s32.f32 %v1478
    %v1571 = vcvt.s32.f32 %v1479
    %v1572 = vcvt.s32.f32 %v1480
    %v1573 = vcvt.s32.f32 %v1481
    %v1574 = vcvt.s32.f32 %v1482
    %v1575 = vcvt.s32.f32 %v1483
    %v1576 = vcvt.s32.f32 %v1484
    %v1577 = vcvt.s32.f32 %v1485
    %v1578 = vcvt.s32.f32 %v1486
    %v1579 = vcvt.s32.f32 %v1487
    %v1580 = vcvt.s32.f32 %v1488
    %v1581 = vcvt.s32.f32 %v1489
    %v1582 = vcvt.s32.f32 %v1490
    %v1583 = vcvt.s32.f32 %v1491
    %v1584 = vcvt.s32.f32 %v1492
    %v1585 = vcvt.s32.f32 %v1493
    %v1586 = vcvt.s32.f32 %v1494
    %v1587 = vcvt.s32.f32 %v1495
    %v1588 = vcvt.s32.f32 %v1496
    %v1589 = vcvt.s32.f32 %v1497
    %v1590 = vcvt.s32.f32 %v1498
    %v1591 = vcvt.s32.f32 %v1499
    %v1592 = vcvt.s32.f32 %v1500
    %v1593 = vcvt.s32.f32 %v1501
    %v1594 = vcvt.s32.f32 %v1502
    %v1595 = vcvt.s32.f32 %v1503
    %v1596 = vcvt.s32.f32 %v1504
    %v1597 = vcvt.s32.f32 %v1505
    %v1598 = vcvt.s32.f32 %v1506
    %v1599 = vcvt.s32.f32 %v1507
    %v1600 = vcvt.s32.f32 %v1508
    %v1601 = vcvt.s32.f32 %v1509
    %v1602 = vcvt.s32.f32 %v1510
    %v1603 = vcvt.s32.f32 %v1511
    %v1604 = vcvt.s32.f32 %v1512
    %v1605 = vcvt.s32.f32 %v1513
    %v1606 = vcvt.s32.f32 %v1514
    %v1607 = vcvt.s32.f32 %v1515
    %v1608 = vcvt.s32.f32 %v1516
    %v1609 = vcvt.s32.f32 %v1517
    %v1610 = vcvt.s32.f32 %v1518
    %v1611 = vcvt.s32.f32 %v1519
    %v1612 = vcvt.s32.f32 %v1520
    %vm1613 = vcmask 400384
    %v1615 = vsel %vm1613, %v772, 0
    %v1618 = vsel %vm1613, %v774, 0
    %v1621 = vsel %vm1613, %v776, 0
    %v1624 = vsel %vm1613, %v778, 0
    %v1627 = vsel %vm1613, %v780, 0
    %v1630 = vsel %vm1613, %v782, 0
    %v1633 = vsel %vm1613, %v784, 0
    %v1636 = vsel %vm1613, %v786, 0
    %v1639 = vsel %vm1613, %v788, 0
    %v1642 = vsel %vm1613, %v790, 0
    %v1645 = vsel %vm1613, %v792, 0
    %v1648 = vsel %vm1613, %v794, 0
    %v1651 = vsel %vm1613, %v796, 0
    %v1654 = vsel %vm1613, %v798, 0
    %v1657 = vsel %vm1613, %v800, 0
    %v1660 = vsel %vm1613, %v802, 0
    %v1663 = vsel %vm1613, %v804, 0
    %v1666 = vsel %vm1613, %v806, 0
    %v1669 = vsel %vm1613, %v808, 0
    %v1672 = vsel %vm1613, %v810, 0
    %v1675 = vsel %vm1613, %v812, 0
    %v1678 = vsel %vm1613, %v814, 0
    %v1681 = vsel %vm1613, %v816, 0
    %v1684 = vsel %vm1613, %v818, 0
    %v1687 = vsel %vm1613, %v820, 0
    %v1690 = vsel %vm1613, %v822, 0
    %v1693 = vsel %vm1613, %v824, 0
    %v1696 = vsel %vm1613, %v826, 0
    %v1699 = vsel %vm1613, %v828, 0
    %v1702 = vsel %vm1613, %v830, 0
    %v1705 = vsel %vm1613, %v832, 0
    %v1708 = vsel %vm1613, %v834, 0
    %v1711 = vsel %vm1613, %v836, 0
    %v1714 = vsel %vm1613, %v838, 0
    %v1717 = vsel %vm1613, %v840, 0
    %v1720 = vsel %vm1613, %v842, 0
    %v1723 = vsel %vm1613, %v844, 0
    %v1726 = vsel %vm1613, %v846, 0
    %v1729 = vsel %vm1613, %v848, 0
    %v1732 = vsel %vm1613, %v850, 0
    %v1735 = vsel %vm1613, %v852, 0
    %v1738 = vsel %vm1613, %v854, 0
    %v1741 = vsel %vm1613, %v856, 0
    %v1744 = vsel %vm1613, %v858, 0
    %v1747 = vsel %vm1613, %v860, 0
    %v1750 = vsel %vm1613, %v862, 0
    %v1753 = vsel %vm1613, %v864, 0
    %v1756 = vsel %vm1613, %v866, 0
    %v1759 = vsel %vm1613, %v868, 0
    %v1762 = vsel %vm1613, %v870, 0
    %vm1764 = vcmask 1040384
    %v1766 = vsel %vm1764, %v289, 0
    %v1769 = vsel %vm1764, %v291, 0
    %1771 = vmatprep.subr.mxu0 %v159
    %1772 = vmatpush1.msra.mxu0 %v157
    %1773 = vmatprep.subr.mxu0 %v165
    %1774 = vmatpush1.msra.mxu0 %v163
    %1775 = vmatprep.subr.mxu0 %v171
    %1776 = vmatpush1.msra.mxu0 %v169
    %1777 = vmatprep.subr.mxu0 %v177
    %1778 = vmatpush1.msra.mxu0 %v175
    %1779 = vmatprep.subr.mxu0 %v183
    %1780 = vmatpush1.msra.mxu0 %v181
    %1781 = vmatprep.subr.mxu0 %v189
    %1782 = vmatpush1.msra.mxu0 %v187
    %1783 = vmatprep.subr.mxu0 %v195
    %1784 = vmatpush1.msra.mxu0 %v193
    %1785 = vmatprep.subr.mxu0 %v201
    %1786 = vmatpush1.msra.mxu0 %v199
    %1787 = vmatprep.subr.mxu0 %v207
    %1788 = vmatpush1.msra.mxu0 %v205
    %1789 = vmatprep.subr.mxu0 %v213
    %1790 = vmatpush1.msra.mxu0 %v211
    %1791 = vmatprep.subr.mxu0 %v219
    %1792 = vmatpush1.msra.mxu0 %v217
    %1793 = vmatprep.subr.mxu0 %v225
    %1794 = vmatpush1.msra.mxu0 %v223
    %1795 = vmatprep.subr.mxu0 %v231
    %1796 = vmatpush1.msra.mxu0 %v229
    %1797 = vmatprep.subr.mxu0 %v237
    %1798 = vmatpush1.msra.mxu0 %v235
    %1799 = vmatprep.subr.mxu0 %v243
    %1800 = vmatpush1.msra.mxu0 %v241
    %1801 = vmatprep.subr.mxu0 %v249
    %1802 = vmatpush1.msra.mxu0 %v247
    %1803 = vmatprep.subr.mxu0 %v255
    %1804 = vmatpush1.msra.mxu0 %v253
    %1805 = vmatprep.subr.mxu0 %v261
    %1806 = vmatpush1.msra.mxu0 %v259
    %1807 = vmatprep.subr.mxu0 %v267
    %1808 = vmatpush1.msra.mxu0 %v265
    %1809 = vmatprep.subr.mxu0 %v273
    %1810 = vmatpush1.msra.mxu0 %v271
    %1811 = vmatprep.subr.mxu0 %v279
    %1812 = vmatpush1.msra.mxu0 %v277
    %1813 = vmatprep.subr.mxu0 %v285
    %1814 = vmatpush1.msra.mxu0 %v283
    %1815 = vmatprep.subr.mxu0 %v1769
    %1816 = vmatpush1.msra.mxu0 %v1766
    %1817 = vmatprep.subr.mxu0 0.0
    %1818 = vmatpush1.msra.mxu0 0.0
    %1819 = vmatprep.subr.mxu0 0.0
    %1820 = vmatpush1.msra.mxu0 0.0
    %1821 = vmatprep.subr.mxu0 0.0
    %1822 = vmatpush1.msra.mxu0 0.0
    %1823 = vmatprep.subr.mxu0 0.0
    %1824 = vmatpush1.msra.mxu0 0.0
    %1825 = vmatprep.subr.mxu0 0.0
    %1826 = vmatpush1.msra.mxu0 0.0
    %1827 = vmatprep.subr.mxu0 0.0
    %1828 = vmatpush1.msra.mxu0 0.0
    %1829 = vmatprep.subr.mxu0 0.0
    %1830 = vmatpush1.msra.mxu0 0.0
    %1831 = vmatprep.subr.mxu0 0.0
    %1832 = vmatpush1.msra.mxu0 0.0
    %1833 = vmatprep.subr.mxu0 0.0
    %1834 = vmatpush1.msra.mxu0 0.0
    %1835 = vmatprep.mubr.f32.mxu0 %v1615
    %1836 = vmatmul.mubr.f32.gmra.mrb[0].mxu0 %v771
    %v1837 = vpop.f32.mrb[0].mxu0
    %v1838 = vadd.f32 0.0, %v1837
    %v1839 = vpop.f32.mrb[0].mxu0
    %v1840 = vadd.f32 0.0, %v1839
    %1841 = vmatprep.mubr.f32.mxu0 %v1618
    %1842 = vmatmul.mubr.f32.gmra.mrb[0].mxu0 %v773
    %v1843 = vpop.f32.mrb[0].mxu0
    %v1844 = vadd.f32 0.0, %v1843
    %v1845 = vpop.f32.mrb[0].mxu0
    %v1846 = vadd.f32 0.0, %v1845
    %1847 = vmatprep.mubr.f32.mxu0 %v1621
    %1848 = vmatmul.mubr.f32.gmra.mrb[0].mxu0 %v775
    %v1849 = vpop.f32.mrb[0].mxu0
    %v1850 = vadd.f32 0.0, %v1849
    %v1851 = vpop.f32.mrb[0].mxu0
    %v1852 = vadd.f32 0.0, %v1851
    %1853 = vmatprep.mubr.f32.mxu0 %v1624
    %1854 = vmatmul.mubr.f32.gmra.mrb[0].mxu0 %v777
    %v1855 = vpop.f32.mrb[0].mxu0
    %v1856 = vadd.f32 0.0, %v1855
    %v1857 = vpop.f32.mrb[0].mxu0
    %v1858 = vadd.f32 0.0, %v1857
    %1859 = vmatprep.mubr.f32.mxu0 %v1627
    %1860 = vmatmul.mubr.f32.gmra.mrb[0].mxu0 %v779
    %v1861 = vpop.f32.mrb[0].mxu0
    %v1862 = vadd.f32 0.0, %v1861
    %v1863 = vpop.f32.mrb[0].mxu0
    %v1864 = vadd.f32 0.0, %v1863
    %1865 = vmatprep.mubr.f32.mxu0 %v1630
    %1866 = vmatmul.mubr.f32.gmra.mrb[0].mxu0 %v781
    %v1867 = vpop.f32.mrb[0].mxu0
    %v1868 = vadd.f32 0.0, %v1867
    %v1869 = vpop.f32.mrb[0].mxu0
    %v1870 = vadd.f32 0.0, %v1869
    %1871 = vmatprep.mubr.f32.mxu0 %v1633
    %1872 = vmatmul.mubr.f32.gmra.mrb[0].mxu0 %v783
    %v1873 = vpop.f32.mrb[0].mxu0
    %v1874 = vadd.f32 0.0, %v1873
    %v1875 = vpop.f32.mrb[0].mxu0
    %v1876 = vadd.f32 0.0, %v1875
    %1877 = vmatprep.mubr.f32.mxu0 %v1636
    %1878 = vmatmul.mubr.f32.gmra.mrb[0].mxu0 %v785
    %v1879 = vpop.f32.mrb[0].mxu0
    %v1880 = vadd.f32 0.0, %v1879
    %v1881 = vpop.f32.mrb[0].mxu0
    %v1882 = vadd.f32 0.0, %v1881
    %1883 = vmatprep.mubr.f32.mxu0 %v1639
    %1884 = vmatmul.mubr.f32.gmra.mrb[0].mxu0 %v787
    %v1885 = vpop.f32.mrb[0].mxu0
    %v1886 = vadd.f32 0.0, %v1885
    %v1887 = vpop.f32.mrb[0].mxu0
    %v1888 = vadd.f32 0.0, %v1887
    %1889 = vmatprep.mubr.f32.mxu0 %v1642
    %1890 = vmatmul.mubr.f32.gmra.mrb[0].mxu0 %v789
    %v1891 = vpop.f32.mrb[0].mxu0
    %v1892 = vadd.f32 0.0, %v1891
    %v1893 = vpop.f32.mrb[0].mxu0
    %v1894 = vadd.f32 0.0, %v1893
    %1895 = vmatprep.mubr.f32.mxu0 %v1645
    %1896 = vmatmul.mubr.f32.gmra.mrb[0].mxu0 %v791
    %v1897 = vpop.f32.mrb[0].mxu0
    %v1898 = vadd.f32 0.0, %v1897
    %v1899 = vpop.f32.mrb[0].mxu0
    %v1900 = vadd.f32 0.0, %v1899
    %1901 = vmatprep.mubr.f32.mxu0 %v1648
    %1902 = vmatmul.mubr.f32.gmra.mrb[0].mxu0 %v793
    %v1903 = vpop.f32.mrb[0].mxu0
    %v1904 = vadd.f32 0.0, %v1903
    %v1905 = vpop.f32.mrb[0].mxu0
    %v1906 = vadd.f32 0.0, %v1905
    %1907 = vmatprep.mubr.f32.mxu0 %v1651
    %1908 = vmatmul.mubr.f32.gmra.mrb[0].mxu0 %v795
    %v1909 = vpop.f32.mrb[0].mxu0
    %v1910 = vadd.f32 0.0, %v1909
    %v1911 = vpop.f32.mrb[0].mxu0
    %v1912 = vadd.f32 0.0, %v1911
    %1913 = vmatprep.mubr.f32.mxu0 %v1654
    %1914 = vmatmul.mubr.f32.gmra.mrb[0].mxu0 %v797
    %v1915 = vpop.f32.mrb[0].mxu0
    %v1916 = vadd.f32 0.0, %v1915
    %v1917 = vpop.f32.mrb[0].mxu0
    %v1918 = vadd.f32 0.0, %v1917
    %1919 = vmatprep.mubr.f32.mxu0 %v1657
    %1920 = vmatmul.mubr.f32.gmra.mrb[0].mxu0 %v799
    %v1921 = vpop.f32.mrb[0].mxu0
    %v1922 = vadd.f32 0.0, %v1921
    %v1923 = vpop.f32.mrb[0].mxu0
    %v1924 = vadd.f32 0.0, %v1923
    %1925 = vmatprep.mubr.f32.mxu0 %v1660
    %1926 = vmatmul.mubr.f32.gmra.mrb[0].mxu0 %v801
    %v1927 = vpop.f32.mrb[0].mxu0
    %v1928 = vadd.f32 0.0, %v1927
    %v1929 = vpop.f32.mrb[0].mxu0
    %v1930 = vadd.f32 0.0, %v1929
    %1931 = vmatprep.mubr.f32.mxu0 %v1663
    %1932 = vmatmul.mubr.f32.gmra.mrb[0].mxu0 %v803
    %v1933 = vpop.f32.mrb[0].mxu0
    %v1934 = vadd.f32 0.0, %v1933
    %v1935 = vpop.f32.mrb[0].mxu0
    %v1936 = vadd.f32 0.0, %v1935
    %1937 = vmatprep.mubr.f32.mxu0 %v1666
    %1938 = vmatmul.mubr.f32.gmra.mrb[0].mxu0 %v805
    %v1939 = vpop.f32.mrb[0].mxu0
    %v1940 = vadd.f32 0.0, %v1939
    %v1941 = vpop.f32.mrb[0].mxu0
    %v1942 = vadd.f32 0.0, %v1941
    %1943 = vmatprep.mubr.f32.mxu0 %v1669
    %1944 = vmatmul.mubr.f32.gmra.mrb[0].mxu0 %v807
    %v1945 = vpop.f32.mrb[0].mxu0
    %v1946 = vadd.f32 0.0, %v1945
    %v1947 = vpop.f32.mrb[0].mxu0
    %v1948 = vadd.f32 0.0, %v1947
    %1949 = vmatprep.mubr.f32.mxu0 %v1672
    %1950 = vmatmul.mubr.f32.gmra.mrb[0].mxu0 %v809
    %v1951 = vpop.f32.mrb[0].mxu0
    %v1952 = vadd.f32 0.0, %v1951
    %v1953 = vpop.f32.mrb[0].mxu0
    %v1954 = vadd.f32 0.0, %v1953
    %1955 = vmatprep.mubr.f32.mxu0 %v1675
    %1956 = vmatmul.mubr.f32.gmra.mrb[0].mxu0 %v811
    %v1957 = vpop.f32.mrb[0].mxu0
    %v1958 = vadd.f32 0.0, %v1957
    %v1959 = vpop.f32.mrb[0].mxu0
    %v1960 = vadd.f32 0.0, %v1959
    %1961 = vmatprep.mubr.f32.mxu0 %v1678
    %1962 = vmatmul.mubr.f32.gmra.mrb[0].mxu0 %v813
    %v1963 = vpop.f32.mrb[0].mxu0
    %v1964 = vadd.f32 0.0, %v1963
    %v1965 = vpop.f32.mrb[0].mxu0
    %v1966 = vadd.f32 0.0, %v1965
    %1967 = vmatprep.mubr.f32.mxu0 %v1681
    %1968 = vmatmul.mubr.f32.gmra.mrb[0].mxu0 %v815
    %v1969 = vpop.f32.mrb[0].mxu0
    %v1970 = vadd.f32 0.0, %v1969
    %v1971 = vpop.f32.mrb[0].mxu0
    %v1972 = vadd.f32 0.0, %v1971
    %1973 = vmatprep.mubr.f32.mxu0 %v1684
    %1974 = vmatmul.mubr.f32.gmra.mrb[0].mxu0 %v817
    %v1975 = vpop.f32.mrb[0].mxu0
    %v1976 = vadd.f32 0.0, %v1975
    %v1977 = vpop.f32.mrb[0].mxu0
    %v1978 = vadd.f32 0.0, %v1977
    %1979 = vmatprep.mubr.f32.mxu0 %v1687
    %1980 = vmatmul.mubr.f32.gmra.mrb[0].mxu0 %v819
    %v1981 = vpop.f32.mrb[0].mxu0
    %v1982 = vadd.f32 0.0, %v1981
    %v1983 = vpop.f32.mrb[0].mxu0
    %v1984 = vadd.f32 0.0, %v1983
    %1985 = vmatprep.mubr.f32.mxu0 %v1690
    %1986 = vmatmul.mubr.f32.gmra.mrb[0].mxu0 %v821
    %v1987 = vpop.f32.mrb[0].mxu0
    %v1988 = vadd.f32 0.0, %v1987
    %v1989 = vpop.f32.mrb[0].mxu0
    %v1990 = vadd.f32 0.0, %v1989
    %1991 = vmatprep.mubr.f32.mxu0 %v1693
    %1992 = vmatmul.mubr.f32.gmra.mrb[0].mxu0 %v823
    %v1993 = vpop.f32.mrb[0].mxu0
    %v1994 = vadd.f32 0.0, %v1993
    %v1995 = vpop.f32.mrb[0].mxu0
    %v1996 = vadd.f32 0.0, %v1995
    %1997 = vmatprep.mubr.f32.mxu0 %v1696
    %1998 = vmatmul.mubr.f32.gmra.mrb[0].mxu0 %v825
    %v1999 = vpop.f32.mrb[0].mxu0
    %v2000 = vadd.f32 0.0, %v1999
    %v2001 = vpop.f32.mrb[0].mxu0
    %v2002 = vadd.f32 0.0, %v2001
    %2003 = vmatprep.mubr.f32.mxu0 %v1699
    %2004 = vmatmul.mubr.f32.gmra.mrb[0].mxu0 %v827
    %v2005 = vpop.f32.mrb[0].mxu0
    %v2006 = vadd.f32 0.0, %v2005
    %v2007 = vpop.f32.mrb[0].mxu0
    %v2008 = vadd.f32 0.0, %v2007
    %2009 = vmatprep.mubr.f32.mxu0 %v1702
    %2010 = vmatmul.mubr.f32.gmra.mrb[0].mxu0 %v829
    %v2011 = vpop.f32.mrb[0].mxu0
    %v2012 = vadd.f32 0.0, %v2011
    %v2013 = vpop.f32.mrb[0].mxu0
    %v2014 = vadd.f32 0.0, %v2013
    %2015 = vmatprep.mubr.f32.mxu0 %v1705
    %2016 = vmatmul.mubr.f32.gmra.mrb[0].mxu0 %v831
    %v2017 = vpop.f32.mrb[0].mxu0
    %v2018 = vadd.f32 0.0, %v2017
    %v2019 = vpop.f32.mrb[0].mxu0
    %v2020 = vadd.f32 0.0, %v2019
    %2021 = vmatprep.mubr.f32.mxu0 %v1708
    %2022 = vmatmul.mubr.f32.gmra.mrb[0].mxu0 %v833
    %v2023 = vpop.f32.mrb[0].mxu0
    %v2024 = vadd.f32 0.0, %v2023
    %v2025 = vpop.f32.mrb[0].mxu0
    %v2026 = vadd.f32 0.0, %v2025
    %2027 = vmatprep.mubr.f32.mxu0 %v1711
    %2028 = vmatmul.mubr.f32.gmra.mrb[0].mxu0 %v835
    %v2029 = vpop.f32.mrb[0].mxu0
    %v2030 = vadd.f32 0.0, %v2029
    %v2031 = vpop.f32.mrb[0].mxu0
    %v2032 = vadd.f32 0.0, %v2031
    %2033 = vmatprep.mubr.f32.mxu0 %v1714
    %2034 = vmatmul.mubr.f32.gmra.mrb[0].mxu0 %v837
    %v2035 = vpop.f32.mrb[0].mxu0
    %v2036 = vadd.f32 0.0, %v2035
    %v2037 = vpop.f32.mrb[0].mxu0
    %v2038 = vadd.f32 0.0, %v2037
    %2039 = vmatprep.mubr.f32.mxu0 %v1717
    %2040 = vmatmul.mubr.f32.gmra.mrb[0].mxu0 %v839
    %v2041 = vpop.f32.mrb[0].mxu0
    %v2042 = vadd.f32 0.0, %v2041
    %v2043 = vpop.f32.mrb[0].mxu0
    %v2044 = vadd.f32 0.0, %v2043
    %2045 = vmatprep.mubr.f32.mxu0 %v1720
    %2046 = vmatmul.mubr.f32.gmra.mrb[0].mxu0 %v841
    %v2047 = vpop.f32.mrb[0].mxu0
    %v2048 = vadd.f32 0.0, %v2047
    %v2049 = vpop.f32.mrb[0].mxu0
    %v2050 = vadd.f32 0.0, %v2049
    %2051 = vmatprep.mubr.f32.mxu0 %v1723
    %2052 = vmatmul.mubr.f32.gmra.mrb[0].mxu0 %v843
    %v2053 = vpop.f32.mrb[0].mxu0
    %v2054 = vadd.f32 0.0, %v2053
    %v2055 = vpop.f32.mrb[0].mxu0
    %v2056 = vadd.f32 0.0, %v2055
    %2057 = vmatprep.mubr.f32.mxu0 %v1726
    %2058 = vmatmul.mubr.f32.gmra.mrb[0].mxu0 %v845
    %v2059 = vpop.f32.mrb[0].mxu0
    %v2060 = vadd.f32 0.0, %v2059
    %v2061 = vpop.f32.mrb[0].mxu0
    %v2062 = vadd.f32 0.0, %v2061
    %2063 = vmatprep.mubr.f32.mxu0 %v1729
    %2064 = vmatmul.mubr.f32.gmra.mrb[0].mxu0 %v847
    %v2065 = vpop.f32.mrb[0].mxu0
    %v2066 = vadd.f32 0.0, %v2065
    %v2067 = vpop.f32.mrb[0].mxu0
    %v2068 = vadd.f32 0.0, %v2067
    %2069 = vmatprep.mubr.f32.mxu0 %v1732
    %2070 = vmatmul.mubr.f32.gmra.mrb[0].mxu0 %v849
    %v2071 = vpop.f32.mrb[0].mxu0
    %v2072 = vadd.f32 0.0, %v2071
    %v2073 = vpop.f32.mrb[0].mxu0
    %v2074 = vadd.f32 0.0, %v2073
    %2075 = vmatprep.mubr.f32.mxu0 %v1735
    %2076 = vmatmul.mubr.f32.gmra.mrb[0].mxu0 %v851
    %v2077 = vpop.f32.mrb[0].mxu0
    %v2078 = vadd.f32 0.0, %v2077
    %v2079 = vpop.f32.mrb[0].mxu0
    %v2080 = vadd.f32 0.0, %v2079
    %2081 = vmatprep.mubr.f32.mxu0 %v1738
    %2082 = vmatmul.mubr.f32.gmra.mrb[0].mxu0 %v853
    %v2083 = vpop.f32.mrb[0].mxu0
    %v2084 = vadd.f32 0.0, %v2083
    %v2085 = vpop.f32.mrb[0].mxu0
    %v2086 = vadd.f32 0.0, %v2085
    %2087 = vmatprep.mubr.f32.mxu0 %v1741
    %2088 = vmatmul.mubr.f32.gmra.mrb[0].mxu0 %v855
    %v2089 = vpop.f32.mrb[0].mxu0
    %v2090 = vadd.f32 0.0, %v2089
    %v2091 = vpop.f32.mrb[0].mxu0
    %v2092 = vadd.f32 0.0, %v2091
    %2093 = vmatprep.mubr.f32.mxu0 %v1744
    %2094 = vmatmul.mubr.f32.gmra.mrb[0].mxu0 %v857
    %v2095 = vpop.f32.mrb[0].mxu0
    %v2096 = vadd.f32 0.0, %v2095
    %v2097 = vpop.f32.mrb[0].mxu0
    %v2098 = vadd.f32 0.0, %v2097
    %2099 = vmatprep.mubr.f32.mxu0 %v1747
    %2100 = vmatmul.mubr.f32.gmra.mrb[0].mxu0 %v859
    %v2101 = vpop.f32.mrb[0].mxu0
    %v2102 = vadd.f32 0.0, %v2101
    %v2103 = vpop.f32.mrb[0].mxu0
    %v2104 = vadd.f32 0.0, %v2103
    %2105 = vmatprep.mubr.f32.mxu0 %v1750
    %2106 = vmatmul.mubr.f32.gmra.mrb[0].mxu0 %v861
    %v2107 = vpop.f32.mrb[0].mxu0
    %v2108 = vadd.f32 0.0, %v2107
    %v2109 = vpop.f32.mrb[0].mxu0
    %v2110 = vadd.f32 0.0, %v2109
    %2111 = vmatprep.mubr.f32.mxu0 %v1753
    %2112 = vmatmul.mubr.f32.gmra.mrb[0].mxu0 %v863
    %v2113 = vpop.f32.mrb[0].mxu0
    %v2114 = vadd.f32 0.0, %v2113
    %v2115 = vpop.f32.mrb[0].mxu0
    %v2116 = vadd.f32 0.0, %v2115
    %2117 = vmatprep.mubr.f32.mxu0 %v1756
    %2118 = vmatmul.mubr.f32.gmra.mrb[0].mxu0 %v865
    %v2119 = vpop.f32.mrb[0].mxu0
    %v2120 = vadd.f32 0.0, %v2119
    %v2121 = vpop.f32.mrb[0].mxu0
    %v2122 = vadd.f32 0.0, %v2121
    %2123 = vmatprep.mubr.f32.mxu0 %v1759
    %2124 = vmatmul.mubr.f32.gmra.mrb[0].mxu0 %v867
    %v2125 = vpop.f32.mrb[0].mxu0
    %v2126 = vadd.f32 0.0, %v2125
    %v2127 = vpop.f32.mrb[0].mxu0
    %v2128 = vadd.f32 0.0, %v2127
    %2129 = vmatprep.mubr.f32.mxu0 %v1762
    %2130 = vmatmul.mubr.f32.gmra.mrb[0].mxu0 %v869
    %v2131 = vpop.f32.mrb[0].mxu0
    %v2132 = vadd.f32 0.0, %v2131
    %v2133 = vpop.f32.mrb[0].mxu0
    %v2134 = vadd.f32 0.0, %v2133
    %2135 = vdwg.mxu0
    %v2136 = vld [vmem:[%s3] sm:$0xff]
    %v2137 = vld [vmem:[%s3 + $0x8] sm:$0xff]
    %v2138 = vld [vmem:[%s3 + $0x10] sm:$0xff]
    %v2139 = vld [vmem:[%s3 + $0x18] sm:$0xff]
    %v2140 = vld [vmem:[%s3 + $0x20] sm:$0xff]
    %v2141 = vld [vmem:[%s3 + $0x28] sm:$0xff]
    %v2142 = vld [vmem:[%s3 + $0x30] sm:$0xff]
    %v2143 = vld [vmem:[%s3 + $0x38] sm:$0xff]
    %v2144 = vld [vmem:[%s3 + $0x40] sm:$0xff]
    %v2145 = vld [vmem:[%s3 + $0x48] sm:$0xff]
    %v2146 = vld [vmem:[%s3 + $0x50] sm:$0xff]
    %v2147 = vld [vmem:[%s3 + $0x58] sm:$0xff]
    %v2148 = vld [vmem:[%s3 + $0x60] sm:$0xff]
    %v2149 = vld [vmem:[%s3 + $0x68] sm:$0xff]
    %v2150 = vld [vmem:[%s3 + $0x70] sm:$0xff]
    %v2151 = vld [vmem:[%s3 + $0x78] sm:$0xff]
    %v2152 = vld [vmem:[%s3 + $0x80] sm:$0xff]
    %v2153 = vld [vmem:[%s3 + $0x88] sm:$0xff]
    %v2154 = vld [vmem:[%s3 + $0x90] sm:$0xff]
    %v2155 = vld [vmem:[%s3 + $0x98] sm:$0xff]
    %v2156 = vld [vmem:[%s3 + $0xa0] sm:$0xff]
    %v2157 = vld [vmem:[%s3 + $0xa8] sm:$0xff]
    %v2158 = vld [vmem:[%s3 + $0xb0] sm:$0xff]
    %v2159 = vld [vmem:[%s3 + $0xb8] sm:$0xff]
    %v2160 = vld [vmem:[%s3 + $0xc0] sm:$0xff]
    %v2161 = vld [vmem:[%s3 + $0xc8] sm:$0xff]
    %v2162 = vld [vmem:[%s3 + $0xd0] sm:$0xff]
    %v2163 = vld [vmem:[%s3 + $0xd8] sm:$0xff]
    %v2164 = vld [vmem:[%s3 + $0xe0] sm:$0xff]
    %v2165 = vld [vmem:[%s3 + $0xe8] sm:$0xff]
    %v2166 = vld [vmem:[%s3 + $0xf0] sm:$0xff]
    %v2167 = vld [vmem:[%s3 + $0xf8] sm:$0xff]
    %v2168 = vld [vmem:[%s3 + $0x100] sm:$0xff]
    %v2169 = vld [vmem:[%s3 + $0x108] sm:$0xff]
    %v2170 = vld [vmem:[%s3 + $0x110] sm:$0xff]
    %v2171 = vld [vmem:[%s3 + $0x118] sm:$0xff]
    %v2172 = vld [vmem:[%s3 + $0x120] sm:$0xff]
    %v2173 = vld [vmem:[%s3 + $0x128] sm:$0xff]
    %v2174 = vld [vmem:[%s3 + $0x130] sm:$0xff]
    %v2175 = vld [vmem:[%s3 + $0x138] sm:$0xff]
    %v2176 = vld [vmem:[%s3 + $0x140] sm:$0xff]
    %v2177 = vld [vmem:[%s3 + $0x148] sm:$0xff]
    %v2178 = vld [vmem:[%s3 + $0x150] sm:$0xff]
    %v2179 = vld [vmem:[%s3 + $0x158] sm:$0xff]
    %v2180 = vld [vmem:[%s3 + $0x160] sm:$0xff]
    %v2181 = vld [vmem:[%s3 + $0x168] sm:$0xff]
    %v2182 = vld [vmem:[%s3 + $0x170] sm:$0xff]
    %v2183 = vld [vmem:[%s3 + $0x178] sm:$0xff]
    %v2184 = vld [vmem:[%s3 + $0x180] sm:$0xff]
    %v2185 = vld [vmem:[%s3 + $0x188] sm:$0xff]
    %2236 = vrot.lane.b32.xlu0 %v1840, 127
    %v2237 = vpop.permute.xlu0 %2236
    %2238 = vrot.lane.b32.xlu0 %v1846, 127
    %v2239 = vpop.permute.xlu0 %2238
    %2240 = vrot.lane.b32.xlu0 %v1852, 127
    %v2241 = vpop.permute.xlu0 %2240
    %2242 = vrot.lane.b32.xlu0 %v1858, 127
    %v2243 = vpop.permute.xlu0 %2242
    %2244 = vrot.lane.b32.xlu0 %v1864, 127
    %v2245 = vpop.permute.xlu0 %2244
    %2246 = vrot.lane.b32.xlu0 %v1870, 127
    %v2247 = vpop.permute.xlu0 %2246
    %2248 = vrot.lane.b32.xlu0 %v1876, 127
    %v2249 = vpop.permute.xlu0 %2248
    %2250 = vrot.lane.b32.xlu0 %v1882, 127
    %v2251 = vpop.permute.xlu0 %2250
    %2252 = vrot.lane.b32.xlu0 %v1888, 127
    %v2253 = vpop.permute.xlu0 %2252
    %2254 = vrot.lane.b32.xlu0 %v1894, 127
    %v2255 = vpop.permute.xlu0 %2254
    %2256 = vrot.lane.b32.xlu0 %v1900, 127
    %v2257 = vpop.permute.xlu0 %2256
    %2258 = vrot.lane.b32.xlu0 %v1906, 127
    %v2259 = vpop.permute.xlu0 %2258
    %2260 = vrot.lane.b32.xlu0 %v1912, 127
    %v2261 = vpop.permute.xlu0 %2260
    %2262 = vrot.lane.b32.xlu0 %v1918, 127
    %v2263 = vpop.permute.xlu0 %2262
    %2264 = vrot.lane.b32.xlu0 %v1924, 127
    %v2265 = vpop.permute.xlu0 %2264
    %2266 = vrot.lane.b32.xlu0 %v1930, 127
    %v2267 = vpop.permute.xlu0 %2266
    %2268 = vrot.lane.b32.xlu0 %v1936, 127
    %v2269 = vpop.permute.xlu0 %2268
    %2270 = vrot.lane.b32.xlu0 %v1942, 127
    %v2271 = vpop.permute.xlu0 %2270
    %2272 = vrot.lane.b32.xlu0 %v1948, 127
    %v2273 = vpop.permute.xlu0 %2272
    %2274 = vrot.lane.b32.xlu0 %v1954, 127
    %v2275 = vpop.permute.xlu0 %2274
    %2276 = vrot.lane.b32.xlu0 %v1960, 127
    %v2277 = vpop.permute.xlu0 %2276
    %2278 = vrot.lane.b32.xlu0 %v1966, 127
    %v2279 = vpop.permute.xlu0 %2278
    %2280 = vrot.lane.b32.xlu0 %v1972, 127
    %v2281 = vpop.permute.xlu0 %2280
    %2282 = vrot.lane.b32.xlu0 %v1978, 127
    %v2283 = vpop.permute.xlu0 %2282
    %2284 = vrot.lane.b32.xlu0 %v1984, 127
    %v2285 = vpop.permute.xlu0 %2284
    %2286 = vrot.lane.b32.xlu0 %v1990, 127
    %v2287 = vpop.permute.xlu0 %2286
    %2288 = vrot.lane.b32.xlu0 %v1996, 127
    %v2289 = vpop.permute.xlu0 %2288
    %2290 = vrot.lane.b32.xlu0 %v2002, 127
    %v2291 = vpop.permute.xlu0 %2290
    %2292 = vrot.lane.b32.xlu0 %v2008, 127
    %v2293 = vpop.permute.xlu0 %2292
    %2294 = vrot.lane.b32.xlu0 %v2014, 127
    %v2295 = vpop.permute.xlu0 %2294
    %2296 = vrot.lane.b32.xlu0 %v2020, 127
    %v2297 = vpop.permute.xlu0 %2296
    %2298 = vrot.lane.b32.xlu0 %v2026, 127
    %v2299 = vpop.permute.xlu0 %2298
    %2300 = vrot.lane.b32.xlu0 %v2032, 127
    %v2301 = vpop.permute.xlu0 %2300
    %2302 = vrot.lane.b32.xlu0 %v2038, 127
    %v2303 = vpop.permute.xlu0 %2302
    %2304 = vrot.lane.b32.xlu0 %v2044, 127
    %v2305 = vpop.permute.xlu0 %2304
    %2306 = vrot.lane.b32.xlu0 %v2050, 127
    %v2307 = vpop.permute.xlu0 %2306
    %2308 = vrot.lane.b32.xlu0 %v2056, 127
    %v2309 = vpop.permute.xlu0 %2308
    %2310 = vrot.lane.b32.xlu0 %v2062, 127
    %v2311 = vpop.permute.xlu0 %2310
    %2312 = vrot.lane.b32.xlu0 %v2068, 127
    %v2313 = vpop.permute.xlu0 %2312
    %2314 = vrot.lane.b32.xlu0 %v2074, 127
    %v2315 = vpop.permute.xlu0 %2314
    %2316 = vrot.lane.b32.xlu0 %v2080, 127
    %v2317 = vpop.permute.xlu0 %2316
    %2318 = vrot.lane.b32.xlu0 %v2086, 127
    %v2319 = vpop.permute.xlu0 %2318
    %2320 = vrot.lane.b32.xlu0 %v2092, 127
    %v2321 = vpop.permute.xlu0 %2320
    %2322 = vrot.lane.b32.xlu0 %v2098, 127
    %v2323 = vpop.permute.xlu0 %2322
    %2324 = vrot.lane.b32.xlu0 %v2104, 127
    %v2325 = vpop.permute.xlu0 %2324
    %2326 = vrot.lane.b32.xlu0 %v2110, 127
    %v2327 = vpop.permute.xlu0 %2326
    %2328 = vrot.lane.b32.xlu0 %v2116, 127
    %v2329 = vpop.permute.xlu0 %2328
    %2330 = vrot.lane.b32.xlu0 %v2122, 127
    %v2331 = vpop.permute.xlu0 %2330
    %2332 = vrot.lane.b32.xlu0 %v2128, 127
    %v2333 = vpop.permute.xlu0 %2332
    %2334 = vrot.lane.b32.xlu0 %v2134, 127
    %v2335 = vpop.permute.xlu0 %2334
    %v2387 = vsel %vm1613, %v1222, 0
    %v2390 = vsel %vm1613, %v1224, 0
    %v2393 = vsel %vm1613, %v1226, 0
    %v2396 = vsel %vm1613, %v1228, 0
    %v2399 = vsel %vm1613, %v1230, 0
    %v2402 = vsel %vm1613, %v1232, 0
    %v2405 = vsel %vm1613, %v1234, 0
    %v2408 = vsel %vm1613, %v1236, 0
    %v2411 = vsel %vm1613, %v1238, 0
    %v2414 = vsel %vm1613, %v1240, 0
    %v2417 = vsel %vm1613, %v1242, 0
    %v2420 = vsel %vm1613, %v1244, 0
    %v2423 = vsel %vm1613, %v1246, 0
    %v2426 = vsel %vm1613, %v1248, 0
    %v2429 = vsel %vm1613, %v1250, 0
    %v2432 = vsel %vm1613, %v1252, 0
    %v2435 = vsel %vm1613, %v1254, 0
    %v2438 = vsel %vm1613, %v1256, 0
    %v2441 = vsel %vm1613, %v1258, 0
    %v2444 = vsel %vm1613, %v1260, 0
    %v2447 = vsel %vm1613, %v1262, 0
    %v2450 = vsel %vm1613, %v1264, 0
    %v2453 = vsel %vm1613, %v1266, 0
    %v2456 = vsel %vm1613, %v1268, 0
    %v2459 = vsel %vm1613, %v1270, 0
    %v2462 = vsel %vm1613, %v1272, 0
    %v2465 = vsel %vm1613, %v1274, 0
    %v2468 = vsel %vm1613, %v1276, 0
    %v2471 = vsel %vm1613, %v1278, 0
    %v2474 = vsel %vm1613, %v1280, 0
    %v2477 = vsel %vm1613, %v1282, 0
    %v2480 = vsel %vm1613, %v1284, 0
    %v2483 = vsel %vm1613, %v1286, 0
    %v2486 = vsel %vm1613, %v1288, 0
    %v2489 = vsel %vm1613, %v1290, 0
    %v2492 = vsel %vm1613, %v1292, 0
    %v2495 = vsel %vm1613, %v1294, 0
    %v2498 = vsel %vm1613, %v1296, 0
    %v2501 = vsel %vm1613, %v1298, 0
    %v2504 = vsel %vm1613, %v1300, 0
    %v2507 = vsel %vm1613, %v1302, 0
    %v2510 = vsel %vm1613, %v1304, 0
    %v2513 = vsel %vm1613, %v1306, 0
    %v2516 = vsel %vm1613, %v1308, 0
    %v2519 = vsel %vm1613, %v1310, 0
    %v2522 = vsel %vm1613, %v1312, 0
    %v2525 = vsel %vm1613, %v1314, 0
    %v2528 = vsel %vm1613, %v1316, 0
    %v2531 = vsel %vm1613, %v1318, 0
    %v2534 = vsel %vm1613, %v1320, 0
    %2536 = vmatprep.subr.mxu0 0.0
    %2537 = vmatpush1.msra.mxu0 %v159
    %2538 = vmatprep.subr.mxu0 0.0
    %2539 = vmatpush1.msra.mxu0 %v165
    %2540 = vmatprep.subr.mxu0 0.0
    %2541 = vmatpush1.msra.mxu0 %v171
    %2542 = vmatprep.subr.mxu0 0.0
    %2543 = vmatpush1.msra.mxu0 %v177
    %2544 = vmatprep.subr.mxu0 0.0
    %2545 = vmatpush1.msra.mxu0 %v183
    %2546 = vmatprep.subr.mxu0 0.0
    %2547 = vmatpush1.msra.mxu0 %v189
    %2548 = vmatprep.subr.mxu0 0.0
    %2549 = vmatpush1.msra.mxu0 %v195
    %2550 = vmatprep.subr.mxu0 0.0
    %2551 = vmatpush1.msra.mxu0 %v201
    %2552 = vmatprep.subr.mxu0 0.0
    %2553 = vmatpush1.msra.mxu0 %v207
    %2554 = vmatprep.subr.mxu0 0.0
    %2555 = vmatpush1.msra.mxu0 %v213
    %2556 = vmatprep.subr.mxu0 0.0
    %2557 = vmatpush1.msra.mxu0 %v219
    %2558 = vmatprep.subr.mxu0 0.0
    %2559 = vmatpush1.msra.mxu0 %v225
    %2560 = vmatprep.subr.mxu0 0.0
    %2561 = vmatpush1.msra.mxu0 %v231
    %2562 = vmatprep.subr.mxu0 0.0
    %2563 = vmatpush1.msra.mxu0 %v237
    %2564 = vmatprep.subr.mxu0 0.0
    %2565 = vmatpush1.msra.mxu0 %v243
    %2566 = vmatprep.subr.mxu0 0.0
    %2567 = vmatpush1.msra.mxu0 %v249
    %2568 = vmatprep.subr.mxu0 0.0
    %2569 = vmatpush1.msra.mxu0 %v255
    %2570 = vmatprep.subr.mxu0 0.0
    %2571 = vmatpush1.msra.mxu0 %v261
    %2572 = vmatprep.subr.mxu0 0.0
    %2573 = vmatpush1.msra.mxu0 %v267
    %2574 = vmatprep.subr.mxu0 0.0
    %2575 = vmatpush1.msra.mxu0 %v273
    %2576 = vmatprep.subr.mxu0 0.0
    %2577 = vmatpush1.msra.mxu0 %v279
    %2578 = vmatprep.subr.mxu0 0.0
    %2579 = vmatpush1.msra.mxu0 %v285
    %2580 = vmatprep.subr.mxu0 0.0
    %2581 = vmatpush1.msra.mxu0 %v1769
    %2582 = vmatprep.subr.mxu0 0.0
    %2583 = vmatpush1.msra.mxu0 0.0
    %2584 = vmatprep.subr.mxu0 0.0
    %2585 = vmatpush1.msra.mxu0 0.0
    %2586 = vmatprep.subr.mxu0 0.0
    %2587 = vmatpush1.msra.mxu0 0.0
    %2588 = vmatprep.subr.mxu0 0.0
    %2589 = vmatpush1.msra.mxu0 0.0
    %2590 = vmatprep.subr.mxu0 0.0
    %2591 = vmatpush1.msra.mxu0 0.0
    %2592 = vmatprep.subr.mxu0 0.0
    %2593 = vmatpush1.msra.mxu0 0.0
    %2594 = vmatprep.subr.mxu0 0.0
    %2595 = vmatpush1.msra.mxu0 0.0
    %2596 = vmatprep.subr.mxu0 0.0
    %2597 = vmatpush1.msra.mxu0 0.0
    %2598 = vmatprep.subr.mxu0 0.0
    %2599 = vmatpush1.msra.mxu0 0.0
    %2600 = vmatprep.mubr.f32.mxu0 %v2387
    %2601 = vmatmul.mubr.f32.gmra.mrb[0].mxu0 %v1221
    %v2602 = vpop.f32.mrb[0].mxu0
    %v2603 = vadd.f32 %v2237, %v2602
    %v2604 = vpop.f32.mrb[0].mxu0
    %2605 = vmatprep.mubr.f32.mxu0 %v2390
    %2606 = vmatmul.mubr.f32.gmra.mrb[0].mxu0 %v1223
    %v2607 = vpop.f32.mrb[0].mxu0
    %v2608 = vadd.f32 %v2239, %v2607
    %v2609 = vpop.f32.mrb[0].mxu0
    %2610 = vmatprep.mubr.f32.mxu0 %v2393
    %2611 = vmatmul.mubr.f32.gmra.mrb[0].mxu0 %v1225
    %v2612 = vpop.f32.mrb[0].mxu0
    %v2613 = vadd.f32 %v2241, %v2612
    %v2614 = vpop.f32.mrb[0].mxu0
    %2615 = vmatprep.mubr.f32.mxu0 %v2396
    %2616 = vmatmul.mubr.f32.gmra.mrb[0].mxu0 %v1227
    %v2617 = vpop.f32.mrb[0].mxu0
    %v2618 = vadd.f32 %v2243, %v2617
    %v2619 = vpop.f32.mrb[0].mxu0
    %2620 = vmatprep.mubr.f32.mxu0 %v2399
    %2621 = vmatmul.mubr.f32.gmra.mrb[0].mxu0 %v1229
    %v2622 = vpop.f32.mrb[0].mxu0
    %v2623 = vadd.f32 %v2245, %v2622
    %v2624 = vpop.f32.mrb[0].mxu0
    %2625 = vmatprep.mubr.f32.mxu0 %v2402
    %2626 = vmatmul.mubr.f32.gmra.mrb[0].mxu0 %v1231
    %v2627 = vpop.f32.mrb[0].mxu0
    %v2628 = vadd.f32 %v2247, %v2627
    %v2629 = vpop.f32.mrb[0].mxu0
    %2630 = vmatprep.mubr.f32.mxu0 %v2405
    %2631 = vmatmul.mubr.f32.gmra.mrb[0].mxu0 %v1233
    %v2632 = vpop.f32.mrb[0].mxu0
    %v2633 = vadd.f32 %v2249, %v2632
    %v2634 = vpop.f32.mrb[0].mxu0
    %2635 = vmatprep.mubr.f32.mxu0 %v2408
    %2636 = vmatmul.mubr.f32.gmra.mrb[0].mxu0 %v1235
    %v2637 = vpop.f32.mrb[0].mxu0
    %v2638 = vadd.f32 %v2251, %v2637
    %v2639 = vpop.f32.mrb[0].mxu0
    %2640 = vmatprep.mubr.f32.mxu0 %v2411
    %2641 = vmatmul.mubr.f32.gmra.mrb[0].mxu0 %v1237
    %v2642 = vpop.f32.mrb[0].mxu0
    %v2643 = vadd.f32 %v2253, %v2642
    %v2644 = vpop.f32.mrb[0].mxu0
    %2645 = vmatprep.mubr.f32.mxu0 %v2414
    %2646 = vmatmul.mubr.f32.gmra.mrb[0].mxu0 %v1239
    %v2647 = vpop.f32.mrb[0].mxu0
    %v2648 = vadd.f32 %v2255, %v2647
    %v2649 = vpop.f32.mrb[0].mxu0
    %2650 = vmatprep.mubr.f32.mxu0 %v2417
    %2651 = vmatmul.mubr.f32.gmra.mrb[0].mxu0 %v1241
    %v2652 = vpop.f32.mrb[0].mxu0
    %v2653 = vadd.f32 %v2257, %v2652
    %v2654 = vpop.f32.mrb[0].mxu0
    %2655 = vmatprep.mubr.f32.mxu0 %v2420
    %2656 = vmatmul.mubr.f32.gmra.mrb[0].mxu0 %v1243
    %v2657 = vpop.f32.mrb[0].mxu0
    %v2658 = vadd.f32 %v2259, %v2657
    %v2659 = vpop.f32.mrb[0].mxu0
    %2660 = vmatprep.mubr.f32.mxu0 %v2423
    %2661 = vmatmul.mubr.f32.gmra.mrb[0].mxu0 %v1245
    %v2662 = vpop.f32.mrb[0].mxu0
    %v2663 = vadd.f32 %v2261, %v2662
    %v2664 = vpop.f32.mrb[0].mxu0
    %2665 = vmatprep.mubr.f32.mxu0 %v2426
    %2666 = vmatmul.mubr.f32.gmra.mrb[0].mxu0 %v1247
    %v2667 = vpop.f32.mrb[0].mxu0
    %v2668 = vadd.f32 %v2263, %v2667
    %v2669 = vpop.f32.mrb[0].mxu0
    %2670 = vmatprep.mubr.f32.mxu0 %v2429
    %2671 = vmatmul.mubr.f32.gmra.mrb[0].mxu0 %v1249
    %v2672 = vpop.f32.mrb[0].mxu0
    %v2673 = vadd.f32 %v2265, %v2672
    %v2674 = vpop.f32.mrb[0].mxu0
    %2675 = vmatprep.mubr.f32.mxu0 %v2432
    %2676 = vmatmul.mubr.f32.gmra.mrb[0].mxu0 %v1251
    %v2677 = vpop.f32.mrb[0].mxu0
    %v2678 = vadd.f32 %v2267, %v2677
    %v2679 = vpop.f32.mrb[0].mxu0
    %2680 = vmatprep.mubr.f32.mxu0 %v2435
    %2681 = vmatmul.mubr.f32.gmra.mrb[0].mxu0 %v1253
    %v2682 = vpop.f32.mrb[0].mxu0
    %v2683 = vadd.f32 %v2269, %v2682
    %v2684 = vpop.f32.mrb[0].mxu0
    %2685 = vmatprep.mubr.f32.mxu0 %v2438
    %2686 = vmatmul.mubr.f32.gmra.mrb[0].mxu0 %v1255
    %v2687 = vpop.f32.mrb[0].mxu0
    %v2688 = vadd.f32 %v2271, %v2687
    %v2689 = vpop.f32.mrb[0].mxu0
    %2690 = vmatprep.mubr.f32.mxu0 %v2441
    %2691 = vmatmul.mubr.f32.gmra.mrb[0].mxu0 %v1257
    %v2692 = vpop.f32.mrb[0].mxu0
    %v2693 = vadd.f32 %v2273, %v2692
    %v2694 = vpop.f32.mrb[0].mxu0
    %2695 = vmatprep.mubr.f32.mxu0 %v2444
    %2696 = vmatmul.mubr.f32.gmra.mrb[0].mxu0 %v1259
    %v2697 = vpop.f32.mrb[0].mxu0
    %v2698 = vadd.f32 %v2275, %v2697
    %v2699 = vpop.f32.mrb[0].mxu0
    %2700 = vmatprep.mubr.f32.mxu0 %v2447
    %2701 = vmatmul.mubr.f32.gmra.mrb[0].mxu0 %v1261
    %v2702 = vpop.f32.mrb[0].mxu0
    %v2703 = vadd.f32 %v2277, %v2702
    %v2704 = vpop.f32.mrb[0].mxu0
    %2705 = vmatprep.mubr.f32.mxu0 %v2450
    %2706 = vmatmul.mubr.f32.gmra.mrb[0].mxu0 %v1263
    %v2707 = vpop.f32.mrb[0].mxu0
    %v2708 = vadd.f32 %v2279, %v2707
    %v2709 = vpop.f32.mrb[0].mxu0
    %2710 = vmatprep.mubr.f32.mxu0 %v2453
    %2711 = vmatmul.mubr.f32.gmra.mrb[0].mxu0 %v1265
    %v2712 = vpop.f32.mrb[0].mxu0
    %v2713 = vadd.f32 %v2281, %v2712
    %v2714 = vpop.f32.mrb[0].mxu0
    %2715 = vmatprep.mubr.f32.mxu0 %v2456
    %2716 = vmatmul.mubr.f32.gmra.mrb[0].mxu0 %v1267
    %v2717 = vpop.f32.mrb[0].mxu0
    %v2718 = vadd.f32 %v2283, %v2717
    %v2719 = vpop.f32.mrb[0].mxu0
    %2720 = vmatprep.mubr.f32.mxu0 %v2459
    %2721 = vmatmul.mubr.f32.gmra.mrb[0].mxu0 %v1269
    %v2722 = vpop.f32.mrb[0].mxu0
    %v2723 = vadd.f32 %v2285, %v2722
    %v2724 = vpop.f32.mrb[0].mxu0
    %2725 = vmatprep.mubr.f32.mxu0 %v2462
    %2726 = vmatmul.mubr.f32.gmra.mrb[0].mxu0 %v1271
    %v2727 = vpop.f32.mrb[0].mxu0
    %v2728 = vadd.f32 %v2287, %v2727
    %v2729 = vpop.f32.mrb[0].mxu0
    %2730 = vmatprep.mubr.f32.mxu0 %v2465
    %2731 = vmatmul.mubr.f32.gmra.mrb[0].mxu0 %v1273
    %v2732 = vpop.f32.mrb[0].mxu0
    %v2733 = vadd.f32 %v2289, %v2732
    %v2734 = vpop.f32.mrb[0].mxu0
    %2735 = vmatprep.mubr.f32.mxu0 %v2468
    %2736 = vmatmul.mubr.f32.gmra.mrb[0].mxu0 %v1275
    %v2737 = vpop.f32.mrb[0].mxu0
    %v2738 = vadd.f32 %v2291, %v2737
    %v2739 = vpop.f32.mrb[0].mxu0
    %2740 = vmatprep.mubr.f32.mxu0 %v2471
    %2741 = vmatmul.mubr.f32.gmra.mrb[0].mxu0 %v1277
    %v2742 = vpop.f32.mrb[0].mxu0
    %v2743 = vadd.f32 %v2293, %v2742
    %v2744 = vpop.f32.mrb[0].mxu0
    %2745 = vmatprep.mubr.f32.mxu0 %v2474
    %2746 = vmatmul.mubr.f32.gmra.mrb[0].mxu0 %v1279
    %v2747 = vpop.f32.mrb[0].mxu0
    %v2748 = vadd.f32 %v2295, %v2747
    %v2749 = vpop.f32.mrb[0].mxu0
    %2750 = vmatprep.mubr.f32.mxu0 %v2477
    %2751 = vmatmul.mubr.f32.gmra.mrb[0].mxu0 %v1281
    %v2752 = vpop.f32.mrb[0].mxu0
    %v2753 = vadd.f32 %v2297, %v2752
    %v2754 = vpop.f32.mrb[0].mxu0
    %2755 = vmatprep.mubr.f32.mxu0 %v2480
    %2756 = vmatmul.mubr.f32.gmra.mrb[0].mxu0 %v1283
    %v2757 = vpop.f32.mrb[0].mxu0
    %v2758 = vadd.f32 %v2299, %v2757
    %v2759 = vpop.f32.mrb[0].mxu0
    %2760 = vmatprep.mubr.f32.mxu0 %v2483
    %2761 = vmatmul.mubr.f32.gmra.mrb[0].mxu0 %v1285
    %v2762 = vpop.f32.mrb[0].mxu0
    %v2763 = vadd.f32 %v2301, %v2762
    %v2764 = vpop.f32.mrb[0].mxu0
    %2765 = vmatprep.mubr.f32.mxu0 %v2486
    %2766 = vmatmul.mubr.f32.gmra.mrb[0].mxu0 %v1287
    %v2767 = vpop.f32.mrb[0].mxu0
    %v2768 = vadd.f32 %v2303, %v2767
    %v2769 = vpop.f32.mrb[0].mxu0
    %2770 = vmatprep.mubr.f32.mxu0 %v2489
    %2771 = vmatmul.mubr.f32.gmra.mrb[0].mxu0 %v1289
    %v2772 = vpop.f32.mrb[0].mxu0
    %v2773 = vadd.f32 %v2305, %v2772
    %v2774 = vpop.f32.mrb[0].mxu0
    %2775 = vmatprep.mubr.f32.mxu0 %v2492
    %2776 = vmatmul.mubr.f32.gmra.mrb[0].mxu0 %v1291
    %v2777 = vpop.f32.mrb[0].mxu0
    %v2778 = vadd.f32 %v2307, %v2777
    %v2779 = vpop.f32.mrb[0].mxu0
    %2780 = vmatprep.mubr.f32.mxu0 %v2495
    %2781 = vmatmul.mubr.f32.gmra.mrb[0].mxu0 %v1293
    %v2782 = vpop.f32.mrb[0].mxu0
    %v2783 = vadd.f32 %v2309, %v2782
    %v2784 = vpop.f32.mrb[0].mxu0
    %2785 = vmatprep.mubr.f32.mxu0 %v2498
    %2786 = vmatmul.mubr.f32.gmra.mrb[0].mxu0 %v1295
    %v2787 = vpop.f32.mrb[0].mxu0
    %v2788 = vadd.f32 %v2311, %v2787
    %v2789 = vpop.f32.mrb[0].mxu0
    %2790 = vmatprep.mubr.f32.mxu0 %v2501
    %2791 = vmatmul.mubr.f32.gmra.mrb[0].mxu0 %v1297
    %v2792 = vpop.f32.mrb[0].mxu0
    %v2793 = vadd.f32 %v2313, %v2792
    %v2794 = vpop.f32.mrb[0].mxu0
    %2795 = vmatprep.mubr.f32.mxu0 %v2504
    %2796 = vmatmul.mubr.f32.gmra.mrb[0].mxu0 %v1299
    %v2797 = vpop.f32.mrb[0].mxu0
    %v2798 = vadd.f32 %v2315, %v2797
    %v2799 = vpop.f32.mrb[0].mxu0
    %2800 = vmatprep.mubr.f32.mxu0 %v2507
    %2801 = vmatmul.mubr.f32.gmra.mrb[0].mxu0 %v1301
    %v2802 = vpop.f32.mrb[0].mxu0
    %v2803 = vadd.f32 %v2317, %v2802
    %v2804 = vpop.f32.mrb[0].mxu0
    %2805 = vmatprep.mubr.f32.mxu0 %v2510
    %2806 = vmatmul.mubr.f32.gmra.mrb[0].mxu0 %v1303
    %v2807 = vpop.f32.mrb[0].mxu0
    %v2808 = vadd.f32 %v2319, %v2807
    %v2809 = vpop.f32.mrb[0].mxu0
    %2810 = vmatprep.mubr.f32.mxu0 %v2513
    %2811 = vmatmul.mubr.f32.gmra.mrb[0].mxu0 %v1305
    %v2812 = vpop.f32.mrb[0].mxu0
    %v2813 = vadd.f32 %v2321, %v2812
    %v2814 = vpop.f32.mrb[0].mxu0
    %2815 = vmatprep.mubr.f32.mxu0 %v2516
    %2816 = vmatmul.mubr.f32.gmra.mrb[0].mxu0 %v1307
    %v2817 = vpop.f32.mrb[0].mxu0
    %v2818 = vadd.f32 %v2323, %v2817
    %v2819 = vpop.f32.mrb[0].mxu0
    %2820 = vmatprep.mubr.f32.mxu0 %v2519
    %2821 = vmatmul.mubr.f32.gmra.mrb[0].mxu0 %v1309
    %v2822 = vpop.f32.mrb[0].mxu0
    %v2823 = vadd.f32 %v2325, %v2822
    %v2824 = vpop.f32.mrb[0].mxu0
    %2825 = vmatprep.mubr.f32.mxu0 %v2522
    %2826 = vmatmul.mubr.f32.gmra.mrb[0].mxu0 %v1311
    %v2827 = vpop.f32.mrb[0].mxu0
    %v2828 = vadd.f32 %v2327, %v2827
    %v2829 = vpop.f32.mrb[0].mxu0
    %2830 = vmatprep.mubr.f32.mxu0 %v2525
    %2831 = vmatmul.mubr.f32.gmra.mrb[0].mxu0 %v1313
    %v2832 = vpop.f32.mrb[0].mxu0
    %v2833 = vadd.f32 %v2329, %v2832
    %v2834 = vpop.f32.mrb[0].mxu0
    %2835 = vmatprep.mubr.f32.mxu0 %v2528
    %2836 = vmatmul.mubr.f32.gmra.mrb[0].mxu0 %v1315
    %v2837 = vpop.f32.mrb[0].mxu0
    %v2838 = vadd.f32 %v2331, %v2837
    %v2839 = vpop.f32.mrb[0].mxu0
    %2840 = vmatprep.mubr.f32.mxu0 %v2531
    %2841 = vmatmul.mubr.f32.gmra.mrb[0].mxu0 %v1317
    %v2842 = vpop.f32.mrb[0].mxu0
    %v2843 = vadd.f32 %v2333, %v2842
    %v2844 = vpop.f32.mrb[0].mxu0
    %2845 = vmatprep.mubr.f32.mxu0 %v2534
    %2846 = vmatmul.mubr.f32.gmra.mrb[0].mxu0 %v1319
    %v2847 = vpop.f32.mrb[0].mxu0
    %v2848 = vadd.f32 %v2335, %v2847
    %v2849 = vpop.f32.mrb[0].mxu0
    %2850 = vdwg.mxu0
    %v2851 = vld [vmem:[#allocation2] sm:$0x1]
    %v2853 = vlaneseq
    %v2854 = vshrl.u32 %v2853, 7
    %v2855 = vsub.s32 0, %v2854
    %v2856 = vrot.slane %v2851, %v2855
    %v2858 = vmul.f32 %v2136, %v2856
    %v2859 = vmul.f32 %v2137, %v2856
    %v2860 = vmul.f32 %v2138, %v2856
    %v2861 = vmul.f32 %v2139, %v2856
    %v2862 = vmul.f32 %v2140, %v2856
    %v2863 = vmul.f32 %v2141, %v2856
    %v2864 = vmul.f32 %v2142, %v2856
    %v2865 = vmul.f32 %v2143, %v2856
    %v2866 = vmul.f32 %v2144, %v2856
    %v2867 = vmul.f32 %v2145, %v2856
    %v2868 = vmul.f32 %v2146, %v2856
    %v2869 = vmul.f32 %v2147, %v2856
    %v2870 = vmul.f32 %v2148, %v2856
    %v2871 = vmul.f32 %v2149, %v2856
    %v2872 = vmul.f32 %v2150, %v2856
    %v2873 = vmul.f32 %v2151, %v2856
    %v2874 = vmul.f32 %v2152, %v2856
    %v2875 = vmul.f32 %v2153, %v2856
    %v2876 = vmul.f32 %v2154, %v2856
    %v2877 = vmul.f32 %v2155, %v2856
    %v2878 = vmul.f32 %v2156, %v2856
    %v2879 = vmul.f32 %v2157, %v2856
    %v2880 = vmul.f32 %v2158, %v2856
    %v2881 = vmul.f32 %v2159, %v2856
    %v2882 = vmul.f32 %v2160, %v2856
    %v2883 = vmul.f32 %v2161, %v2856
    %v2884 = vmul.f32 %v2162, %v2856
    %v2885 = vmul.f32 %v2163, %v2856
    %v2886 = vmul.f32 %v2164, %v2856
    %v2887 = vmul.f32 %v2165, %v2856
    %v2888 = vmul.f32 %v2166, %v2856
    %v2889 = vmul.f32 %v2167, %v2856
    %v2890 = vmul.f32 %v2168, %v2856
    %v2891 = vmul.f32 %v2169, %v2856
    %v2892 = vmul.f32 %v2170, %v2856
    %v2893 = vmul.f32 %v2171, %v2856
    %v2894 = vmul.f32 %v2172, %v2856
    %v2895 = vmul.f32 %v2173, %v2856
    %v2896 = vmul.f32 %v2174, %v2856
    %v2897 = vmul.f32 %v2175, %v2856
    %v2898 = vmul.f32 %v2176, %v2856
    %v2899 = vmul.f32 %v2177, %v2856
    %v2900 = vmul.f32 %v2178, %v2856
    %v2901 = vmul.f32 %v2179, %v2856
    %v2902 = vmul.f32 %v2180, %v2856
    %v2903 = vmul.f32 %v2181, %v2856
    %v2904 = vmul.f32 %v2182, %v2856
    %v2905 = vmul.f32 %v2183, %v2856
    %v2906 = vmul.f32 %v2184, %v2856
    %v2907 = vmul.f32 %v2185, %v2856
    %v2908 = vadd.f32 %v2603, %v2858
    %v2909 = vadd.f32 %v2608, %v2859
    %v2910 = vadd.f32 %v2613, %v2860
    %v2911 = vadd.f32 %v2618, %v2861
    %v2912 = vadd.f32 %v2623, %v2862
    %v2913 = vadd.f32 %v2628, %v2863
    %v2914 = vadd.f32 %v2633, %v2864
    %v2915 = vadd.f32 %v2638, %v2865
    %v2916 = vadd.f32 %v2643, %v2866
    %v2917 = vadd.f32 %v2648, %v2867
    %v2918 = vadd.f32 %v2653, %v2868
    %v2919 = vadd.f32 %v2658, %v2869
    %v2920 = vadd.f32 %v2663, %v2870
    %v2921 = vadd.f32 %v2668, %v2871
    %v2922 = vadd.f32 %v2673, %v2872
    %v2923 = vadd.f32 %v2678, %v2873
    %v2924 = vadd.f32 %v2683, %v2874
    %v2925 = vadd.f32 %v2688, %v2875
    %v2926 = vadd.f32 %v2693, %v2876
    %v2927 = vadd.f32 %v2698, %v2877
    %v2928 = vadd.f32 %v2703, %v2878
    %v2929 = vadd.f32 %v2708, %v2879
    %v2930 = vadd.f32 %v2713, %v2880
    %v2931 = vadd.f32 %v2718, %v2881
    %v2932 = vadd.f32 %v2723, %v2882
    %v2933 = vadd.f32 %v2728, %v2883
    %v2934 = vadd.f32 %v2733, %v2884
    %v2935 = vadd.f32 %v2738, %v2885
    %v2936 = vadd.f32 %v2743, %v2886
    %v2937 = vadd.f32 %v2748, %v2887
    %v2938 = vadd.f32 %v2753, %v2888
    %v2939 = vadd.f32 %v2758, %v2889
    %v2940 = vadd.f32 %v2763, %v2890
    %v2941 = vadd.f32 %v2768, %v2891
    %v2942 = vadd.f32 %v2773, %v2892
    %v2943 = vadd.f32 %v2778, %v2893
    %v2944 = vadd.f32 %v2783, %v2894
    %v2945 = vadd.f32 %v2788, %v2895
    %v2946 = vadd.f32 %v2793, %v2896
    %v2947 = vadd.f32 %v2798, %v2897
    %v2948 = vadd.f32 %v2803, %v2898
    %v2949 = vadd.f32 %v2808, %v2899
    %v2950 = vadd.f32 %v2813, %v2900
    %v2951 = vadd.f32 %v2818, %v2901
    %v2952 = vadd.f32 %v2823, %v2902
    %v2953 = vadd.f32 %v2828, %v2903
    %v2954 = vadd.f32 %v2833, %v2904
    %v2955 = vadd.f32 %v2838, %v2905
    %v2956 = vadd.f32 %v2843, %v2906
    %v2957 = vadd.f32 %v2848, %v2907
    %vm2958 = vcmp.ge.f32.partialorder %v2908, 0.0
    %vm2959 = vcmp.ge.f32.partialorder %v2909, 0.0
    %vm2960 = vcmp.ge.f32.partialorder %v2910, 0.0
    %vm2961 = vcmp.ge.f32.partialorder %v2911, 0.0
    %vm2962 = vcmp.ge.f32.partialorder %v2912, 0.0
    %vm2963 = vcmp.ge.f32.partialorder %v2913, 0.0
    %vm2964 = vcmp.ge.f32.partialorder %v2914, 0.0
    %vm2965 = vcmp.ge.f32.partialorder %v2915, 0.0
    %vm2966 = vcmp.ge.f32.partialorder %v2916, 0.0
    %vm2967 = vcmp.ge.f32.partialorder %v2917, 0.0
    %vm2968 = vcmp.ge.f32.partialorder %v2918, 0.0
    %vm2969 = vcmp.ge.f32.partialorder %v2919, 0.0
    %vm2970 = vcmp.ge.f32.partialorder %v2920, 0.0
    %vm2971 = vcmp.ge.f32.partialorder %v2921, 0.0
    %vm2972 = vcmp.ge.f32.partialorder %v2922, 0.0
    %vm2973 = vcmp.ge.f32.partialorder %v2923, 0.0
    %vm2974 = vcmp.ge.f32.partialorder %v2924, 0.0
    %vm2975 = vcmp.ge.f32.partialorder %v2925, 0.0
    %vm2976 = vcmp.ge.f32.partialorder %v2926, 0.0
    %vm2977 = vcmp.ge.f32.partialorder %v2927, 0.0
    %vm2978 = vcmp.ge.f32.partialorder %v2928, 0.0
    %vm2979 = vcmp.ge.f32.partialorder %v2929, 0.0
    %vm2980 = vcmp.ge.f32.partialorder %v2930, 0.0
    %vm2981 = vcmp.ge.f32.partialorder %v2931, 0.0
    %vm2982 = vcmp.ge.f32.partialorder %v2932, 0.0
    %vm2983 = vcmp.ge.f32.partialorder %v2933, 0.0
    %vm2984 = vcmp.ge.f32.partialorder %v2934, 0.0
    %vm2985 = vcmp.ge.f32.partialorder %v2935, 0.0
    %vm2986 = vcmp.ge.f32.partialorder %v2936, 0.0
    %vm2987 = vcmp.ge.f32.partialorder %v2937, 0.0
    %vm2988 = vcmp.ge.f32.partialorder %v2938, 0.0
    %vm2989 = vcmp.ge.f32.partialorder %v2939, 0.0
    %vm2990 = vcmp.ge.f32.partialorder %v2940, 0.0
    %vm2991 = vcmp.ge.f32.partialorder %v2941, 0.0
    %vm2992 = vcmp.ge.f32.partialorder %v2942, 0.0
    %vm2993 = vcmp.ge.f32.partialorder %v2943, 0.0
    %vm2994 = vcmp.ge.f32.partialorder %v2944, 0.0
    %vm2995 = vcmp.ge.f32.partialorder %v2945, 0.0
    %vm2996 = vcmp.ge.f32.partialorder %v2946, 0.0
    %vm2997 = vcmp.ge.f32.partialorder %v2947, 0.0
    %vm2998 = vcmp.ge.f32.partialorder %v2948, 0.0
    %vm2999 = vcmp.ge.f32.partialorder %v2949, 0.0
    %vm3000 = vcmp.ge.f32.partialorder %v2950, 0.0
    %vm3001 = vcmp.ge.f32.partialorder %v2951, 0.0
    %vm3002 = vcmp.ge.f32.partialorder %v2952, 0.0
    %vm3003 = vcmp.ge.f32.partialorder %v2953, 0.0
    %vm3004 = vcmp.ge.f32.partialorder %v2954, 0.0
    %vm3005 = vcmp.ge.f32.partialorder %v2955, 0.0
    %vm3006 = vcmp.ge.f32.partialorder %v2956, 0.0
    %vm3007 = vcmp.ge.f32.partialorder %v2957, 0.0
    %v3008 = vmul.f32 %v2908, 0.2
    %v3009 = vmul.f32 %v2909, 0.2
    %v3010 = vmul.f32 %v2910, 0.2
    %v3011 = vmul.f32 %v2911, 0.2
    %v3012 = vmul.f32 %v2912, 0.2
    %v3013 = vmul.f32 %v2913, 0.2
    %v3014 = vmul.f32 %v2914, 0.2
    %v3015 = vmul.f32 %v2915, 0.2
    %v3016 = vmul.f32 %v2916, 0.2
    %v3017 = vmul.f32 %v2917, 0.2
    %v3018 = vmul.f32 %v2918, 0.2
    %v3019 = vmul.f32 %v2919, 0.2
    %v3020 = vmul.f32 %v2920, 0.2
    %v3021 = vmul.f32 %v2921, 0.2
    %v3022 = vmul.f32 %v2922, 0.2
    %v3023 = vmul.f32 %v2923, 0.2
    %v3024 = vmul.f32 %v2924, 0.2
    %v3025 = vmul.f32 %v2925, 0.2
    %v3026 = vmul.f32 %v2926, 0.2
    %v3027 = vmul.f32 %v2927, 0.2
    %v3028 = vmul.f32 %v2928, 0.2
    %v3029 = vmul.f32 %v2929, 0.2
    %v3030 = vmul.f32 %v2930, 0.2
    %v3031 = vmul.f32 %v2931, 0.2
    %v3032 = vmul.f32 %v2932, 0.2
    %v3033 = vmul.f32 %v2933, 0.2
    %v3034 = vmul.f32 %v2934, 0.2
    %v3035 = vmul.f32 %v2935, 0.2
    %v3036 = vmul.f32 %v2936, 0.2
    %v3037 = vmul.f32 %v2937, 0.2
    %v3038 = vmul.f32 %v2938, 0.2
    %v3039 = vmul.f32 %v2939, 0.2
    %v3040 = vmul.f32 %v2940, 0.2
    %v3041 = vmul.f32 %v2941, 0.2
    %v3042 = vmul.f32 %v2942, 0.2
    %v3043 = vmul.f32 %v2943, 0.2
    %v3044 = vmul.f32 %v2944, 0.2
    %v3045 = vmul.f32 %v2945, 0.2
    %v3046 = vmul.f32 %v2946, 0.2
    %v3047 = vmul.f32 %v2947, 0.2
    %v3048 = vmul.f32 %v2948, 0.2
    %v3049 = vmul.f32 %v2949, 0.2
    %v3050 = vmul.f32 %v2950, 0.2
    %v3051 = vmul.f32 %v2951, 0.2
    %v3052 = vmul.f32 %v2952, 0.2
    %v3053 = vmul.f32 %v2953, 0.2
    %v3054 = vmul.f32 %v2954, 0.2
    %v3055 = vmul.f32 %v2955, 0.2
    %v3056 = vmul.f32 %v2956, 0.2
    %v3057 = vmul.f32 %v2957, 0.2
    %v3058 = vsel %vm2958, %v2908, %v3008
    %v3059 = vsel %vm2959, %v2909, %v3009
    %v3060 = vsel %vm2960, %v2910, %v3010
    %v3061 = vsel %vm2961, %v2911, %v3011
    %v3062 = vsel %vm2962, %v2912, %v3012
    %v3063 = vsel %vm2963, %v2913, %v3013
    %v3064 = vsel %vm2964, %v2914, %v3014
    %v3065 = vsel %vm2965, %v2915, %v3015
    %v3066 = vsel %vm2966, %v2916, %v3016
    %v3067 = vsel %vm2967, %v2917, %v3017
    %v3068 = vsel %vm2968, %v2918, %v3018
    %v3069 = vsel %vm2969, %v2919, %v3019
    %v3070 = vsel %vm2970, %v2920, %v3020
    %v3071 = vsel %vm2971, %v2921, %v3021
    %v3072 = vsel %vm2972, %v2922, %v3022
    %v3073 = vsel %vm2973, %v2923, %v3023
    %v3074 = vsel %vm2974, %v2924, %v3024
    %v3075 = vsel %vm2975, %v2925, %v3025
    %v3076 = vsel %vm2976, %v2926, %v3026
    %v3077 = vsel %vm2977, %v2927, %v3027
    %v3078 = vsel %vm2978, %v2928, %v3028
    %v3079 = vsel %vm2979, %v2929, %v3029
    %v3080 = vsel %vm2980, %v2930, %v3030
    %v3081 = vsel %vm2981, %v2931, %v3031
    %v3082 = vsel %vm2982, %v2932, %v3032
    %v3083 = vsel %vm2983, %v2933, %v3033
    %v3084 = vsel %vm2984, %v2934, %v3034
    %v3085 = vsel %vm2985, %v2935, %v3035
    %v3086 = vsel %vm2986, %v2936, %v3036
    %v3087 = vsel %vm2987, %v2937, %v3037
    %v3088 = vsel %vm2988, %v2938, %v3038
    %v3089 = vsel %vm2989, %v2939, %v3039
    %v3090 = vsel %vm2990, %v2940, %v3040
    %v3091 = vsel %vm2991, %v2941, %v3041
    %v3092 = vsel %vm2992, %v2942, %v3042
    %v3093 = vsel %vm2993, %v2943, %v3043
    %v3094 = vsel %vm2994, %v2944, %v3044
    %v3095 = vsel %vm2995, %v2945, %v3045
    %v3096 = vsel %vm2996, %v2946, %v3046
    %v3097 = vsel %vm2997, %v2947, %v3047
    %v3098 = vsel %vm2998, %v2948, %v3048
    %v3099 = vsel %vm2999, %v2949, %v3049
    %v3100 = vsel %vm3000, %v2950, %v3050
    %v3101 = vsel %vm3001, %v2951, %v3051
    %v3102 = vsel %vm3002, %v2952, %v3052
    %v3103 = vsel %vm3003, %v2953, %v3053
    %v3104 = vsel %vm3004, %v2954, %v3054
    %v3105 = vsel %vm3005, %v2955, %v3055
    %v3106 = vsel %vm3006, %v2956, %v3056
    %v3107 = vsel %vm3007, %v2957, %v3057
    %3109 = vset.pattern.permute.xlu0 0
    %3110 = vperm.xlu0 %3109, %v3058
    %v3111 = vpop.permute.xlu0 %3110
    %3114 = vset.pattern.permute.xlu0 0
    %3115 = vperm.xlu0 %3114, %v3059
    %v3116 = vpop.permute.xlu0 %3115
    %3119 = vset.pattern.permute.xlu0 0
    %3120 = vperm.xlu0 %3119, %v3060
    %v3121 = vpop.permute.xlu0 %3120
    %3124 = vset.pattern.permute.xlu0 0
    %3125 = vperm.xlu0 %3124, %v3061
    %v3126 = vpop.permute.xlu0 %3125
    %3129 = vset.pattern.permute.xlu0 0
    %3130 = vperm.xlu0 %3129, %v3062
    %v3131 = vpop.permute.xlu0 %3130
    %3134 = vset.pattern.permute.xlu0 0
    %3135 = vperm.xlu0 %3134, %v3063
    %v3136 = vpop.permute.xlu0 %3135
    %3139 = vset.pattern.permute.xlu0 0
    %3140 = vperm.xlu0 %3139, %v3064
    %v3141 = vpop.permute.xlu0 %3140
    %3144 = vset.pattern.permute.xlu0 0
    %3145 = vperm.xlu0 %3144, %v3065
    %v3146 = vpop.permute.xlu0 %3145
    %3149 = vset.pattern.permute.xlu0 0
    %3150 = vperm.xlu0 %3149, %v3066
    %v3151 = vpop.permute.xlu0 %3150
    %3154 = vset.pattern.permute.xlu0 0
    %3155 = vperm.xlu0 %3154, %v3067
    %v3156 = vpop.permute.xlu0 %3155
    %3159 = vset.pattern.permute.xlu0 0
    %3160 = vperm.xlu0 %3159, %v3068
    %v3161 = vpop.permute.xlu0 %3160
    %3164 = vset.pattern.permute.xlu0 0
    %3165 = vperm.xlu0 %3164, %v3069
    %v3166 = vpop.permute.xlu0 %3165
    %3169 = vset.pattern.permute.xlu0 0
    %3170 = vperm.xlu0 %3169, %v3070
    %v3171 = vpop.permute.xlu0 %3170
    %3174 = vset.pattern.permute.xlu0 0
    %3175 = vperm.xlu0 %3174, %v3071
    %v3176 = vpop.permute.xlu0 %3175
    %3179 = vset.pattern.permute.xlu0 0
    %3180 = vperm.xlu0 %3179, %v3072
    %v3181 = vpop.permute.xlu0 %3180
    %3184 = vset.pattern.permute.xlu0 0
    %3185 = vperm.xlu0 %3184, %v3073
    %v3186 = vpop.permute.xlu0 %3185
    %3189 = vset.pattern.permute.xlu0 0
    %3190 = vperm.xlu0 %3189, %v3074
    %v3191 = vpop.permute.xlu0 %3190
    %3194 = vset.pattern.permute.xlu0 0
    %3195 = vperm.xlu0 %3194, %v3075
    %v3196 = vpop.permute.xlu0 %3195
    %3199 = vset.pattern.permute.xlu0 0
    %3200 = vperm.xlu0 %3199, %v3076
    %v3201 = vpop.permute.xlu0 %3200
    %3204 = vset.pattern.permute.xlu0 0
    %3205 = vperm.xlu0 %3204, %v3077
    %v3206 = vpop.permute.xlu0 %3205
    %3209 = vset.pattern.permute.xlu0 0
    %3210 = vperm.xlu0 %3209, %v3078
    %v3211 = vpop.permute.xlu0 %3210
    %3214 = vset.pattern.permute.xlu0 0
    %3215 = vperm.xlu0 %3214, %v3079
    %v3216 = vpop.permute.xlu0 %3215
    %3219 = vset.pattern.permute.xlu0 0
    %3220 = vperm.xlu0 %3219, %v3080
    %v3221 = vpop.permute.xlu0 %3220
    %3224 = vset.pattern.permute.xlu0 0
    %3225 = vperm.xlu0 %3224, %v3081
    %v3226 = vpop.permute.xlu0 %3225
    %3229 = vset.pattern.permute.xlu0 0
    %3230 = vperm.xlu0 %3229, %v3082
    %v3231 = vpop.permute.xlu0 %3230
    %3234 = vset.pattern.permute.xlu0 0
    %3235 = vperm.xlu0 %3234, %v3083
    %v3236 = vpop.permute.xlu0 %3235
    %3239 = vset.pattern.permute.xlu0 0
    %3240 = vperm.xlu0 %3239, %v3084
    %v3241 = vpop.permute.xlu0 %3240
    %3244 = vset.pattern.permute.xlu0 0
    %3245 = vperm.xlu0 %3244, %v3085
    %v3246 = vpop.permute.xlu0 %3245
    %3249 = vset.pattern.permute.xlu0 0
    %3250 = vperm.xlu0 %3249, %v3086
    %v3251 = vpop.permute.xlu0 %3250
    %3254 = vset.pattern.permute.xlu0 0
    %3255 = vperm.xlu0 %3254, %v3087
    %v3256 = vpop.permute.xlu0 %3255
    %3259 = vset.pattern.permute.xlu0 0
    %3260 = vperm.xlu0 %3259, %v3088
    %v3261 = vpop.permute.xlu0 %3260
    %3264 = vset.pattern.permute.xlu0 0
    %3265 = vperm.xlu0 %3264, %v3089
    %v3266 = vpop.permute.xlu0 %3265
    %3269 = vset.pattern.permute.xlu0 0
    %3270 = vperm.xlu0 %3269, %v3090
    %v3271 = vpop.permute.xlu0 %3270
    %3274 = vset.pattern.permute.xlu0 0
    %3275 = vperm.xlu0 %3274, %v3091
    %v3276 = vpop.permute.xlu0 %3275
    %3279 = vset.pattern.permute.xlu0 0
    %3280 = vperm.xlu0 %3279, %v3092
    %v3281 = vpop.permute.xlu0 %3280
    %3284 = vset.pattern.permute.xlu0 0
    %3285 = vperm.xlu0 %3284, %v3093
    %v3286 = vpop.permute.xlu0 %3285
    %3289 = vset.pattern.permute.xlu0 0
    %3290 = vperm.xlu0 %3289, %v3094
    %v3291 = vpop.permute.xlu0 %3290
    %3294 = vset.pattern.permute.xlu0 0
    %3295 = vperm.xlu0 %3294, %v3095
    %v3296 = vpop.permute.xlu0 %3295
    %3299 = vset.pattern.permute.xlu0 0
    %3300 = vperm.xlu0 %3299, %v3096
    %v3301 = vpop.permute.xlu0 %3300
    %3304 = vset.pattern.permute.xlu0 0
    %3305 = vperm.xlu0 %3304, %v3097
    %v3306 = vpop.permute.xlu0 %3305
    %3309 = vset.pattern.permute.xlu0 0
    %3310 = vperm.xlu0 %3309, %v3098
    %v3311 = vpop.permute.xlu0 %3310
    %3314 = vset.pattern.permute.xlu0 0
    %3315 = vperm.xlu0 %3314, %v3099
    %v3316 = vpop.permute.xlu0 %3315
    %3319 = vset.pattern.permute.xlu0 0
    %3320 = vperm.xlu0 %3319, %v3100
    %v3321 = vpop.permute.xlu0 %3320
    %3324 = vset.pattern.permute.xlu0 0
    %3325 = vperm.xlu0 %3324, %v3101
    %v3326 = vpop.permute.xlu0 %3325
    %3329 = vset.pattern.permute.xlu0 0
    %3330 = vperm.xlu0 %3329, %v3102
    %v3331 = vpop.permute.xlu0 %3330
    %3334 = vset.pattern.permute.xlu0 0
    %3335 = vperm.xlu0 %3334, %v3103
    %v3336 = vpop.permute.xlu0 %3335
    %3339 = vset.pattern.permute.xlu0 0
    %3340 = vperm.xlu0 %3339, %v3104
    %v3341 = vpop.permute.xlu0 %3340
    %3344 = vset.pattern.permute.xlu0 0
    %3345 = vperm.xlu0 %3344, %v3105
    %v3346 = vpop.permute.xlu0 %3345
    %3349 = vset.pattern.permute.xlu0 0
    %3350 = vperm.xlu0 %3349, %v3106
    %v3351 = vpop.permute.xlu0 %3350
    %3354 = vset.pattern.permute.xlu0 0
    %3355 = vperm.xlu0 %3354, %v3107
    %v3356 = vpop.permute.xlu0 %3355
    %v3358 = vsel %vm1021, %v3111, -1e+30
    %v3359 = vsel %vm1022, %v3111, -1e+30
    %v3360 = vsel %vm1023, %v3116, -1e+30
    %v3361 = vsel %vm1024, %v3116, -1e+30
    %v3362 = vsel %vm1025, %v3121, -1e+30
    %v3363 = vsel %vm1026, %v3121, -1e+30
    %v3364 = vsel %vm1027, %v3126, -1e+30
    %v3365 = vsel %vm1028, %v3126, -1e+30
    %v3366 = vsel %vm1029, %v3131, -1e+30
    %v3367 = vsel %vm1030, %v3131, -1e+30
    %v3368 = vsel %vm1031, %v3136, -1e+30
    %v3369 = vsel %vm1032, %v3136, -1e+30
    %v3370 = vsel %vm1033, %v3141, -1e+30
    %v3371 = vsel %vm1034, %v3141, -1e+30
    %v3372 = vsel %vm1035, %v3146, -1e+30
    %v3373 = vsel %vm1036, %v3146, -1e+30
    %v3374 = vsel %vm1037, %v3151, -1e+30
    %v3375 = vsel %vm1038, %v3151, -1e+30
    %v3376 = vsel %vm1039, %v3156, -1e+30
    %v3377 = vsel %vm1040, %v3156, -1e+30
    %v3378 = vsel %vm1041, %v3161, -1e+30
    %v3379 = vsel %vm1042, %v3161, -1e+30
    %v3380 = vsel %vm1043, %v3166, -1e+30
    %v3381 = vsel %vm1044, %v3166, -1e+30
    %v3382 = vsel %vm1045, %v3171, -1e+30
    %v3383 = vsel %vm1046, %v3171, -1e+30
    %v3384 = vsel %vm1047, %v3176, -1e+30
    %v3385 = vsel %vm1048, %v3176, -1e+30
    %v3386 = vsel %vm1049, %v3181, -1e+30
    %v3387 = vsel %vm1050, %v3181, -1e+30
    %v3388 = vsel %vm1051, %v3186, -1e+30
    %v3389 = vsel %vm1052, %v3186, -1e+30
    %v3390 = vsel %vm1053, %v3191, -1e+30
    %v3391 = vsel %vm1054, %v3191, -1e+30
    %v3392 = vsel %vm1055, %v3196, -1e+30
    %v3393 = vsel %vm1056, %v3196, -1e+30
    %v3394 = vsel %vm1057, %v3201, -1e+30
    %v3395 = vsel %vm1058, %v3201, -1e+30
    %v3396 = vsel %vm1059, %v3206, -1e+30
    %v3397 = vsel %vm1060, %v3206, -1e+30
    %v3398 = vsel %vm1061, %v3211, -1e+30
    %v3399 = vsel %vm1062, %v3211, -1e+30
    %v3400 = vsel %vm1063, %v3216, -1e+30
    %v3401 = vsel %vm1064, %v3216, -1e+30
    %v3402 = vsel %vm1065, %v3221, -1e+30
    %v3403 = vsel %vm1066, %v3221, -1e+30
    %v3404 = vsel %vm1067, %v3226, -1e+30
    %v3405 = vsel %vm1068, %v3226, -1e+30
    %v3406 = vsel %vm1069, %v3231, -1e+30
    %v3407 = vsel %vm1070, %v3231, -1e+30
    %v3408 = vsel %vm1071, %v3236, -1e+30
    %v3409 = vsel %vm1072, %v3236, -1e+30
    %v3410 = vsel %vm1073, %v3241, -1e+30
    %v3411 = vsel %vm1074, %v3241, -1e+30
    %v3412 = vsel %vm1075, %v3246, -1e+30
    %v3413 = vsel %vm1076, %v3246, -1e+30
    %v3414 = vsel %vm1077, %v3251, -1e+30
    %v3415 = vsel %vm1078, %v3251, -1e+30
    %v3416 = vsel %vm1079, %v3256, -1e+30
    %v3417 = vsel %vm1080, %v3256, -1e+30
    %v3418 = vsel %vm1081, %v3261, -1e+30
    %v3419 = vsel %vm1082, %v3261, -1e+30
    %v3420 = vsel %vm1083, %v3266, -1e+30
    %v3421 = vsel %vm1084, %v3266, -1e+30
    %v3422 = vsel %vm1085, %v3271, -1e+30
    %v3423 = vsel %vm1086, %v3271, -1e+30
    %v3424 = vsel %vm1087, %v3276, -1e+30
    %v3425 = vsel %vm1088, %v3276, -1e+30
    %v3426 = vsel %vm1089, %v3281, -1e+30
    %v3427 = vsel %vm1090, %v3281, -1e+30
    %v3428 = vsel %vm1091, %v3286, -1e+30
    %v3429 = vsel %vm1092, %v3286, -1e+30
    %v3430 = vsel %vm1093, %v3291, -1e+30
    %v3431 = vsel %vm1094, %v3291, -1e+30
    %v3432 = vsel %vm1095, %v3296, -1e+30
    %v3433 = vsel %vm1096, %v3296, -1e+30
    %v3434 = vsel %vm1097, %v3301, -1e+30
    %v3435 = vsel %vm1098, %v3301, -1e+30
    %v3436 = vsel %vm1099, %v3306, -1e+30
    %v3437 = vsel %vm1100, %v3306, -1e+30
    %v3438 = vsel %vm1101, %v3311, -1e+30
    %v3439 = vsel %vm1102, %v3311, -1e+30
    %v3440 = vsel %vm1103, %v3316, -1e+30
    %v3441 = vsel %vm1104, %v3316, -1e+30
    %v3442 = vsel %vm1105, %v3321, -1e+30
    %v3443 = vsel %vm1106, %v3321, -1e+30
    %v3444 = vsel %vm1107, %v3326, -1e+30
    %v3445 = vsel %vm1108, %v3326, -1e+30
    %v3446 = vsel %vm1109, %v3331, -1e+30
    %v3447 = vsel %vm1110, %v3331, -1e+30
    %v3448 = vsel %vm1111, %v3336, -1e+30
    %v3449 = vsel %vm1112, %v3336, -1e+30
    %v3450 = vsel %vm1113, %v3341, -1e+30
    %v3451 = vsel %vm1114, %v3341, -1e+30
    %v3452 = vsel %vm1115, %v3346, -1e+30
    %v3453 = vsel %vm1116, %v3346, -1e+30
    %v3454 = vsel %vm1117, %v3351, -1e+30
    %v3455 = vsel %vm1118, %v3351, -1e+30
    %v3456 = vsel %vm1119, %v3356, -1e+30
    %v3457 = vsel %vm1120, %v3356, -1e+30
    %v3458 = vmax.f32 %v3358, %v3362
    %v3459 = vmax.f32 %v3360, %v3364
    %v3460 = vmax.f32 %v3458, %v3366
    %v3461 = vmax.f32 %v3459, %v3368
    %v3462 = vmax.f32 %v3460, %v3370
    %v3463 = vmax.f32 %v3461, %v3372
    %v3464 = vmax.f32 %v3462, %v3374
    %v3465 = vmax.f32 %v3463, %v3376
    %v3466 = vmax.f32 %v3464, %v3378
    %v3467 = vmax.f32 %v3465, %v3380
    %v3468 = vmax.f32 %v3466, %v3382
    %v3469 = vmax.f32 %v3467, %v3384
    %v3470 = vmax.f32 %v3468, %v3386
    %v3471 = vmax.f32 %v3469, %v3388
    %v3472 = vmax.f32 %v3470, %v3390
    %v3473 = vmax.f32 %v3471, %v3392
    %v3474 = vmax.f32 %v3472, %v3394
    %v3475 = vmax.f32 %v3473, %v3396
    %v3476 = vmax.f32 %v3474, %v3398
    %v3477 = vmax.f32 %v3475, %v3400
    %v3478 = vmax.f32 %v3476, %v3402
    %v3479 = vmax.f32 %v3477, %v3404
    %v3480 = vmax.f32 %v3478, %v3406
    %v3481 = vmax.f32 %v3479, %v3408
    %v3482 = vmax.f32 %v3480, %v3410
    %v3483 = vmax.f32 %v3481, %v3412
    %v3484 = vmax.f32 %v3482, %v3414
    %v3485 = vmax.f32 %v3483, %v3416
    %v3486 = vmax.f32 %v3484, %v3418
    %v3487 = vmax.f32 %v3485, %v3420
    %v3488 = vmax.f32 %v3486, %v3422
    %v3489 = vmax.f32 %v3487, %v3424
    %v3490 = vmax.f32 %v3488, %v3426
    %v3491 = vmax.f32 %v3489, %v3428
    %v3492 = vmax.f32 %v3490, %v3430
    %v3493 = vmax.f32 %v3491, %v3432
    %v3494 = vmax.f32 %v3492, %v3434
    %v3495 = vmax.f32 %v3493, %v3436
    %v3496 = vmax.f32 %v3494, %v3438
    %v3497 = vmax.f32 %v3495, %v3440
    %v3498 = vmax.f32 %v3496, %v3442
    %v3499 = vmax.f32 %v3497, %v3444
    %v3500 = vmax.f32 %v3498, %v3446
    %v3501 = vmax.f32 %v3499, %v3448
    %v3502 = vmax.f32 %v3500, %v3450
    %v3503 = vmax.f32 %v3501, %v3452
    %v3504 = vmax.f32 %v3502, %v3454
    %v3505 = vmax.f32 %v3503, %v3456
    %v3506 = vmax.f32 %v3504, %v3505
    %v3507 = vrot.slane %v3506, 4
    %v3508 = vmax.f32 %v3506, %v3507
    %v3509 = vrot.slane %v3508, 2
    %v3510 = vmax.f32 %v3508, %v3509
    %v3511 = vrot.slane %v3510, 1
    %v3512 = vmax.f32 %v3510, %v3511
    %v3513 = vsel %vm1613, %v3359, -inf
    %v3514 = vsel %vm1613, %v3361, -inf
    %v3515 = vsel %vm1613, %v3363, -inf
    %v3516 = vmax.f32 %v3513, %v3515
    %v3517 = vsel %vm1613, %v3365, -inf
    %v3518 = vmax.f32 %v3514, %v3517
    %v3519 = vsel %vm1613, %v3367, -inf
    %v3520 = vmax.f32 %v3516, %v3519
    %v3521 = vsel %vm1613, %v3369, -inf
    %v3522 = vmax.f32 %v3518, %v3521
    %v3523 = vsel %vm1613, %v3371, -inf
    %v3524 = vmax.f32 %v3520, %v3523
    %v3525 = vsel %vm1613, %v3373, -inf
    %v3526 = vmax.f32 %v3522, %v3525
    %v3527 = vsel %vm1613, %v3375, -inf
    %v3528 = vmax.f32 %v3524, %v3527
    %v3529 = vsel %vm1613, %v3377, -inf
    %v3530 = vmax.f32 %v3526, %v3529
    %v3531 = vsel %vm1613, %v3379, -inf
    %v3532 = vmax.f32 %v3528, %v3531
    %v3533 = vsel %vm1613, %v3381, -inf
    %v3534 = vmax.f32 %v3530, %v3533
    %v3535 = vsel %vm1613, %v3383, -inf
    %v3536 = vmax.f32 %v3532, %v3535
    %v3537 = vsel %vm1613, %v3385, -inf
    %v3538 = vmax.f32 %v3534, %v3537
    %v3539 = vsel %vm1613, %v3387, -inf
    %v3540 = vmax.f32 %v3536, %v3539
    %v3541 = vsel %vm1613, %v3389, -inf
    %v3542 = vmax.f32 %v3538, %v3541
    %v3543 = vsel %vm1613, %v3391, -inf
    %v3544 = vmax.f32 %v3540, %v3543
    %v3545 = vsel %vm1613, %v3393, -inf
    %v3546 = vmax.f32 %v3542, %v3545
    %v3547 = vsel %vm1613, %v3395, -inf
    %v3548 = vmax.f32 %v3544, %v3547
    %v3549 = vsel %vm1613, %v3397, -inf
    %v3550 = vmax.f32 %v3546, %v3549
    %v3551 = vsel %vm1613, %v3399, -inf
    %v3552 = vmax.f32 %v3548, %v3551
    %v3553 = vsel %vm1613, %v3401, -inf
    %v3554 = vmax.f32 %v3550, %v3553
    %v3555 = vsel %vm1613, %v3403, -inf
    %v3556 = vmax.f32 %v3552, %v3555
    %v3557 = vsel %vm1613, %v3405, -inf
    %v3558 = vmax.f32 %v3554, %v3557
    %v3559 = vsel %vm1613, %v3407, -inf
    %v3560 = vmax.f32 %v3556, %v3559
    %v3561 = vsel %vm1613, %v3409, -inf
    %v3562 = vmax.f32 %v3558, %v3561
    %v3563 = vsel %vm1613, %v3411, -inf
    %v3564 = vmax.f32 %v3560, %v3563
    %v3565 = vsel %vm1613, %v3413, -inf
    %v3566 = vmax.f32 %v3562, %v3565
    %v3567 = vsel %vm1613, %v3415, -inf
    %v3568 = vmax.f32 %v3564, %v3567
    %v3569 = vsel %vm1613, %v3417, -inf
    %v3570 = vmax.f32 %v3566, %v3569
    %v3571 = vsel %vm1613, %v3419, -inf
    %v3572 = vmax.f32 %v3568, %v3571
    %v3573 = vsel %vm1613, %v3421, -inf
    %v3574 = vmax.f32 %v3570, %v3573
    %v3575 = vsel %vm1613, %v3423, -inf
    %v3576 = vmax.f32 %v3572, %v3575
    %v3577 = vsel %vm1613, %v3425, -inf
    %v3578 = vmax.f32 %v3574, %v3577
    %v3579 = vsel %vm1613, %v3427, -inf
    %v3580 = vmax.f32 %v3576, %v3579
    %v3581 = vsel %vm1613, %v3429, -inf
    %v3582 = vmax.f32 %v3578, %v3581
    %v3583 = vsel %vm1613, %v3431, -inf
    %v3584 = vmax.f32 %v3580, %v3583
    %v3585 = vsel %vm1613, %v3433, -inf
    %v3586 = vmax.f32 %v3582, %v3585
    %v3587 = vsel %vm1613, %v3435, -inf
    %v3588 = vmax.f32 %v3584, %v3587
    %v3589 = vsel %vm1613, %v3437, -inf
    %v3590 = vmax.f32 %v3586, %v3589
    %v3591 = vsel %vm1613, %v3439, -inf
    %v3592 = vmax.f32 %v3588, %v3591
    %v3593 = vsel %vm1613, %v3441, -inf
    %v3594 = vmax.f32 %v3590, %v3593
    %v3595 = vsel %vm1613, %v3443, -inf
    %v3596 = vmax.f32 %v3592, %v3595
    %v3597 = vsel %vm1613, %v3445, -inf
    %v3598 = vmax.f32 %v3594, %v3597
    %v3599 = vsel %vm1613, %v3447, -inf
    %v3600 = vmax.f32 %v3596, %v3599
    %v3601 = vsel %vm1613, %v3449, -inf
    %v3602 = vmax.f32 %v3598, %v3601
    %v3603 = vsel %vm1613, %v3451, -inf
    %v3604 = vmax.f32 %v3600, %v3603
    %v3605 = vsel %vm1613, %v3453, -inf
    %v3606 = vmax.f32 %v3602, %v3605
    %v3607 = vsel %vm1613, %v3455, -inf
    %v3608 = vmax.f32 %v3604, %v3607
    %v3609 = vsel %vm1613, %v3457, -inf
    %v3610 = vmax.f32 %v3606, %v3609
    %v3611 = vmax.f32 %v3608, %v3610
    %v3612 = vrot.slane %v3611, 4
    %v3613 = vmax.f32 %v3611, %v3612
    %v3614 = vrot.slane %v3613, 2
    %v3615 = vmax.f32 %v3613, %v3614
    %v3616 = vrot.slane %v3615, 1
    %v3617 = vmax.f32 %v3615, %v3616
    %v3618 = vmul.f32 %v1221, %v3512
    %v3619 = vmul.f32 %v1222, %v3617
    %v3620 = vmul.f32 %v1223, %v3512
    %v3621 = vmul.f32 %v1224, %v3617
    %v3622 = vmul.f32 %v1225, %v3512
    %v3623 = vmul.f32 %v1226, %v3617
    %v3624 = vmul.f32 %v1227, %v3512
    %v3625 = vmul.f32 %v1228, %v3617
    %v3626 = vmul.f32 %v1229, %v3512
    %v3627 = vmul.f32 %v1230, %v3617
    %v3628 = vmul.f32 %v1231, %v3512
    %v3629 = vmul.f32 %v1232, %v3617
    %v3630 = vmul.f32 %v1233, %v3512
    %v3631 = vmul.f32 %v1234, %v3617
    %v3632 = vmul.f32 %v1235, %v3512
    %v3633 = vmul.f32 %v1236, %v3617
    %v3634 = vmul.f32 %v1237, %v3512
    %v3635 = vmul.f32 %v1238, %v3617
    %v3636 = vmul.f32 %v1239, %v3512
    %v3637 = vmul.f32 %v1240, %v3617
    %v3638 = vmul.f32 %v1241, %v3512
    %v3639 = vmul.f32 %v1242, %v3617
    %v3640 = vmul.f32 %v1243, %v3512
    %v3641 = vmul.f32 %v1244, %v3617
    %v3642 = vmul.f32 %v1245, %v3512
    %v3643 = vmul.f32 %v1246, %v3617
    %v3644 = vmul.f32 %v1247, %v3512
    %v3645 = vmul.f32 %v1248, %v3617
    %v3646 = vmul.f32 %v1249, %v3512
    %v3647 = vmul.f32 %v1250, %v3617
    %v3648 = vmul.f32 %v1251, %v3512
    %v3649 = vmul.f32 %v1252, %v3617
    %v3650 = vmul.f32 %v1253, %v3512
    %v3651 = vmul.f32 %v1254, %v3617
    %v3652 = vmul.f32 %v1255, %v3512
    %v3653 = vmul.f32 %v1256, %v3617
    %v3654 = vmul.f32 %v1257, %v3512
    %v3655 = vmul.f32 %v1258, %v3617
    %v3656 = vmul.f32 %v1259, %v3512
    %v3657 = vmul.f32 %v1260, %v3617
    %v3658 = vmul.f32 %v1261, %v3512
    %v3659 = vmul.f32 %v1262, %v3617
    %v3660 = vmul.f32 %v1263, %v3512
    %v3661 = vmul.f32 %v1264, %v3617
    %v3662 = vmul.f32 %v1265, %v3512
    %v3663 = vmul.f32 %v1266, %v3617
    %v3664 = vmul.f32 %v1267, %v3512
    %v3665 = vmul.f32 %v1268, %v3617
    %v3666 = vmul.f32 %v1269, %v3512
    %v3667 = vmul.f32 %v1270, %v3617
    %v3668 = vmul.f32 %v1271, %v3512
    %v3669 = vmul.f32 %v1272, %v3617
    %v3670 = vmul.f32 %v1273, %v3512
    %v3671 = vmul.f32 %v1274, %v3617
    %v3672 = vmul.f32 %v1275, %v3512
    %v3673 = vmul.f32 %v1276, %v3617
    %v3674 = vmul.f32 %v1277, %v3512
    %v3675 = vmul.f32 %v1278, %v3617
    %v3676 = vmul.f32 %v1279, %v3512
    %v3677 = vmul.f32 %v1280, %v3617
    %v3678 = vmul.f32 %v1281, %v3512
    %v3679 = vmul.f32 %v1282, %v3617
    %v3680 = vmul.f32 %v1283, %v3512
    %v3681 = vmul.f32 %v1284, %v3617
    %v3682 = vmul.f32 %v1285, %v3512
    %v3683 = vmul.f32 %v1286, %v3617
    %v3684 = vmul.f32 %v1287, %v3512
    %v3685 = vmul.f32 %v1288, %v3617
    %v3686 = vmul.f32 %v1289, %v3512
    %v3687 = vmul.f32 %v1290, %v3617
    %v3688 = vmul.f32 %v1291, %v3512
    %v3689 = vmul.f32 %v1292, %v3617
    %v3690 = vmul.f32 %v1293, %v3512
    %v3691 = vmul.f32 %v1294, %v3617
    %v3692 = vmul.f32 %v1295, %v3512
    %v3693 = vmul.f32 %v1296, %v3617
    %v3694 = vmul.f32 %v1297, %v3512
    %v3695 = vmul.f32 %v1298, %v3617
    %v3696 = vmul.f32 %v1299, %v3512
    %v3697 = vmul.f32 %v1300, %v3617
    %v3698 = vmul.f32 %v1301, %v3512
    %v3699 = vmul.f32 %v1302, %v3617
    %v3700 = vmul.f32 %v1303, %v3512
    %v3701 = vmul.f32 %v1304, %v3617
    %v3702 = vmul.f32 %v1305, %v3512
    %v3703 = vmul.f32 %v1306, %v3617
    %v3704 = vmul.f32 %v1307, %v3512
    %v3705 = vmul.f32 %v1308, %v3617
    %v3706 = vmul.f32 %v1309, %v3512
    %v3707 = vmul.f32 %v1310, %v3617
    %v3708 = vmul.f32 %v1311, %v3512
    %v3709 = vmul.f32 %v1312, %v3617
    %v3710 = vmul.f32 %v1313, %v3512
    %v3711 = vmul.f32 %v1314, %v3617
    %v3712 = vmul.f32 %v1315, %v3512
    %v3713 = vmul.f32 %v1316, %v3617
    %v3714 = vmul.f32 %v1317, %v3512
    %v3715 = vmul.f32 %v1318, %v3617
    %v3716 = vmul.f32 %v1319, %v3512
    %v3717 = vmul.f32 %v1320, %v3617
    %v3718 = vsel %vm1613, %v3619, 0.0
    %v3719 = vadd.f32 %v3618, %v3718
    %3720 = vadd.xlane.f32.xlu0 %v3719
    %v3721 = vpop.xlane.xlu0 %3720
    %v3722 = vsel %vm1613, %v3621, 0.0
    %v3723 = vadd.f32 %v3620, %v3722
    %3724 = vadd.xlane.f32.xlu0 %v3723
    %v3725 = vpop.xlane.xlu0 %3724
    %v3726 = vsel %vm1613, %v3623, 0.0
    %v3727 = vadd.f32 %v3622, %v3726
    %3728 = vadd.xlane.f32.xlu0 %v3727
    %v3729 = vpop.xlane.xlu0 %3728
    %v3730 = vsel %vm1613, %v3625, 0.0
    %v3731 = vadd.f32 %v3624, %v3730
    %3732 = vadd.xlane.f32.xlu0 %v3731
    %v3733 = vpop.xlane.xlu0 %3732
    %v3734 = vsel %vm1613, %v3627, 0.0
    %v3735 = vadd.f32 %v3626, %v3734
    %3736 = vadd.xlane.f32.xlu0 %v3735
    %v3737 = vpop.xlane.xlu0 %3736
    %v3738 = vsel %vm1613, %v3629, 0.0
    %v3739 = vadd.f32 %v3628, %v3738
    %3740 = vadd.xlane.f32.xlu0 %v3739
    %v3741 = vpop.xlane.xlu0 %3740
    %v3742 = vsel %vm1613, %v3631, 0.0
    %v3743 = vadd.f32 %v3630, %v3742
    %3744 = vadd.xlane.f32.xlu0 %v3743
    %v3745 = vpop.xlane.xlu0 %3744
    %v3746 = vsel %vm1613, %v3633, 0.0
    %v3747 = vadd.f32 %v3632, %v3746
    %3748 = vadd.xlane.f32.xlu0 %v3747
    %v3749 = vpop.xlane.xlu0 %3748
    %v3750 = vsel %vm1613, %v3635, 0.0
    %v3751 = vadd.f32 %v3634, %v3750
    %3752 = vadd.xlane.f32.xlu0 %v3751
    %v3753 = vpop.xlane.xlu0 %3752
    %v3754 = vsel %vm1613, %v3637, 0.0
    %v3755 = vadd.f32 %v3636, %v3754
    %3756 = vadd.xlane.f32.xlu0 %v3755
    %v3757 = vpop.xlane.xlu0 %3756
    %v3758 = vsel %vm1613, %v3639, 0.0
    %v3759 = vadd.f32 %v3638, %v3758
    %3760 = vadd.xlane.f32.xlu0 %v3759
    %v3761 = vpop.xlane.xlu0 %3760
    %v3762 = vsel %vm1613, %v3641, 0.0
    %v3763 = vadd.f32 %v3640, %v3762
    %3764 = vadd.xlane.f32.xlu0 %v3763
    %v3765 = vpop.xlane.xlu0 %3764
    %v3766 = vsel %vm1613, %v3643, 0.0
    %v3767 = vadd.f32 %v3642, %v3766
    %3768 = vadd.xlane.f32.xlu0 %v3767
    %v3769 = vpop.xlane.xlu0 %3768
    %v3770 = vsel %vm1613, %v3645, 0.0
    %v3771 = vadd.f32 %v3644, %v3770
    %3772 = vadd.xlane.f32.xlu0 %v3771
    %v3773 = vpop.xlane.xlu0 %3772
    %v3774 = vsel %vm1613, %v3647, 0.0
    %v3775 = vadd.f32 %v3646, %v3774
    %3776 = vadd.xlane.f32.xlu0 %v3775
    %v3777 = vpop.xlane.xlu0 %3776
    %v3778 = vsel %vm1613, %v3649, 0.0
    %v3779 = vadd.f32 %v3648, %v3778
    %3780 = vadd.xlane.f32.xlu0 %v3779
    %v3781 = vpop.xlane.xlu0 %3780
    %v3782 = vsel %vm1613, %v3651, 0.0
    %v3783 = vadd.f32 %v3650, %v3782
    %3784 = vadd.xlane.f32.xlu0 %v3783
    %v3785 = vpop.xlane.xlu0 %3784
    %v3786 = vsel %vm1613, %v3653, 0.0
    %v3787 = vadd.f32 %v3652, %v3786
    %3788 = vadd.xlane.f32.xlu0 %v3787
    %v3789 = vpop.xlane.xlu0 %3788
    %v3790 = vsel %vm1613, %v3655, 0.0
    %v3791 = vadd.f32 %v3654, %v3790
    %3792 = vadd.xlane.f32.xlu0 %v3791
    %v3793 = vpop.xlane.xlu0 %3792
    %v3794 = vsel %vm1613, %v3657, 0.0
    %v3795 = vadd.f32 %v3656, %v3794
    %3796 = vadd.xlane.f32.xlu0 %v3795
    %v3797 = vpop.xlane.xlu0 %3796
    %v3798 = vsel %vm1613, %v3659, 0.0
    %v3799 = vadd.f32 %v3658, %v3798
    %3800 = vadd.xlane.f32.xlu0 %v3799
    %v3801 = vpop.xlane.xlu0 %3800
    %v3802 = vsel %vm1613, %v3661, 0.0
    %v3803 = vadd.f32 %v3660, %v3802
    %3804 = vadd.xlane.f32.xlu0 %v3803
    %v3805 = vpop.xlane.xlu0 %3804
    %v3806 = vsel %vm1613, %v3663, 0.0
    %v3807 = vadd.f32 %v3662, %v3806
    %3808 = vadd.xlane.f32.xlu0 %v3807
    %v3809 = vpop.xlane.xlu0 %3808
    %v3810 = vsel %vm1613, %v3665, 0.0
    %v3811 = vadd.f32 %v3664, %v3810
    %3812 = vadd.xlane.f32.xlu0 %v3811
    %v3813 = vpop.xlane.xlu0 %3812
    %v3814 = vsel %vm1613, %v3667, 0.0
    %v3815 = vadd.f32 %v3666, %v3814
    %3816 = vadd.xlane.f32.xlu0 %v3815
    %v3817 = vpop.xlane.xlu0 %3816
    %v3818 = vsel %vm1613, %v3669, 0.0
    %v3819 = vadd.f32 %v3668, %v3818
    %3820 = vadd.xlane.f32.xlu0 %v3819
    %v3821 = vpop.xlane.xlu0 %3820
    %v3822 = vsel %vm1613, %v3671, 0.0
    %v3823 = vadd.f32 %v3670, %v3822
    %3824 = vadd.xlane.f32.xlu0 %v3823
    %v3825 = vpop.xlane.xlu0 %3824
    %v3826 = vsel %vm1613, %v3673, 0.0
    %v3827 = vadd.f32 %v3672, %v3826
    %3828 = vadd.xlane.f32.xlu0 %v3827
    %v3829 = vpop.xlane.xlu0 %3828
    %v3830 = vsel %vm1613, %v3675, 0.0
    %v3831 = vadd.f32 %v3674, %v3830
    %3832 = vadd.xlane.f32.xlu0 %v3831
    %v3833 = vpop.xlane.xlu0 %3832
    %v3834 = vsel %vm1613, %v3677, 0.0
    %v3835 = vadd.f32 %v3676, %v3834
    %3836 = vadd.xlane.f32.xlu0 %v3835
    %v3837 = vpop.xlane.xlu0 %3836
    %v3838 = vsel %vm1613, %v3679, 0.0
    %v3839 = vadd.f32 %v3678, %v3838
    %3840 = vadd.xlane.f32.xlu0 %v3839
    %v3841 = vpop.xlane.xlu0 %3840
    %v3842 = vsel %vm1613, %v3681, 0.0
    %v3843 = vadd.f32 %v3680, %v3842
    %3844 = vadd.xlane.f32.xlu0 %v3843
    %v3845 = vpop.xlane.xlu0 %3844
    %v3846 = vsel %vm1613, %v3683, 0.0
    %v3847 = vadd.f32 %v3682, %v3846
    %3848 = vadd.xlane.f32.xlu0 %v3847
    %v3849 = vpop.xlane.xlu0 %3848
    %v3850 = vsel %vm1613, %v3685, 0.0
    %v3851 = vadd.f32 %v3684, %v3850
    %3852 = vadd.xlane.f32.xlu0 %v3851
    %v3853 = vpop.xlane.xlu0 %3852
    %v3854 = vsel %vm1613, %v3687, 0.0
    %v3855 = vadd.f32 %v3686, %v3854
    %3856 = vadd.xlane.f32.xlu0 %v3855
    %v3857 = vpop.xlane.xlu0 %3856
    %v3858 = vsel %vm1613, %v3689, 0.0
    %v3859 = vadd.f32 %v3688, %v3858
    %3860 = vadd.xlane.f32.xlu0 %v3859
    %v3861 = vpop.xlane.xlu0 %3860
    %v3862 = vsel %vm1613, %v3691, 0.0
    %v3863 = vadd.f32 %v3690, %v3862
    %3864 = vadd.xlane.f32.xlu0 %v3863
    %v3865 = vpop.xlane.xlu0 %3864
    %v3866 = vsel %vm1613, %v3693, 0.0
    %v3867 = vadd.f32 %v3692, %v3866
    %3868 = vadd.xlane.f32.xlu0 %v3867
    %v3869 = vpop.xlane.xlu0 %3868
    %v3870 = vsel %vm1613, %v3695, 0.0
    %v3871 = vadd.f32 %v3694, %v3870
    %3872 = vadd.xlane.f32.xlu0 %v3871
    %v3873 = vpop.xlane.xlu0 %3872
    %v3874 = vsel %vm1613, %v3697, 0.0
    %v3875 = vadd.f32 %v3696, %v3874
    %3876 = vadd.xlane.f32.xlu0 %v3875
    %v3877 = vpop.xlane.xlu0 %3876
    %v3878 = vsel %vm1613, %v3699, 0.0
    %v3879 = vadd.f32 %v3698, %v3878
    %3880 = vadd.xlane.f32.xlu0 %v3879
    %v3881 = vpop.xlane.xlu0 %3880
    %v3882 = vsel %vm1613, %v3701, 0.0
    %v3883 = vadd.f32 %v3700, %v3882
    %3884 = vadd.xlane.f32.xlu0 %v3883
    %v3885 = vpop.xlane.xlu0 %3884
    %v3886 = vsel %vm1613, %v3703, 0.0
    %v3887 = vadd.f32 %v3702, %v3886
    %3888 = vadd.xlane.f32.xlu0 %v3887
    %v3889 = vpop.xlane.xlu0 %3888
    %v3890 = vsel %vm1613, %v3705, 0.0
    %v3891 = vadd.f32 %v3704, %v3890
    %3892 = vadd.xlane.f32.xlu0 %v3891
    %v3893 = vpop.xlane.xlu0 %3892
    %v3894 = vsel %vm1613, %v3707, 0.0
    %v3895 = vadd.f32 %v3706, %v3894
    %3896 = vadd.xlane.f32.xlu0 %v3895
    %v3897 = vpop.xlane.xlu0 %3896
    %v3898 = vsel %vm1613, %v3709, 0.0
    %v3899 = vadd.f32 %v3708, %v3898
    %3900 = vadd.xlane.f32.xlu0 %v3899
    %v3901 = vpop.xlane.xlu0 %3900
    %v3902 = vsel %vm1613, %v3711, 0.0
    %v3903 = vadd.f32 %v3710, %v3902
    %3904 = vadd.xlane.f32.xlu0 %v3903
    %v3905 = vpop.xlane.xlu0 %3904
    %v3906 = vsel %vm1613, %v3713, 0.0
    %v3907 = vadd.f32 %v3712, %v3906
    %3908 = vadd.xlane.f32.xlu0 %v3907
    %v3909 = vpop.xlane.xlu0 %3908
    %v3910 = vsel %vm1613, %v3715, 0.0
    %v3911 = vadd.f32 %v3714, %v3910
    %3912 = vadd.xlane.f32.xlu0 %v3911
    %v3913 = vpop.xlane.xlu0 %3912
    %v3914 = vsel %vm1613, %v3717, 0.0
    %v3915 = vadd.f32 %v3716, %v3914
    %3916 = vadd.xlane.f32.xlu0 %v3915
    %v3917 = vpop.xlane.xlu0 %3916
    %v3918 = vsub.f32 %v3058, %v3721
    %v3919 = vsub.f32 %v3059, %v3725
    %v3920 = vsub.f32 %v3060, %v3729
    %v3921 = vsub.f32 %v3061, %v3733
    %v3922 = vsub.f32 %v3062, %v3737
    %v3923 = vsub.f32 %v3063, %v3741
    %v3924 = vsub.f32 %v3064, %v3745
    %v3925 = vsub.f32 %v3065, %v3749
    %v3926 = vsub.f32 %v3066, %v3753
    %v3927 = vsub.f32 %v3067, %v3757
    %v3928 = vsub.f32 %v3068, %v3761
    %v3929 = vsub.f32 %v3069, %v3765
    %v3930 = vsub.f32 %v3070, %v3769
    %v3931 = vsub.f32 %v3071, %v3773
    %v3932 = vsub.f32 %v3072, %v3777
    %v3933 = vsub.f32 %v3073, %v3781
    %v3934 = vsub.f32 %v3074, %v3785
    %v3935 = vsub.f32 %v3075, %v3789
    %v3936 = vsub.f32 %v3076, %v3793
    %v3937 = vsub.f32 %v3077, %v3797
    %v3938 = vsub.f32 %v3078, %v3801
    %v3939 = vsub.f32 %v3079, %v3805
    %v3940 = vsub.f32 %v3080, %v3809
    %v3941 = vsub.f32 %v3081, %v3813
    %v3942 = vsub.f32 %v3082, %v3817
    %v3943 = vsub.f32 %v3083, %v3821
    %v3944 = vsub.f32 %v3084, %v3825
    %v3945 = vsub.f32 %v3085, %v3829
    %v3946 = vsub.f32 %v3086, %v3833
    %v3947 = vsub.f32 %v3087, %v3837
    %v3948 = vsub.f32 %v3088, %v3841
    %v3949 = vsub.f32 %v3089, %v3845
    %v3950 = vsub.f32 %v3090, %v3849
    %v3951 = vsub.f32 %v3091, %v3853
    %v3952 = vsub.f32 %v3092, %v3857
    %v3953 = vsub.f32 %v3093, %v3861
    %v3954 = vsub.f32 %v3094, %v3865
    %v3955 = vsub.f32 %v3095, %v3869
    %v3956 = vsub.f32 %v3096, %v3873
    %v3957 = vsub.f32 %v3097, %v3877
    %v3958 = vsub.f32 %v3098, %v3881
    %v3959 = vsub.f32 %v3099, %v3885
    %v3960 = vsub.f32 %v3100, %v3889
    %v3961 = vsub.f32 %v3101, %v3893
    %v3962 = vsub.f32 %v3102, %v3897
    %v3963 = vsub.f32 %v3103, %v3901
    %v3964 = vsub.f32 %v3104, %v3905
    %v3965 = vsub.f32 %v3105, %v3909
    %v3966 = vsub.f32 %v3106, %v3913
    %v3967 = vsub.f32 %v3107, %v3917
    %v3968 = vmul.f32 %v3918, 1.442695
    %v3969 = vpow.pop %v3968
    %v3970 = vmul.f32 %v3919, 1.442695
    %v3971 = vpow.pop %v3970
    %v3972 = vmul.f32 %v3920, 1.442695
    %v3973 = vpow.pop %v3972
    %v3974 = vmul.f32 %v3921, 1.442695
    %v3975 = vpow.pop %v3974
    %v3976 = vmul.f32 %v3922, 1.442695
    %v3977 = vpow.pop %v3976
    %v3978 = vmul.f32 %v3923, 1.442695
    %v3979 = vpow.pop %v3978
    %v3980 = vmul.f32 %v3924, 1.442695
    %v3981 = vpow.pop %v3980
    %v3982 = vmul.f32 %v3925, 1.442695
    %v3983 = vpow.pop %v3982
    %v3984 = vmul.f32 %v3926, 1.442695
    %v3985 = vpow.pop %v3984
    %v3986 = vmul.f32 %v3927, 1.442695
    %v3987 = vpow.pop %v3986
    %v3988 = vmul.f32 %v3928, 1.442695
    %v3989 = vpow.pop %v3988
    %v3990 = vmul.f32 %v3929, 1.442695
    %v3991 = vpow.pop %v3990
    %v3992 = vmul.f32 %v3930, 1.442695
    %v3993 = vpow.pop %v3992
    %v3994 = vmul.f32 %v3931, 1.442695
    %v3995 = vpow.pop %v3994
    %v3996 = vmul.f32 %v3932, 1.442695
    %v3997 = vpow.pop %v3996
    %v3998 = vmul.f32 %v3933, 1.442695
    %v3999 = vpow.pop %v3998
    %v4000 = vmul.f32 %v3934, 1.442695
    %v4001 = vpow.pop %v4000
    %v4002 = vmul.f32 %v3935, 1.442695
    %v4003 = vpow.pop %v4002
    %v4004 = vmul.f32 %v3936, 1.442695
    %v4005 = vpow.pop %v4004
    %v4006 = vmul.f32 %v3937, 1.442695
    %v4007 = vpow.pop %v4006
    %v4008 = vmul.f32 %v3938, 1.442695
    %v4009 = vpow.pop %v4008
    %v4010 = vmul.f32 %v3939, 1.442695
    %v4011 = vpow.pop %v4010
    %v4012 = vmul.f32 %v3940, 1.442695
    %v4013 = vpow.pop %v4012
    %v4014 = vmul.f32 %v3941, 1.442695
    %v4015 = vpow.pop %v4014
    %v4016 = vmul.f32 %v3942, 1.442695
    %v4017 = vpow.pop %v4016
    %v4018 = vmul.f32 %v3943, 1.442695
    %v4019 = vpow.pop %v4018
    %v4020 = vmul.f32 %v3944, 1.442695
    %v4021 = vpow.pop %v4020
    %v4022 = vmul.f32 %v3945, 1.442695
    %v4023 = vpow.pop %v4022
    %v4024 = vmul.f32 %v3946, 1.442695
    %v4025 = vpow.pop %v4024
    %v4026 = vmul.f32 %v3947, 1.442695
    %v4027 = vpow.pop %v4026
    %v4028 = vmul.f32 %v3948, 1.442695
    %v4029 = vpow.pop %v4028
    %v4030 = vmul.f32 %v3949, 1.442695
    %v4031 = vpow.pop %v4030
    %v4032 = vmul.f32 %v3950, 1.442695
    %v4033 = vpow.pop %v4032
    %v4034 = vmul.f32 %v3951, 1.442695
    %v4035 = vpow.pop %v4034
    %v4036 = vmul.f32 %v3952, 1.442695
    %v4037 = vpow.pop %v4036
    %v4038 = vmul.f32 %v3953, 1.442695
    %v4039 = vpow.pop %v4038
    %v4040 = vmul.f32 %v3954, 1.442695
    %v4041 = vpow.pop %v4040
    %v4042 = vmul.f32 %v3955, 1.442695
    %v4043 = vpow.pop %v4042
    %v4044 = vmul.f32 %v3956, 1.442695
    %v4045 = vpow.pop %v4044
    %v4046 = vmul.f32 %v3957, 1.442695
    %v4047 = vpow.pop %v4046
    %v4048 = vmul.f32 %v3958, 1.442695
    %v4049 = vpow.pop %v4048
    %v4050 = vmul.f32 %v3959, 1.442695
    %v4051 = vpow.pop %v4050
    %v4052 = vmul.f32 %v3960, 1.442695
    %v4053 = vpow.pop %v4052
    %v4054 = vmul.f32 %v3961, 1.442695
    %v4055 = vpow.pop %v4054
    %v4056 = vmul.f32 %v3962, 1.442695
    %v4057 = vpow.pop %v4056
    %v4058 = vmul.f32 %v3963, 1.442695
    %v4059 = vpow.pop %v4058
    %v4060 = vmul.f32 %v3964, 1.442695
    %v4061 = vpow.pop %v4060
    %v4062 = vmul.f32 %v3965, 1.442695
    %v4063 = vpow.pop %v4062
    %v4064 = vmul.f32 %v3966, 1.442695
    %v4065 = vpow.pop %v4064
    %v4066 = vmul.f32 %v3967, 1.442695
    %v4067 = vpow.pop %v4066
    %vm4068 = vcmask 130048
    %v4070 = vsel %vm4068, %v1524, 0
    %v4073 = vsel %vm4068, %v1528, 0
    %v4076 = vsel %vm4068, %v1532, 0
    %v4079 = vsel %vm4068, %v1536, 0
    %v4082 = vsel %vm4068, %v1540, 0
    %v4085 = vsel %vm4068, %v1544, 0
    %v4088 = vsel %vm4068, %v1548, 0
    %v4091 = vsel %vm4068, %v1552, 0
    %v4094 = vsel %vm4068, %v1556, 0
    %v4097 = vsel %vm4068, %v1560, 0
    %v4100 = vsel %vm4068, %v1564, 0
    %v4103 = vsel %vm4068, %v1568, 0
    %v4106 = vsel %vm4068, %v1572, 0
    %v4109 = vsel %vm4068, %v1576, 0
    %v4112 = vsel %vm4068, %v1580, 0
    %v4115 = vsel %vm4068, %v1584, 0
    %v4118 = vsel %vm4068, %v1588, 0
    %v4121 = vsel %vm4068, %v1592, 0
    %v4124 = vsel %vm4068, %v1596, 0
    %v4127 = vsel %vm4068, %v1600, 0
    %v4130 = vsel %vm4068, %v1604, 0
    %v4133 = vsel %vm4068, %v1608, 0
    %v4136 = vsel %vm4068, %v1612, 0
    %4138 = vmatprep.subr.mxu0 0.0
    %4139 = vmatpush1.msra.mxu0 %v3969
    %4140 = vmatprep.subr.mxu0 0.0
    %4141 = vmatpush1.msra.mxu0 %v3971
    %4142 = vmatprep.subr.mxu0 0.0
    %4143 = vmatpush1.msra.mxu0 %v3973
    %4144 = vmatprep.subr.mxu0 0.0
    %4145 = vmatpush1.msra.mxu0 %v3975
    %4146 = vmatprep.subr.mxu0 0.0
    %4147 = vmatpush1.msra.mxu0 %v3977
    %4148 = vmatprep.subr.mxu0 0.0
    %4149 = vmatpush1.msra.mxu0 %v3979
    %4150 = vmatprep.subr.mxu0 0.0
    %4151 = vmatpush1.msra.mxu0 %v3981
    %4152 = vmatprep.subr.mxu0 0.0
    %4153 = vmatpush1.msra.mxu0 %v3983
    %4154 = vmatprep.subr.mxu0 0.0
    %4155 = vmatpush1.msra.mxu0 %v3985
    %4156 = vmatprep.subr.mxu0 0.0
    %4157 = vmatpush1.msra.mxu0 %v3987
    %4158 = vmatprep.subr.mxu0 0.0
    %4159 = vmatpush1.msra.mxu0 %v3989
    %4160 = vmatprep.subr.mxu0 0.0
    %4161 = vmatpush1.msra.mxu0 %v3991
    %4162 = vmatprep.subr.mxu0 0.0
    %4163 = vmatpush1.msra.mxu0 %v3993
    %4164 = vmatprep.subr.mxu0 0.0
    %4165 = vmatpush1.msra.mxu0 %v3995
    %4166 = vmatprep.subr.mxu0 0.0
    %4167 = vmatpush1.msra.mxu0 %v3997
    %4168 = vmatprep.subr.mxu0 0.0
    %4169 = vmatpush1.msra.mxu0 %v3999
    %4170 = vmatprep.subr.mxu0 0.0
    %4171 = vmatpush1.msra.mxu0 %v4001
    %4172 = vmatprep.subr.mxu0 0.0
    %4173 = vmatpush1.msra.mxu0 %v4003
    %4174 = vmatprep.subr.mxu0 0.0
    %4175 = vmatpush1.msra.mxu0 %v4005
    %4176 = vmatprep.subr.mxu0 0.0
    %4177 = vmatpush1.msra.mxu0 %v4007
    %4178 = vmatprep.subr.mxu0 0.0
    %4179 = vmatpush1.msra.mxu0 %v4009
    %4180 = vmatprep.subr.mxu0 0.0
    %4181 = vmatpush1.msra.mxu0 %v4011
    %4182 = vmatprep.subr.mxu0 0.0
    %4183 = vmatpush1.msra.mxu0 %v4013
    %4184 = vmatprep.subr.mxu0 0.0
    %4185 = vmatpush1.msra.mxu0 %v4015
    %4186 = vmatprep.subr.mxu0 0.0
    %4187 = vmatpush1.msra.mxu0 %v4017
    %4188 = vmatprep.subr.mxu0 0.0
    %4189 = vmatpush1.msra.mxu0 %v4019
    %4190 = vmatprep.subr.mxu0 0.0
    %4191 = vmatpush1.msra.mxu0 %v4021
    %4192 = vmatprep.subr.mxu0 0.0
    %4193 = vmatpush1.msra.mxu0 %v4023
    %4194 = vmatprep.subr.mxu0 0.0
    %4195 = vmatpush1.msra.mxu0 %v4025
    %4196 = vmatprep.subr.mxu0 0.0
    %4197 = vmatpush1.msra.mxu0 %v4027
    %4198 = vmatprep.subr.mxu0 0.0
    %4199 = vmatpush1.msra.mxu0 %v4029
    %4200 = vmatprep.subr.mxu0 0.0
    %4201 = vmatpush1.msra.mxu0 %v4031
    %4202 = vmatprep.mubr.f32.mxu0 %v1522
    %4203 = vmatmul.mubr.f32.gmra.mrb[0].mxu0 %v1521
    %v4204 = vpop.f32.mrb[0].mxu0
    %v4205 = vadd.f32 0.0, %v4204
    %v4206 = vpop.f32.mrb[0].mxu0
    %4207 = vmatprep.mubr.f32.mxu0 %v1526
    %4208 = vmatmul.mubr.f32.gmra.mrb[0].mxu0 %v1525
    %v4209 = vpop.f32.mrb[0].mxu0
    %v4210 = vadd.f32 0.0, %v4209
    %v4211 = vpop.f32.mrb[0].mxu0
    %4212 = vmatprep.mubr.f32.mxu0 %v1530
    %4213 = vmatmul.mubr.f32.gmra.mrb[0].mxu0 %v1529
    %v4214 = vpop.f32.mrb[0].mxu0
    %v4215 = vadd.f32 0.0, %v4214
    %v4216 = vpop.f32.mrb[0].mxu0
    %4217 = vmatprep.mubr.f32.mxu0 %v1534
    %4218 = vmatmul.mubr.f32.gmra.mrb[0].mxu0 %v1533
    %v4219 = vpop.f32.mrb[0].mxu0
    %v4220 = vadd.f32 0.0, %v4219
    %v4221 = vpop.f32.mrb[0].mxu0
    %4222 = vmatprep.mubr.f32.mxu0 %v1538
    %4223 = vmatmul.mubr.f32.gmra.mrb[0].mxu0 %v1537
    %v4224 = vpop.f32.mrb[0].mxu0
    %v4225 = vadd.f32 0.0, %v4224
    %v4226 = vpop.f32.mrb[0].mxu0
    %4227 = vmatprep.mubr.f32.mxu0 %v1542
    %4228 = vmatmul.mubr.f32.gmra.mrb[0].mxu0 %v1541
    %v4229 = vpop.f32.mrb[0].mxu0
    %v4230 = vadd.f32 0.0, %v4229
    %v4231 = vpop.f32.mrb[0].mxu0
    %4232 = vmatprep.mubr.f32.mxu0 %v1546
    %4233 = vmatmul.mubr.f32.gmra.mrb[0].mxu0 %v1545
    %v4234 = vpop.f32.mrb[0].mxu0
    %v4235 = vadd.f32 0.0, %v4234
    %v4236 = vpop.f32.mrb[0].mxu0
    %4237 = vmatprep.mubr.f32.mxu0 %v1550
    %4238 = vmatmul.mubr.f32.gmra.mrb[0].mxu0 %v1549
    %v4239 = vpop.f32.mrb[0].mxu0
    %v4240 = vadd.f32 0.0, %v4239
    %v4241 = vpop.f32.mrb[0].mxu0
    %4242 = vmatprep.mubr.f32.mxu0 %v1554
    %4243 = vmatmul.mubr.f32.gmra.mrb[0].mxu0 %v1553
    %v4244 = vpop.f32.mrb[0].mxu0
    %v4245 = vadd.f32 0.0, %v4244
    %v4246 = vpop.f32.mrb[0].mxu0
    %4247 = vmatprep.mubr.f32.mxu0 %v1558
    %4248 = vmatmul.mubr.f32.gmra.mrb[0].mxu0 %v1557
    %v4249 = vpop.f32.mrb[0].mxu0
    %v4250 = vadd.f32 0.0, %v4249
    %v4251 = vpop.f32.mrb[0].mxu0
    %4252 = vmatprep.mubr.f32.mxu0 %v1562
    %4253 = vmatmul.mubr.f32.gmra.mrb[0].mxu0 %v1561
    %v4254 = vpop.f32.mrb[0].mxu0
    %v4255 = vadd.f32 0.0, %v4254
    %v4256 = vpop.f32.mrb[0].mxu0
    %4257 = vmatprep.mubr.f32.mxu0 %v1566
    %4258 = vmatmul.mubr.f32.gmra.mrb[0].mxu0 %v1565
    %v4259 = vpop.f32.mrb[0].mxu0
    %v4260 = vadd.f32 0.0, %v4259
    %v4261 = vpop.f32.mrb[0].mxu0
    %4262 = vmatprep.mubr.f32.mxu0 %v1570
    %4263 = vmatmul.mubr.f32.gmra.mrb[0].mxu0 %v1569
    %v4264 = vpop.f32.mrb[0].mxu0
    %v4265 = vadd.f32 0.0, %v4264
    %v4266 = vpop.f32.mrb[0].mxu0
    %4267 = vmatprep.mubr.f32.mxu0 %v1574
    %4268 = vmatmul.mubr.f32.gmra.mrb[0].mxu0 %v1573
    %v4269 = vpop.f32.mrb[0].mxu0
    %v4270 = vadd.f32 0.0, %v4269
    %v4271 = vpop.f32.mrb[0].mxu0
    %4272 = vmatprep.mubr.f32.mxu0 %v1578
    %4273 = vmatmul.mubr.f32.gmra.mrb[0].mxu0 %v1577
    %v4274 = vpop.f32.mrb[0].mxu0
    %v4275 = vadd.f32 0.0, %v4274
    %v4276 = vpop.f32.mrb[0].mxu0
    %4277 = vmatprep.mubr.f32.mxu0 %v1582
    %4278 = vmatmul.mubr.f32.gmra.mrb[0].mxu0 %v1581
    %v4279 = vpop.f32.mrb[0].mxu0
    %v4280 = vadd.f32 0.0, %v4279
    %v4281 = vpop.f32.mrb[0].mxu0
    %4282 = vmatprep.mubr.f32.mxu0 %v1586
    %4283 = vmatmul.mubr.f32.gmra.mrb[0].mxu0 %v1585
    %v4284 = vpop.f32.mrb[0].mxu0
    %v4285 = vadd.f32 0.0, %v4284
    %v4286 = vpop.f32.mrb[0].mxu0
    %4287 = vmatprep.mubr.f32.mxu0 %v1590
    %4288 = vmatmul.mubr.f32.gmra.mrb[0].mxu0 %v1589
    %v4289 = vpop.f32.mrb[0].mxu0
    %v4290 = vadd.f32 0.0, %v4289
    %v4291 = vpop.f32.mrb[0].mxu0
    %4292 = vmatprep.mubr.f32.mxu0 %v1594
    %4293 = vmatmul.mubr.f32.gmra.mrb[0].mxu0 %v1593
    %v4294 = vpop.f32.mrb[0].mxu0
    %v4295 = vadd.f32 0.0, %v4294
    %v4296 = vpop.f32.mrb[0].mxu0
    %4297 = vmatprep.mubr.f32.mxu0 %v1598
    %4298 = vmatmul.mubr.f32.gmra.mrb[0].mxu0 %v1597
    %v4299 = vpop.f32.mrb[0].mxu0
    %v4300 = vadd.f32 0.0, %v4299
    %v4301 = vpop.f32.mrb[0].mxu0
    %4302 = vmatprep.mubr.f32.mxu0 %v1602
    %4303 = vmatmul.mubr.f32.gmra.mrb[0].mxu0 %v1601
    %v4304 = vpop.f32.mrb[0].mxu0
    %v4305 = vadd.f32 0.0, %v4304
    %v4306 = vpop.f32.mrb[0].mxu0
    %4307 = vmatprep.mubr.f32.mxu0 %v1606
    %4308 = vmatmul.mubr.f32.gmra.mrb[0].mxu0 %v1605
    %v4309 = vpop.f32.mrb[0].mxu0
    %v4310 = vadd.f32 0.0, %v4309
    %v4311 = vpop.f32.mrb[0].mxu0
    %4312 = vmatprep.mubr.f32.mxu0 %v1610
    %4313 = vmatmul.mubr.f32.gmra.mrb[0].mxu0 %v1609
    %v4314 = vpop.f32.mrb[0].mxu0
    %v4315 = vadd.f32 0.0, %v4314
    %v4316 = vpop.f32.mrb[0].mxu0
    %4317 = vdwg.mxu0
    %4318 = vmatprep.subr.mxu0 0.0
    %4319 = vmatpush1.msra.mxu0 %v4033
    %4320 = vmatprep.subr.mxu0 0.0
    %4321 = vmatpush1.msra.mxu0 %v4035
    %4322 = vmatprep.subr.mxu0 0.0
    %4323 = vmatpush1.msra.mxu0 %v4037
    %4324 = vmatprep.subr.mxu0 0.0
    %4325 = vmatpush1.msra.mxu0 %v4039
    %4326 = vmatprep.subr.mxu0 0.0
    %4327 = vmatpush1.msra.mxu0 %v4041
    %4328 = vmatprep.subr.mxu0 0.0
    %4329 = vmatpush1.msra.mxu0 %v4043
    %4330 = vmatprep.subr.mxu0 0.0
    %4331 = vmatpush1.msra.mxu0 %v4045
    %4332 = vmatprep.subr.mxu0 0.0
    %4333 = vmatpush1.msra.mxu0 %v4047
    %4334 = vmatprep.subr.mxu0 0.0
    %4335 = vmatpush1.msra.mxu0 %v4049
    %4336 = vmatprep.subr.mxu0 0.0
    %4337 = vmatpush1.msra.mxu0 %v4051
    %4338 = vmatprep.subr.mxu0 0.0
    %4339 = vmatpush1.msra.mxu0 %v4053
    %4340 = vmatprep.subr.mxu0 0.0
    %4341 = vmatpush1.msra.mxu0 %v4055
    %4342 = vmatprep.subr.mxu0 0.0
    %4343 = vmatpush1.msra.mxu0 %v4057
    %4344 = vmatprep.subr.mxu0 0.0
    %4345 = vmatpush1.msra.mxu0 %v4059
    %4346 = vmatprep.subr.mxu0 0.0
    %4347 = vmatpush1.msra.mxu0 %v4061
    %4348 = vmatprep.subr.mxu0 0.0
    %4349 = vmatpush1.msra.mxu0 %v4063
    %4350 = vmatprep.subr.mxu0 0.0
    %4351 = vmatpush1.msra.mxu0 %v4065
    %4352 = vmatprep.subr.mxu0 0.0
    %4353 = vmatpush1.msra.mxu0 %v4067
    %4354 = vmatprep.subr.mxu0 0.0
    %4355 = vmatpush1.msra.mxu0 0.0
    %4356 = vmatprep.subr.mxu0 0.0
    %4357 = vmatpush1.msra.mxu0 0.0
    %4358 = vmatprep.subr.mxu0 0.0
    %4359 = vmatpush1.msra.mxu0 0.0
    %4360 = vmatprep.subr.mxu0 0.0
    %4361 = vmatpush1.msra.mxu0 0.0
    %4362 = vmatprep.subr.mxu0 0.0
    %4363 = vmatpush1.msra.mxu0 0.0
    %4364 = vmatprep.subr.mxu0 0.0
    %4365 = vmatpush1.msra.mxu0 0.0
    %4366 = vmatprep.subr.mxu0 0.0
    %4367 = vmatpush1.msra.mxu0 0.0
    %4368 = vmatprep.subr.mxu0 0.0
    %4369 = vmatpush1.msra.mxu0 0.0
    %4370 = vmatprep.subr.mxu0 0.0
    %4371 = vmatpush1.msra.mxu0 0.0
    %4372 = vmatprep.subr.mxu0 0.0
    %4373 = vmatpush1.msra.mxu0 0.0
    %4374 = vmatprep.subr.mxu0 0.0
    %4375 = vmatpush1.msra.mxu0 0.0
    %4376 = vmatprep.subr.mxu0 0.0
    %4377 = vmatpush1.msra.mxu0 0.0
    %4378 = vmatprep.subr.mxu0 0.0
    %4379 = vmatpush1.msra.mxu0 0.0
    %4380 = vmatprep.subr.mxu0 0.0
    %4381 = vmatpush1.msra.mxu0 0.0
    %4382 = vmatprep.mubr.f32.mxu0 %v4070
    %4383 = vmatmul.mubr.f32.gmra.mrb[0].mxu0 %v1523
    %v4384 = vpop.f32.mrb[0].mxu0
    %v4385 = vadd.f32 %v4205, %v4384
    %v4386 = vpop.f32.mrb[0].mxu0
    %4387 = vmatprep.mubr.f32.mxu0 %v4073
    %4388 = vmatmul.mubr.f32.gmra.mrb[0].mxu0 %v1527
    %v4389 = vpop.f32.mrb[0].mxu0
    %v4390 = vadd.f32 %v4210, %v4389
    %v4391 = vpop.f32.mrb[0].mxu0
    %4392 = vmatprep.mubr.f32.mxu0 %v4076
    %4393 = vmatmul.mubr.f32.gmra.mrb[0].mxu0 %v1531
    %v4394 = vpop.f32.mrb[0].mxu0
    %v4395 = vadd.f32 %v4215, %v4394
    %v4396 = vpop.f32.mrb[0].mxu0
    %4397 = vmatprep.mubr.f32.mxu0 %v4079
    %4398 = vmatmul.mubr.f32.gmra.mrb[0].mxu0 %v1535
    %v4399 = vpop.f32.mrb[0].mxu0
    %v4400 = vadd.f32 %v4220, %v4399
    %v4401 = vpop.f32.mrb[0].mxu0
    %4402 = vmatprep.mubr.f32.mxu0 %v4082
    %4403 = vmatmul.mubr.f32.gmra.mrb[0].mxu0 %v1539
    %v4404 = vpop.f32.mrb[0].mxu0
    %v4405 = vadd.f32 %v4225, %v4404
    %v4406 = vpop.f32.mrb[0].mxu0
    %4407 = vmatprep.mubr.f32.mxu0 %v4085
    %4408 = vmatmul.mubr.f32.gmra.mrb[0].mxu0 %v1543
    %v4409 = vpop.f32.mrb[0].mxu0
    %v4410 = vadd.f32 %v4230, %v4409
    %v4411 = vpop.f32.mrb[0].mxu0
    %4412 = vmatprep.mubr.f32.mxu0 %v4088
    %4413 = vmatmul.mubr.f32.gmra.mrb[0].mxu0 %v1547
    %v4414 = vpop.f32.mrb[0].mxu0
    %v4415 = vadd.f32 %v4235, %v4414
    %v4416 = vpop.f32.mrb[0].mxu0
    %4417 = vmatprep.mubr.f32.mxu0 %v4091
    %4418 = vmatmul.mubr.f32.gmra.mrb[0].mxu0 %v1551
    %v4419 = vpop.f32.mrb[0].mxu0
    %v4420 = vadd.f32 %v4240, %v4419
    %v4421 = vpop.f32.mrb[0].mxu0
    %4422 = vmatprep.mubr.f32.mxu0 %v4094
    %4423 = vmatmul.mubr.f32.gmra.mrb[0].mxu0 %v1555
    %v4424 = vpop.f32.mrb[0].mxu0
    %v4425 = vadd.f32 %v4245, %v4424
    %v4426 = vpop.f32.mrb[0].mxu0
    %4427 = vmatprep.mubr.f32.mxu0 %v4097
    %4428 = vmatmul.mubr.f32.gmra.mrb[0].mxu0 %v1559
    %v4429 = vpop.f32.mrb[0].mxu0
    %v4430 = vadd.f32 %v4250, %v4429
    %v4431 = vpop.f32.mrb[0].mxu0
    %4432 = vmatprep.mubr.f32.mxu0 %v4100
    %4433 = vmatmul.mubr.f32.gmra.mrb[0].mxu0 %v1563
    %v4434 = vpop.f32.mrb[0].mxu0
    %v4435 = vadd.f32 %v4255, %v4434
    %v4436 = vpop.f32.mrb[0].mxu0
    %4437 = vmatprep.mubr.f32.mxu0 %v4103
    %4438 = vmatmul.mubr.f32.gmra.mrb[0].mxu0 %v1567
    %v4439 = vpop.f32.mrb[0].mxu0
    %v4440 = vadd.f32 %v4260, %v4439
    %v4441 = vpop.f32.mrb[0].mxu0
    %4442 = vmatprep.mubr.f32.mxu0 %v4106
    %4443 = vmatmul.mubr.f32.gmra.mrb[0].mxu0 %v1571
    %v4444 = vpop.f32.mrb[0].mxu0
    %v4445 = vadd.f32 %v4265, %v4444
    %v4446 = vpop.f32.mrb[0].mxu0
    %4447 = vmatprep.mubr.f32.mxu0 %v4109
    %4448 = vmatmul.mubr.f32.gmra.mrb[0].mxu0 %v1575
    %v4449 = vpop.f32.mrb[0].mxu0
    %v4450 = vadd.f32 %v4270, %v4449
    %v4451 = vpop.f32.mrb[0].mxu0
    %4452 = vmatprep.mubr.f32.mxu0 %v4112
    %4453 = vmatmul.mubr.f32.gmra.mrb[0].mxu0 %v1579
    %v4454 = vpop.f32.mrb[0].mxu0
    %v4455 = vadd.f32 %v4275, %v4454
    %v4456 = vpop.f32.mrb[0].mxu0
    %4457 = vmatprep.mubr.f32.mxu0 %v4115
    %4458 = vmatmul.mubr.f32.gmra.mrb[0].mxu0 %v1583
    %v4459 = vpop.f32.mrb[0].mxu0
    %v4460 = vadd.f32 %v4280, %v4459
    %v4461 = vpop.f32.mrb[0].mxu0
    %4462 = vmatprep.mubr.f32.mxu0 %v4118
    %4463 = vmatmul.mubr.f32.gmra.mrb[0].mxu0 %v1587
    %v4464 = vpop.f32.mrb[0].mxu0
    %v4465 = vadd.f32 %v4285, %v4464
    %v4466 = vpop.f32.mrb[0].mxu0
    %4467 = vmatprep.mubr.f32.mxu0 %v4121
    %4468 = vmatmul.mubr.f32.gmra.mrb[0].mxu0 %v1591
    %v4469 = vpop.f32.mrb[0].mxu0
    %v4470 = vadd.f32 %v4290, %v4469
    %v4471 = vpop.f32.mrb[0].mxu0
    %4472 = vmatprep.mubr.f32.mxu0 %v4124
    %4473 = vmatmul.mubr.f32.gmra.mrb[0].mxu0 %v1595
    %v4474 = vpop.f32.mrb[0].mxu0
    %v4475 = vadd.f32 %v4295, %v4474
    %v4476 = vpop.f32.mrb[0].mxu0
    %4477 = vmatprep.mubr.f32.mxu0 %v4127
    %4478 = vmatmul.mubr.f32.gmra.mrb[0].mxu0 %v1599
    %v4479 = vpop.f32.mrb[0].mxu0
    %v4480 = vadd.f32 %v4300, %v4479
    %v4481 = vpop.f32.mrb[0].mxu0
    %4482 = vmatprep.mubr.f32.mxu0 %v4130
    %4483 = vmatmul.mubr.f32.gmra.mrb[0].mxu0 %v1603
    %v4484 = vpop.f32.mrb[0].mxu0
    %v4485 = vadd.f32 %v4305, %v4484
    %v4486 = vpop.f32.mrb[0].mxu0
    %4487 = vmatprep.mubr.f32.mxu0 %v4133
    %4488 = vmatmul.mubr.f32.gmra.mrb[0].mxu0 %v1607
    %v4489 = vpop.f32.mrb[0].mxu0
    %v4490 = vadd.f32 %v4310, %v4489
    %v4491 = vpop.f32.mrb[0].mxu0
    %4492 = vmatprep.mubr.f32.mxu0 %v4136
    %4493 = vmatmul.mubr.f32.gmra.mrb[0].mxu0 %v1611
    %v4494 = vpop.f32.mrb[0].mxu0
    %v4495 = vadd.f32 %v4315, %v4494
    %v4496 = vpop.f32.mrb[0].mxu0
    %4497 = vdwg.mxu0
    %v4499 = vsel %vm1764, %v4495, 0
    %4501 = vmatprep.subr.mxu0 0.0
    %4502 = vmatpush1.msra.mxu0 %v4385
    %4503 = vmatprep.subr.mxu0 0.0
    %4504 = vmatpush1.msra.mxu0 %v4390
    %4505 = vmatprep.subr.mxu0 0.0
    %4506 = vmatpush1.msra.mxu0 %v4395
    %4507 = vmatprep.subr.mxu0 0.0
    %4508 = vmatpush1.msra.mxu0 %v4400
    %4509 = vmatprep.subr.mxu0 0.0
    %4510 = vmatpush1.msra.mxu0 %v4405
    %4511 = vmatprep.subr.mxu0 0.0
    %4512 = vmatpush1.msra.mxu0 %v4410
    %4513 = vmatprep.subr.mxu0 0.0
    %4514 = vmatpush1.msra.mxu0 %v4415
    %4515 = vmatprep.subr.mxu0 0.0
    %4516 = vmatpush1.msra.mxu0 %v4420
    %4517 = vmatprep.subr.mxu0 0.0
    %4518 = vmatpush1.msra.mxu0 %v4425
    %4519 = vmatprep.subr.mxu0 0.0
    %4520 = vmatpush1.msra.mxu0 %v4430
    %4521 = vmatprep.subr.mxu0 0.0
    %4522 = vmatpush1.msra.mxu0 %v4435
    %4523 = vmatprep.subr.mxu0 0.0
    %4524 = vmatpush1.msra.mxu0 %v4440
    %4525 = vmatprep.subr.mxu0 0.0
    %4526 = vmatpush1.msra.mxu0 %v4445
    %4527 = vmatprep.subr.mxu0 0.0
    %4528 = vmatpush1.msra.mxu0 %v4450
    %4529 = vmatprep.subr.mxu0 0.0
    %4530 = vmatpush1.msra.mxu0 %v4455
    %4531 = vmatprep.subr.mxu0 0.0
    %4532 = vmatpush1.msra.mxu0 %v4460
    %4533 = vmatprep.subr.mxu0 0.0
    %4534 = vmatpush1.msra.mxu0 %v4465
    %4535 = vmatprep.subr.mxu0 0.0
    %4536 = vmatpush1.msra.mxu0 %v4470
    %4537 = vmatprep.subr.mxu0 0.0
    %4538 = vmatpush1.msra.mxu0 %v4475
    %4539 = vmatprep.subr.mxu0 0.0
    %4540 = vmatpush1.msra.mxu0 %v4480
    %4541 = vmatprep.subr.mxu0 0.0
    %4542 = vmatpush1.msra.mxu0 %v4485
    %4543 = vmatprep.subr.mxu0 0.0
    %4544 = vmatpush1.msra.mxu0 %v4490
    %4545 = vmatprep.subr.mxu0 0.0
    %4546 = vmatpush1.msra.mxu0 %v4499
    %4547 = vmatprep.subr.mxu0 0.0
    %4548 = vmatpush1.msra.mxu0 0.0
    %4549 = vmatprep.subr.mxu0 0.0
    %4550 = vmatpush1.msra.mxu0 0.0
    %4551 = vmatprep.subr.mxu0 0.0
    %4552 = vmatpush1.msra.mxu0 0.0
    %4553 = vmatprep.subr.mxu0 0.0
    %4554 = vmatpush1.msra.mxu0 0.0
    %4555 = vmatprep.subr.mxu0 0.0
    %4556 = vmatpush1.msra.mxu0 0.0
    %4557 = vmatprep.subr.mxu0 0.0
    %4558 = vmatpush1.msra.mxu0 0.0
    %4559 = vmatprep.subr.mxu0 0.0
    %4560 = vmatpush1.msra.mxu0 0.0
    %4561 = vmatprep.subr.mxu0 0.0
    %4562 = vmatpush1.msra.mxu0 0.0
    %4563 = vmatprep.subr.mxu0 0.0
    %4564 = vmatpush1.msra.mxu0 0.0
    %4565 = vmatprep.mubr.f32.mxu0 %v2387
    %4566 = vmatmul.mubr.f32.gmra.mrb[0].mxu0 %v1221
    %v4567 = vpop.f32.mrb[0].mxu0
    %v4568 = vadd.f32 1e-16, %v4567
    %v4569 = vpop.f32.mrb[0].mxu0
    %4570 = vmatprep.mubr.f32.mxu0 %v2390
    %4571 = vmatmul.mubr.f32.gmra.mrb[0].mxu0 %v1223
    %v4572 = vpop.f32.mrb[0].mxu0
    %v4573 = vadd.f32 1e-16, %v4572
    %v4574 = vpop.f32.mrb[0].mxu0
    %4575 = vmatprep.mubr.f32.mxu0 %v2393
    %4576 = vmatmul.mubr.f32.gmra.mrb[0].mxu0 %v1225
    %v4577 = vpop.f32.mrb[0].mxu0
    %v4578 = vadd.f32 1e-16, %v4577
    %v4579 = vpop.f32.mrb[0].mxu0
    %4580 = vmatprep.mubr.f32.mxu0 %v2396
    %4581 = vmatmul.mubr.f32.gmra.mrb[0].mxu0 %v1227
    %v4582 = vpop.f32.mrb[0].mxu0
    %v4583 = vadd.f32 1e-16, %v4582
    %v4584 = vpop.f32.mrb[0].mxu0
    %4585 = vmatprep.mubr.f32.mxu0 %v2399
    %4586 = vmatmul.mubr.f32.gmra.mrb[0].mxu0 %v1229
    %v4587 = vpop.f32.mrb[0].mxu0
    %v4588 = vadd.f32 1e-16, %v4587
    %v4589 = vpop.f32.mrb[0].mxu0
    %4590 = vmatprep.mubr.f32.mxu0 %v2402
    %4591 = vmatmul.mubr.f32.gmra.mrb[0].mxu0 %v1231
    %v4592 = vpop.f32.mrb[0].mxu0
    %v4593 = vadd.f32 1e-16, %v4592
    %v4594 = vpop.f32.mrb[0].mxu0
    %4595 = vmatprep.mubr.f32.mxu0 %v2405
    %4596 = vmatmul.mubr.f32.gmra.mrb[0].mxu0 %v1233
    %v4597 = vpop.f32.mrb[0].mxu0
    %v4598 = vadd.f32 1e-16, %v4597
    %v4599 = vpop.f32.mrb[0].mxu0
    %4600 = vmatprep.mubr.f32.mxu0 %v2408
    %4601 = vmatmul.mubr.f32.gmra.mrb[0].mxu0 %v1235
    %v4602 = vpop.f32.mrb[0].mxu0
    %v4603 = vadd.f32 1e-16, %v4602
    %v4604 = vpop.f32.mrb[0].mxu0
    %4605 = vmatprep.mubr.f32.mxu0 %v2411
    %4606 = vmatmul.mubr.f32.gmra.mrb[0].mxu0 %v1237
    %v4607 = vpop.f32.mrb[0].mxu0
    %v4608 = vadd.f32 1e-16, %v4607
    %v4609 = vpop.f32.mrb[0].mxu0
    %4610 = vmatprep.mubr.f32.mxu0 %v2414
    %4611 = vmatmul.mubr.f32.gmra.mrb[0].mxu0 %v1239
    %v4612 = vpop.f32.mrb[0].mxu0
    %v4613 = vadd.f32 1e-16, %v4612
    %v4614 = vpop.f32.mrb[0].mxu0
    %4615 = vmatprep.mubr.f32.mxu0 %v2417
    %4616 = vmatmul.mubr.f32.gmra.mrb[0].mxu0 %v1241
    %v4617 = vpop.f32.mrb[0].mxu0
    %v4618 = vadd.f32 1e-16, %v4617
    %v4619 = vpop.f32.mrb[0].mxu0
    %4620 = vmatprep.mubr.f32.mxu0 %v2420
    %4621 = vmatmul.mubr.f32.gmra.mrb[0].mxu0 %v1243
    %v4622 = vpop.f32.mrb[0].mxu0
    %v4623 = vadd.f32 1e-16, %v4622
    %v4624 = vpop.f32.mrb[0].mxu0
    %4625 = vmatprep.mubr.f32.mxu0 %v2423
    %4626 = vmatmul.mubr.f32.gmra.mrb[0].mxu0 %v1245
    %v4627 = vpop.f32.mrb[0].mxu0
    %v4628 = vadd.f32 1e-16, %v4627
    %v4629 = vpop.f32.mrb[0].mxu0
    %4630 = vmatprep.mubr.f32.mxu0 %v2426
    %4631 = vmatmul.mubr.f32.gmra.mrb[0].mxu0 %v1247
    %v4632 = vpop.f32.mrb[0].mxu0
    %v4633 = vadd.f32 1e-16, %v4632
    %v4634 = vpop.f32.mrb[0].mxu0
    %4635 = vmatprep.mubr.f32.mxu0 %v2429
    %4636 = vmatmul.mubr.f32.gmra.mrb[0].mxu0 %v1249
    %v4637 = vpop.f32.mrb[0].mxu0
    %v4638 = vadd.f32 1e-16, %v4637
    %v4639 = vpop.f32.mrb[0].mxu0
    %4640 = vmatprep.mubr.f32.mxu0 %v2432
    %4641 = vmatmul.mubr.f32.gmra.mrb[0].mxu0 %v1251
    %v4642 = vpop.f32.mrb[0].mxu0
    %v4643 = vadd.f32 1e-16, %v4642
    %v4644 = vpop.f32.mrb[0].mxu0
    %4645 = vmatprep.mubr.f32.mxu0 %v2435
    %4646 = vmatmul.mubr.f32.gmra.mrb[0].mxu0 %v1253
    %v4647 = vpop.f32.mrb[0].mxu0
    %v4648 = vadd.f32 1e-16, %v4647
    %v4649 = vpop.f32.mrb[0].mxu0
    %4650 = vmatprep.mubr.f32.mxu0 %v2438
    %4651 = vmatmul.mubr.f32.gmra.mrb[0].mxu0 %v1255
    %v4652 = vpop.f32.mrb[0].mxu0
    %v4653 = vadd.f32 1e-16, %v4652
    %v4654 = vpop.f32.mrb[0].mxu0
    %4655 = vmatprep.mubr.f32.mxu0 %v2441
    %4656 = vmatmul.mubr.f32.gmra.mrb[0].mxu0 %v1257
    %v4657 = vpop.f32.mrb[0].mxu0
    %v4658 = vadd.f32 1e-16, %v4657
    %v4659 = vpop.f32.mrb[0].mxu0
    %4660 = vmatprep.mubr.f32.mxu0 %v2444
    %4661 = vmatmul.mubr.f32.gmra.mrb[0].mxu0 %v1259
    %v4662 = vpop.f32.mrb[0].mxu0
    %v4663 = vadd.f32 1e-16, %v4662
    %v4664 = vpop.f32.mrb[0].mxu0
    %4665 = vmatprep.mubr.f32.mxu0 %v2447
    %4666 = vmatmul.mubr.f32.gmra.mrb[0].mxu0 %v1261
    %v4667 = vpop.f32.mrb[0].mxu0
    %v4668 = vadd.f32 1e-16, %v4667
    %v4669 = vpop.f32.mrb[0].mxu0
    %4670 = vmatprep.mubr.f32.mxu0 %v2450
    %4671 = vmatmul.mubr.f32.gmra.mrb[0].mxu0 %v1263
    %v4672 = vpop.f32.mrb[0].mxu0
    %v4673 = vadd.f32 1e-16, %v4672
    %v4674 = vpop.f32.mrb[0].mxu0
    %4675 = vmatprep.mubr.f32.mxu0 %v2453
    %4676 = vmatmul.mubr.f32.gmra.mrb[0].mxu0 %v1265
    %v4677 = vpop.f32.mrb[0].mxu0
    %v4678 = vadd.f32 1e-16, %v4677
    %v4679 = vpop.f32.mrb[0].mxu0
    %4680 = vmatprep.mubr.f32.mxu0 %v2456
    %4681 = vmatmul.mubr.f32.gmra.mrb[0].mxu0 %v1267
    %v4682 = vpop.f32.mrb[0].mxu0
    %v4683 = vadd.f32 1e-16, %v4682
    %v4684 = vpop.f32.mrb[0].mxu0
    %4685 = vmatprep.mubr.f32.mxu0 %v2459
    %4686 = vmatmul.mubr.f32.gmra.mrb[0].mxu0 %v1269
    %v4687 = vpop.f32.mrb[0].mxu0
    %v4688 = vadd.f32 1e-16, %v4687
    %v4689 = vpop.f32.mrb[0].mxu0
    %4690 = vmatprep.mubr.f32.mxu0 %v2462
    %4691 = vmatmul.mubr.f32.gmra.mrb[0].mxu0 %v1271
    %v4692 = vpop.f32.mrb[0].mxu0
    %v4693 = vadd.f32 1e-16, %v4692
    %v4694 = vpop.f32.mrb[0].mxu0
    %4695 = vmatprep.mubr.f32.mxu0 %v2465
    %4696 = vmatmul.mubr.f32.gmra.mrb[0].mxu0 %v1273
    %v4697 = vpop.f32.mrb[0].mxu0
    %v4698 = vadd.f32 1e-16, %v4697
    %v4699 = vpop.f32.mrb[0].mxu0
    %4700 = vmatprep.mubr.f32.mxu0 %v2468
    %4701 = vmatmul.mubr.f32.gmra.mrb[0].mxu0 %v1275
    %v4702 = vpop.f32.mrb[0].mxu0
    %v4703 = vadd.f32 1e-16, %v4702
    %v4704 = vpop.f32.mrb[0].mxu0
    %4705 = vmatprep.mubr.f32.mxu0 %v2471
    %4706 = vmatmul.mubr.f32.gmra.mrb[0].mxu0 %v1277
    %v4707 = vpop.f32.mrb[0].mxu0
    %v4708 = vadd.f32 1e-16, %v4707
    %v4709 = vpop.f32.mrb[0].mxu0
    %4710 = vmatprep.mubr.f32.mxu0 %v2474
    %4711 = vmatmul.mubr.f32.gmra.mrb[0].mxu0 %v1279
    %v4712 = vpop.f32.mrb[0].mxu0
    %v4713 = vadd.f32 1e-16, %v4712
    %v4714 = vpop.f32.mrb[0].mxu0
    %4715 = vmatprep.mubr.f32.mxu0 %v2477
    %4716 = vmatmul.mubr.f32.gmra.mrb[0].mxu0 %v1281
    %v4717 = vpop.f32.mrb[0].mxu0
    %v4718 = vadd.f32 1e-16, %v4717
    %v4719 = vpop.f32.mrb[0].mxu0
    %4720 = vmatprep.mubr.f32.mxu0 %v2480
    %4721 = vmatmul.mubr.f32.gmra.mrb[0].mxu0 %v1283
    %v4722 = vpop.f32.mrb[0].mxu0
    %v4723 = vadd.f32 1e-16, %v4722
    %v4724 = vpop.f32.mrb[0].mxu0
    %4725 = vmatprep.mubr.f32.mxu0 %v2483
    %4726 = vmatmul.mubr.f32.gmra.mrb[0].mxu0 %v1285
    %v4727 = vpop.f32.mrb[0].mxu0
    %v4728 = vadd.f32 1e-16, %v4727
    %v4729 = vpop.f32.mrb[0].mxu0
    %4730 = vmatprep.mubr.f32.mxu0 %v2486
    %4731 = vmatmul.mubr.f32.gmra.mrb[0].mxu0 %v1287
    %v4732 = vpop.f32.mrb[0].mxu0
    %v4733 = vadd.f32 1e-16, %v4732
    %v4734 = vpop.f32.mrb[0].mxu0
    %4735 = vmatprep.mubr.f32.mxu0 %v2489
    %4736 = vmatmul.mubr.f32.gmra.mrb[0].mxu0 %v1289
    %v4737 = vpop.f32.mrb[0].mxu0
    %v4738 = vadd.f32 1e-16, %v4737
    %v4739 = vpop.f32.mrb[0].mxu0
    %4740 = vmatprep.mubr.f32.mxu0 %v2492
    %4741 = vmatmul.mubr.f32.gmra.mrb[0].mxu0 %v1291
    %v4742 = vpop.f32.mrb[0].mxu0
    %v4743 = vadd.f32 1e-16, %v4742
    %v4744 = vpop.f32.mrb[0].mxu0
    %4745 = vmatprep.mubr.f32.mxu0 %v2495
    %4746 = vmatmul.mubr.f32.gmra.mrb[0].mxu0 %v1293
    %v4747 = vpop.f32.mrb[0].mxu0
    %v4748 = vadd.f32 1e-16, %v4747
    %v4749 = vpop.f32.mrb[0].mxu0
    %4750 = vmatprep.mubr.f32.mxu0 %v2498
    %4751 = vmatmul.mubr.f32.gmra.mrb[0].mxu0 %v1295
    %v4752 = vpop.f32.mrb[0].mxu0
    %v4753 = vadd.f32 1e-16, %v4752
    %v4754 = vpop.f32.mrb[0].mxu0
    %4755 = vmatprep.mubr.f32.mxu0 %v2501
    %4756 = vmatmul.mubr.f32.gmra.mrb[0].mxu0 %v1297
    %v4757 = vpop.f32.mrb[0].mxu0
    %v4758 = vadd.f32 1e-16, %v4757
    %v4759 = vpop.f32.mrb[0].mxu0
    %4760 = vmatprep.mubr.f32.mxu0 %v2504
    %4761 = vmatmul.mubr.f32.gmra.mrb[0].mxu0 %v1299
    %v4762 = vpop.f32.mrb[0].mxu0
    %v4763 = vadd.f32 1e-16, %v4762
    %v4764 = vpop.f32.mrb[0].mxu0
    %4765 = vmatprep.mubr.f32.mxu0 %v2507
    %4766 = vmatmul.mubr.f32.gmra.mrb[0].mxu0 %v1301
    %v4767 = vpop.f32.mrb[0].mxu0
    %v4768 = vadd.f32 1e-16, %v4767
    %v4769 = vpop.f32.mrb[0].mxu0
    %4770 = vmatprep.mubr.f32.mxu0 %v2510
    %4771 = vmatmul.mubr.f32.gmra.mrb[0].mxu0 %v1303
    %v4772 = vpop.f32.mrb[0].mxu0
    %v4773 = vadd.f32 1e-16, %v4772
    %v4774 = vpop.f32.mrb[0].mxu0
    %4775 = vmatprep.mubr.f32.mxu0 %v2513
    %4776 = vmatmul.mubr.f32.gmra.mrb[0].mxu0 %v1305
    %v4777 = vpop.f32.mrb[0].mxu0
    %v4778 = vadd.f32 1e-16, %v4777
    %v4779 = vpop.f32.mrb[0].mxu0
    %4780 = vmatprep.mubr.f32.mxu0 %v2516
    %4781 = vmatmul.mubr.f32.gmra.mrb[0].mxu0 %v1307
    %v4782 = vpop.f32.mrb[0].mxu0
    %v4783 = vadd.f32 1e-16, %v4782
    %v4784 = vpop.f32.mrb[0].mxu0
    %4785 = vmatprep.mubr.f32.mxu0 %v2519
    %4786 = vmatmul.mubr.f32.gmra.mrb[0].mxu0 %v1309
    %v4787 = vpop.f32.mrb[0].mxu0
    %v4788 = vadd.f32 1e-16, %v4787
    %v4789 = vpop.f32.mrb[0].mxu0
    %4790 = vmatprep.mubr.f32.mxu0 %v2522
    %4791 = vmatmul.mubr.f32.gmra.mrb[0].mxu0 %v1311
    %v4792 = vpop.f32.mrb[0].mxu0
    %v4793 = vadd.f32 1e-16, %v4792
    %v4794 = vpop.f32.mrb[0].mxu0
    %4795 = vmatprep.mubr.f32.mxu0 %v2525
    %4796 = vmatmul.mubr.f32.gmra.mrb[0].mxu0 %v1313
    %v4797 = vpop.f32.mrb[0].mxu0
    %v4798 = vadd.f32 1e-16, %v4797
    %v4799 = vpop.f32.mrb[0].mxu0
    %4800 = vmatprep.mubr.f32.mxu0 %v2528
    %4801 = vmatmul.mubr.f32.gmra.mrb[0].mxu0 %v1315
    %v4802 = vpop.f32.mrb[0].mxu0
    %v4803 = vadd.f32 1e-16, %v4802
    %v4804 = vpop.f32.mrb[0].mxu0
    %4805 = vmatprep.mubr.f32.mxu0 %v2531
    %4806 = vmatmul.mubr.f32.gmra.mrb[0].mxu0 %v1317
    %v4807 = vpop.f32.mrb[0].mxu0
    %v4808 = vadd.f32 1e-16, %v4807
    %v4809 = vpop.f32.mrb[0].mxu0
    %4810 = vmatprep.mubr.f32.mxu0 %v2534
    %4811 = vmatmul.mubr.f32.gmra.mrb[0].mxu0 %v1319
    %v4812 = vpop.f32.mrb[0].mxu0
    %v4813 = vadd.f32 1e-16, %v4812
    %v4814 = vpop.f32.mrb[0].mxu0
    %4815 = vdwg.mxu0
    %v4816 = vrcp.pop %v4568
    %v4817 = vmul.f32 %v3969, %v4816
    %v4818 = vrcp.pop %v4573
    %v4819 = vmul.f32 %v3971, %v4818
    %v4820 = vrcp.pop %v4578
    %v4821 = vmul.f32 %v3973, %v4820
    %v4822 = vrcp.pop %v4583
    %v4823 = vmul.f32 %v3975, %v4822
    %v4824 = vrcp.pop %v4588
    %v4825 = vmul.f32 %v3977, %v4824
    %v4826 = vrcp.pop %v4593
    %v4827 = vmul.f32 %v3979, %v4826
    %v4828 = vrcp.pop %v4598
    %v4829 = vmul.f32 %v3981, %v4828
    %v4830 = vrcp.pop %v4603
    %v4831 = vmul.f32 %v3983, %v4830
    %v4832 = vrcp.pop %v4608
    %v4833 = vmul.f32 %v3985, %v4832
    %v4834 = vrcp.pop %v4613
    %v4835 = vmul.f32 %v3987, %v4834
    %v4836 = vrcp.pop %v4618
    %v4837 = vmul.f32 %v3989, %v4836
    %v4838 = vrcp.pop %v4623
    %v4839 = vmul.f32 %v3991, %v4838
    %v4840 = vrcp.pop %v4628
    %v4841 = vmul.f32 %v3993, %v4840
    %v4842 = vrcp.pop %v4633
    %v4843 = vmul.f32 %v3995, %v4842
    %v4844 = vrcp.pop %v4638
    %v4845 = vmul.f32 %v3997, %v4844
    %v4846 = vrcp.pop %v4643
    %v4847 = vmul.f32 %v3999, %v4846
    %v4848 = vrcp.pop %v4648
    %v4849 = vmul.f32 %v4001, %v4848
    %v4850 = vrcp.pop %v4653
    %v4851 = vmul.f32 %v4003, %v4850
    %v4852 = vrcp.pop %v4658
    %v4853 = vmul.f32 %v4005, %v4852
    %v4854 = vrcp.pop %v4663
    %v4855 = vmul.f32 %v4007, %v4854
    %v4856 = vrcp.pop %v4668
    %v4857 = vmul.f32 %v4009, %v4856
    %v4858 = vrcp.pop %v4673
    %v4859 = vmul.f32 %v4011, %v4858
    %v4860 = vrcp.pop %v4678
    %v4861 = vmul.f32 %v4013, %v4860
    %v4862 = vrcp.pop %v4683
    %v4863 = vmul.f32 %v4015, %v4862
    %v4864 = vrcp.pop %v4688
    %v4865 = vmul.f32 %v4017, %v4864
    %v4866 = vrcp.pop %v4693
    %v4867 = vmul.f32 %v4019, %v4866
    %v4868 = vrcp.pop %v4698
    %v4869 = vmul.f32 %v4021, %v4868
    %v4870 = vrcp.pop %v4703
    %v4871 = vmul.f32 %v4023, %v4870
    %v4872 = vrcp.pop %v4708
    %v4873 = vmul.f32 %v4025, %v4872
    %v4874 = vrcp.pop %v4713
    %v4875 = vmul.f32 %v4027, %v4874
    %v4876 = vrcp.pop %v4718
    %v4877 = vmul.f32 %v4029, %v4876
    %v4878 = vrcp.pop %v4723
    %v4879 = vmul.f32 %v4031, %v4878
    %v4880 = vrcp.pop %v4728
    %v4881 = vmul.f32 %v4033, %v4880
    %v4882 = vrcp.pop %v4733
    %v4883 = vmul.f32 %v4035, %v4882
    %v4884 = vrcp.pop %v4738
    %v4885 = vmul.f32 %v4037, %v4884
    %v4886 = vrcp.pop %v4743
    %v4887 = vmul.f32 %v4039, %v4886
    %v4888 = vrcp.pop %v4748
    %v4889 = vmul.f32 %v4041, %v4888
    %v4890 = vrcp.pop %v4753
    %v4891 = vmul.f32 %v4043, %v4890
    %v4892 = vrcp.pop %v4758
    %v4893 = vmul.f32 %v4045, %v4892
    %v4894 = vrcp.pop %v4763
    %v4895 = vmul.f32 %v4047, %v4894
    %v4896 = vrcp.pop %v4768
    %v4897 = vmul.f32 %v4049, %v4896
    %v4898 = vrcp.pop %v4773
    %v4899 = vmul.f32 %v4051, %v4898
    %v4900 = vrcp.pop %v4778
    %v4901 = vmul.f32 %v4053, %v4900
    %v4902 = vrcp.pop %v4783
    %v4903 = vmul.f32 %v4055, %v4902
    %v4904 = vrcp.pop %v4788
    %v4905 = vmul.f32 %v4057, %v4904
    %v4906 = vrcp.pop %v4793
    %v4907 = vmul.f32 %v4059, %v4906
    %v4908 = vrcp.pop %v4798
    %v4909 = vmul.f32 %v4061, %v4908
    %v4910 = vrcp.pop %v4803
    %v4911 = vmul.f32 %v4063, %v4910
    %v4912 = vrcp.pop %v4808
    %v4913 = vmul.f32 %v4065, %v4912
    %v4914 = vrcp.pop %v4813
    %v4915 = vmul.f32 %v4067, %v4914
    %4917 = vset.pattern.permute.xlu0 0
    %4918 = vperm.xlu0 %4917, %v4817
    %v4919 = vpop.permute.xlu0 %4918
    %4922 = vset.pattern.permute.xlu0 0
    %4923 = vperm.xlu0 %4922, %v4819
    %v4924 = vpop.permute.xlu0 %4923
    %4927 = vset.pattern.permute.xlu0 0
    %4928 = vperm.xlu0 %4927, %v4821
    %v4929 = vpop.permute.xlu0 %4928
    %4932 = vset.pattern.permute.xlu0 0
    %4933 = vperm.xlu0 %4932, %v4823
    %v4934 = vpop.permute.xlu0 %4933
    %4937 = vset.pattern.permute.xlu0 0
    %4938 = vperm.xlu0 %4937, %v4825
    %v4939 = vpop.permute.xlu0 %4938
    %4942 = vset.pattern.permute.xlu0 0
    %4943 = vperm.xlu0 %4942, %v4827
    %v4944 = vpop.permute.xlu0 %4943
    %4947 = vset.pattern.permute.xlu0 0
    %4948 = vperm.xlu0 %4947, %v4829
    %v4949 = vpop.permute.xlu0 %4948
    %4952 = vset.pattern.permute.xlu0 0
    %4953 = vperm.xlu0 %4952, %v4831
    %v4954 = vpop.permute.xlu0 %4953
    %4957 = vset.pattern.permute.xlu0 0
    %4958 = vperm.xlu0 %4957, %v4833
    %v4959 = vpop.permute.xlu0 %4958
    %4962 = vset.pattern.permute.xlu0 0
    %4963 = vperm.xlu0 %4962, %v4835
    %v4964 = vpop.permute.xlu0 %4963
    %4967 = vset.pattern.permute.xlu0 0
    %4968 = vperm.xlu0 %4967, %v4837
    %v4969 = vpop.permute.xlu0 %4968
    %4972 = vset.pattern.permute.xlu0 0
    %4973 = vperm.xlu0 %4972, %v4839
    %v4974 = vpop.permute.xlu0 %4973
    %4977 = vset.pattern.permute.xlu0 0
    %4978 = vperm.xlu0 %4977, %v4841
    %v4979 = vpop.permute.xlu0 %4978
    %4982 = vset.pattern.permute.xlu0 0
    %4983 = vperm.xlu0 %4982, %v4843
    %v4984 = vpop.permute.xlu0 %4983
    %4987 = vset.pattern.permute.xlu0 0
    %4988 = vperm.xlu0 %4987, %v4845
    %v4989 = vpop.permute.xlu0 %4988
    %4992 = vset.pattern.permute.xlu0 0
    %4993 = vperm.xlu0 %4992, %v4847
    %v4994 = vpop.permute.xlu0 %4993
    %4997 = vset.pattern.permute.xlu0 0
    %4998 = vperm.xlu0 %4997, %v4849
    %v4999 = vpop.permute.xlu0 %4998
    %5002 = vset.pattern.permute.xlu0 0
    %5003 = vperm.xlu0 %5002, %v4851
    %v5004 = vpop.permute.xlu0 %5003
    %5007 = vset.pattern.permute.xlu0 0
    %5008 = vperm.xlu0 %5007, %v4853
    %v5009 = vpop.permute.xlu0 %5008
    %5012 = vset.pattern.permute.xlu0 0
    %5013 = vperm.xlu0 %5012, %v4855
    %v5014 = vpop.permute.xlu0 %5013
    %5017 = vset.pattern.permute.xlu0 0
    %5018 = vperm.xlu0 %5017, %v4857
    %v5019 = vpop.permute.xlu0 %5018
    %5022 = vset.pattern.permute.xlu0 0
    %5023 = vperm.xlu0 %5022, %v4859
    %v5024 = vpop.permute.xlu0 %5023
    %5027 = vset.pattern.permute.xlu0 0
    %5028 = vperm.xlu0 %5027, %v4861
    %v5029 = vpop.permute.xlu0 %5028
    %5032 = vset.pattern.permute.xlu0 0
    %5033 = vperm.xlu0 %5032, %v4863
    %v5034 = vpop.permute.xlu0 %5033
    %5037 = vset.pattern.permute.xlu0 0
    %5038 = vperm.xlu0 %5037, %v4865
    %v5039 = vpop.permute.xlu0 %5038
    %5042 = vset.pattern.permute.xlu0 0
    %5043 = vperm.xlu0 %5042, %v4867
    %v5044 = vpop.permute.xlu0 %5043
    %5047 = vset.pattern.permute.xlu0 0
    %5048 = vperm.xlu0 %5047, %v4869
    %v5049 = vpop.permute.xlu0 %5048
    %5052 = vset.pattern.permute.xlu0 0
    %5053 = vperm.xlu0 %5052, %v4871
    %v5054 = vpop.permute.xlu0 %5053
    %5057 = vset.pattern.permute.xlu0 0
    %5058 = vperm.xlu0 %5057, %v4873
    %v5059 = vpop.permute.xlu0 %5058
    %5062 = vset.pattern.permute.xlu0 0
    %5063 = vperm.xlu0 %5062, %v4875
    %v5064 = vpop.permute.xlu0 %5063
    %5067 = vset.pattern.permute.xlu0 0
    %5068 = vperm.xlu0 %5067, %v4877
    %v5069 = vpop.permute.xlu0 %5068
    %5072 = vset.pattern.permute.xlu0 0
    %5073 = vperm.xlu0 %5072, %v4879
    %v5074 = vpop.permute.xlu0 %5073
    %5077 = vset.pattern.permute.xlu0 0
    %5078 = vperm.xlu0 %5077, %v4881
    %v5079 = vpop.permute.xlu0 %5078
    %5082 = vset.pattern.permute.xlu0 0
    %5083 = vperm.xlu0 %5082, %v4883
    %v5084 = vpop.permute.xlu0 %5083
    %5087 = vset.pattern.permute.xlu0 0
    %5088 = vperm.xlu0 %5087, %v4885
    %v5089 = vpop.permute.xlu0 %5088
    %5092 = vset.pattern.permute.xlu0 0
    %5093 = vperm.xlu0 %5092, %v4887
    %v5094 = vpop.permute.xlu0 %5093
    %5097 = vset.pattern.permute.xlu0 0
    %5098 = vperm.xlu0 %5097, %v4889
    %v5099 = vpop.permute.xlu0 %5098
    %5102 = vset.pattern.permute.xlu0 0
    %5103 = vperm.xlu0 %5102, %v4891
    %v5104 = vpop.permute.xlu0 %5103
    %5107 = vset.pattern.permute.xlu0 0
    %5108 = vperm.xlu0 %5107, %v4893
    %v5109 = vpop.permute.xlu0 %5108
    %5112 = vset.pattern.permute.xlu0 0
    %5113 = vperm.xlu0 %5112, %v4895
    %v5114 = vpop.permute.xlu0 %5113
    %5117 = vset.pattern.permute.xlu0 0
    %5118 = vperm.xlu0 %5117, %v4897
    %v5119 = vpop.permute.xlu0 %5118
    %5122 = vset.pattern.permute.xlu0 0
    %5123 = vperm.xlu0 %5122, %v4899
    %v5124 = vpop.permute.xlu0 %5123
    %5127 = vset.pattern.permute.xlu0 0
    %5128 = vperm.xlu0 %5127, %v4901
    %v5129 = vpop.permute.xlu0 %5128
    %5132 = vset.pattern.permute.xlu0 0
    %5133 = vperm.xlu0 %5132, %v4903
    %v5134 = vpop.permute.xlu0 %5133
    %5137 = vset.pattern.permute.xlu0 0
    %5138 = vperm.xlu0 %5137, %v4905
    %v5139 = vpop.permute.xlu0 %5138
    %5142 = vset.pattern.permute.xlu0 0
    %5143 = vperm.xlu0 %5142, %v4907
    %v5144 = vpop.permute.xlu0 %5143
    %5147 = vset.pattern.permute.xlu0 0
    %5148 = vperm.xlu0 %5147, %v4909
    %v5149 = vpop.permute.xlu0 %5148
    %5152 = vset.pattern.permute.xlu0 0
    %5153 = vperm.xlu0 %5152, %v4911
    %v5154 = vpop.permute.xlu0 %5153
    %5157 = vset.pattern.permute.xlu0 0
    %5158 = vperm.xlu0 %5157, %v4913
    %v5159 = vpop.permute.xlu0 %5158
    %5162 = vset.pattern.permute.xlu0 0
    %5163 = vperm.xlu0 %5162, %v4915
    %v5164 = vpop.permute.xlu0 %5163
    %v5166 = vmul.f32 %v1838, %v4919
    %v5167 = vmul.f32 %v2136, %v4919
    %v5168 = vmul.f32 %v1844, %v4924
    %v5169 = vmul.f32 %v2137, %v4924
    %v5170 = vmul.f32 %v1850, %v4929
    %v5171 = vmul.f32 %v2138, %v4929
    %v5172 = vmul.f32 %v1856, %v4934
    %v5173 = vmul.f32 %v2139, %v4934
    %v5174 = vmul.f32 %v1862, %v4939
    %v5175 = vmul.f32 %v2140, %v4939
    %v5176 = vmul.f32 %v1868, %v4944
    %v5177 = vmul.f32 %v2141, %v4944
    %v5178 = vmul.f32 %v1874, %v4949
    %v5179 = vmul.f32 %v2142, %v4949
    %v5180 = vmul.f32 %v1880, %v4954
    %v5181 = vmul.f32 %v2143, %v4954
    %v5182 = vmul.f32 %v1886, %v4959
    %v5183 = vmul.f32 %v2144, %v4959
    %v5184 = vmul.f32 %v1892, %v4964
    %v5185 = vmul.f32 %v2145, %v4964
    %v5186 = vmul.f32 %v1898, %v4969
    %v5187 = vmul.f32 %v2146, %v4969
    %v5188 = vmul.f32 %v1904, %v4974
    %v5189 = vmul.f32 %v2147, %v4974
    %v5190 = vmul.f32 %v1910, %v4979
    %v5191 = vmul.f32 %v2148, %v4979
    %v5192 = vmul.f32 %v1916, %v4984
    %v5193 = vmul.f32 %v2149, %v4984
    %v5194 = vmul.f32 %v1922, %v4989
    %v5195 = vmul.f32 %v2150, %v4989
    %v5196 = vmul.f32 %v1928, %v4994
    %v5197 = vmul.f32 %v2151, %v4994
    %v5198 = vmul.f32 %v1934, %v4999
    %v5199 = vmul.f32 %v2152, %v4999
    %v5200 = vmul.f32 %v1940, %v5004
    %v5201 = vmul.f32 %v2153, %v5004
    %v5202 = vmul.f32 %v1946, %v5009
    %v5203 = vmul.f32 %v2154, %v5009
    %v5204 = vmul.f32 %v1952, %v5014
    %v5205 = vmul.f32 %v2155, %v5014
    %v5206 = vmul.f32 %v1958, %v5019
    %v5207 = vmul.f32 %v2156, %v5019
    %v5208 = vmul.f32 %v1964, %v5024
    %v5209 = vmul.f32 %v2157, %v5024
    %v5210 = vmul.f32 %v1970, %v5029
    %v5211 = vmul.f32 %v2158, %v5029
    %v5212 = vmul.f32 %v1976, %v5034
    %v5213 = vmul.f32 %v2159, %v5034
    %v5214 = vmul.f32 %v1982, %v5039
    %v5215 = vmul.f32 %v2160, %v5039
    %v5216 = vmul.f32 %v1988, %v5044
    %v5217 = vmul.f32 %v2161, %v5044
    %v5218 = vmul.f32 %v1994, %v5049
    %v5219 = vmul.f32 %v2162, %v5049
    %v5220 = vmul.f32 %v2000, %v5054
    %v5221 = vmul.f32 %v2163, %v5054
    %v5222 = vmul.f32 %v2006, %v5059
    %v5223 = vmul.f32 %v2164, %v5059
    %v5224 = vmul.f32 %v2012, %v5064
    %v5225 = vmul.f32 %v2165, %v5064
    %v5226 = vmul.f32 %v2018, %v5069
    %v5227 = vmul.f32 %v2166, %v5069
    %v5228 = vmul.f32 %v2024, %v5074
    %v5229 = vmul.f32 %v2167, %v5074
    %v5230 = vmul.f32 %v2030, %v5079
    %v5231 = vmul.f32 %v2168, %v5079
    %v5232 = vmul.f32 %v2036, %v5084
    %v5233 = vmul.f32 %v2169, %v5084
    %v5234 = vmul.f32 %v2042, %v5089
    %v5235 = vmul.f32 %v2170, %v5089
    %v5236 = vmul.f32 %v2048, %v5094
    %v5237 = vmul.f32 %v2171, %v5094
    %v5238 = vmul.f32 %v2054, %v5099
    %v5239 = vmul.f32 %v2172, %v5099
    %v5240 = vmul.f32 %v2060, %v5104
    %v5241 = vmul.f32 %v2173, %v5104
    %v5242 = vmul.f32 %v2066, %v5109
    %v5243 = vmul.f32 %v2174, %v5109
    %v5244 = vmul.f32 %v2072, %v5114
    %v5245 = vmul.f32 %v2175, %v5114
    %v5246 = vmul.f32 %v2078, %v5119
    %v5247 = vmul.f32 %v2176, %v5119
    %v5248 = vmul.f32 %v2084, %v5124
    %v5249 = vmul.f32 %v2177, %v5124
    %v5250 = vmul.f32 %v2090, %v5129
    %v5251 = vmul.f32 %v2178, %v5129
    %v5252 = vmul.f32 %v2096, %v5134
    %v5253 = vmul.f32 %v2179, %v5134
    %v5254 = vmul.f32 %v2102, %v5139
    %v5255 = vmul.f32 %v2180, %v5139
    %v5256 = vmul.f32 %v2108, %v5144
    %v5257 = vmul.f32 %v2181, %v5144
    %v5258 = vmul.f32 %v2114, %v5149
    %v5259 = vmul.f32 %v2182, %v5149
    %v5260 = vmul.f32 %v2120, %v5154
    %v5261 = vmul.f32 %v2183, %v5154
    %v5262 = vmul.f32 %v2126, %v5159
    %v5263 = vmul.f32 %v2184, %v5159
    %v5264 = vmul.f32 %v2132, %v5164
    %v5265 = vmul.f32 %v2185, %v5164
    %5266 = vmatprep.subr.mxu0 %v5167
    %5267 = vmatpush1.msra.mxu0 %v5166
    %5268 = vmatprep.subr.mxu0 %v5169
    %5269 = vmatpush1.msra.mxu0 %v5168
    %5270 = vmatprep.subr.mxu0 %v5171
    %5271 = vmatpush1.msra.mxu0 %v5170
    %5272 = vmatprep.subr.mxu0 %v5173
    %5273 = vmatpush1.msra.mxu0 %v5172
    %5274 = vmatprep.subr.mxu0 %v5175
    %5275 = vmatpush1.msra.mxu0 %v5174
    %5276 = vmatprep.subr.mxu0 %v5177
    %5277 = vmatpush1.msra.mxu0 %v5176
    %5278 = vmatprep.subr.mxu0 %v5179
    %5279 = vmatpush1.msra.mxu0 %v5178
    %5280 = vmatprep.subr.mxu0 %v5181
    %5281 = vmatpush1.msra.mxu0 %v5180
    %5282 = vmatprep.subr.mxu0 %v5183
    %5283 = vmatpush1.msra.mxu0 %v5182
    %5284 = vmatprep.subr.mxu0 %v5185
    %5285 = vmatpush1.msra.mxu0 %v5184
    %5286 = vmatprep.subr.mxu0 %v5187
    %5287 = vmatpush1.msra.mxu0 %v5186
    %5288 = vmatprep.subr.mxu0 %v5189
    %5289 = vmatpush1.msra.mxu0 %v5188
    %5290 = vmatprep.subr.mxu0 %v5191
    %5291 = vmatpush1.msra.mxu0 %v5190
    %5292 = vmatprep.subr.mxu0 %v5193
    %5293 = vmatpush1.msra.mxu0 %v5192
    %5294 = vmatprep.subr.mxu0 %v5195
    %5295 = vmatpush1.msra.mxu0 %v5194
    %5296 = vmatprep.subr.mxu0 %v5197
    %5297 = vmatpush1.msra.mxu0 %v5196
    %5298 = vmatprep.subr.mxu0 %v5199
    %5299 = vmatpush1.msra.mxu0 %v5198
    %5300 = vmatprep.subr.mxu0 %v5201
    %5301 = vmatpush1.msra.mxu0 %v5200
    %5302 = vmatprep.subr.mxu0 %v5203
    %5303 = vmatpush1.msra.mxu0 %v5202
    %5304 = vmatprep.subr.mxu0 %v5205
    %5305 = vmatpush1.msra.mxu0 %v5204
    %5306 = vmatprep.subr.mxu0 %v5207
    %5307 = vmatpush1.msra.mxu0 %v5206
    %5308 = vmatprep.subr.mxu0 %v5209
    %5309 = vmatpush1.msra.mxu0 %v5208
    %5310 = vmatprep.subr.mxu0 %v5211
    %5311 = vmatpush1.msra.mxu0 %v5210
    %5312 = vmatprep.subr.mxu0 %v5213
    %5313 = vmatpush1.msra.mxu0 %v5212
    %5314 = vmatprep.subr.mxu0 %v5215
    %5315 = vmatpush1.msra.mxu0 %v5214
    %5316 = vmatprep.subr.mxu0 %v5217
    %5317 = vmatpush1.msra.mxu0 %v5216
    %5318 = vmatprep.subr.mxu0 %v5219
    %5319 = vmatpush1.msra.mxu0 %v5218
    %5320 = vmatprep.subr.mxu0 %v5221
    %5321 = vmatpush1.msra.mxu0 %v5220
    %5322 = vmatprep.subr.mxu0 %v5223
    %5323 = vmatpush1.msra.mxu0 %v5222
    %5324 = vmatprep.subr.mxu0 %v5225
    %5325 = vmatpush1.msra.mxu0 %v5224
    %5326 = vmatprep.subr.mxu0 %v5227
    %5327 = vmatpush1.msra.mxu0 %v5226
    %5328 = vmatprep.subr.mxu0 %v5229
    %5329 = vmatpush1.msra.mxu0 %v5228
    %5330 = vmatprep.mubr.f32.mxu0 %v1522
    %5331 = vmatmul.mubr.f32.gmra.mrb[0].mxu0 %v1521
    %v5332 = vpop.f32.mrb[0].mxu0
    %v5333 = vadd.f32 0.0, %v5332
    %v5334 = vpop.f32.mrb[0].mxu0
    %v5335 = vadd.f32 0.0, %v5334
    %5336 = vmatprep.mubr.f32.mxu0 %v1526
    %5337 = vmatmul.mubr.f32.gmra.mrb[0].mxu0 %v1525
    %v5338 = vpop.f32.mrb[0].mxu0
    %v5339 = vadd.f32 0.0, %v5338
    %v5340 = vpop.f32.mrb[0].mxu0
    %v5341 = vadd.f32 0.0, %v5340
    %5342 = vmatprep.mubr.f32.mxu0 %v1530
    %5343 = vmatmul.mubr.f32.gmra.mrb[0].mxu0 %v1529
    %v5344 = vpop.f32.mrb[0].mxu0
    %v5345 = vadd.f32 0.0, %v5344
    %v5346 = vpop.f32.mrb[0].mxu0
    %v5347 = vadd.f32 0.0, %v5346
    %5348 = vmatprep.mubr.f32.mxu0 %v1534
    %5349 = vmatmul.mubr.f32.gmra.mrb[0].mxu0 %v1533
    %v5350 = vpop.f32.mrb[0].mxu0
    %v5351 = vadd.f32 0.0, %v5350
    %v5352 = vpop.f32.mrb[0].mxu0
    %v5353 = vadd.f32 0.0, %v5352
    %5354 = vmatprep.mubr.f32.mxu0 %v1538
    %5355 = vmatmul.mubr.f32.gmra.mrb[0].mxu0 %v1537
    %v5356 = vpop.f32.mrb[0].mxu0
    %v5357 = vadd.f32 0.0, %v5356
    %v5358 = vpop.f32.mrb[0].mxu0
    %v5359 = vadd.f32 0.0, %v5358
    %5360 = vmatprep.mubr.f32.mxu0 %v1542
    %5361 = vmatmul.mubr.f32.gmra.mrb[0].mxu0 %v1541
    %v5362 = vpop.f32.mrb[0].mxu0
    %v5363 = vadd.f32 0.0, %v5362
    %v5364 = vpop.f32.mrb[0].mxu0
    %v5365 = vadd.f32 0.0, %v5364
    %5366 = vmatprep.mubr.f32.mxu0 %v1546
    %5367 = vmatmul.mubr.f32.gmra.mrb[0].mxu0 %v1545
    %v5368 = vpop.f32.mrb[0].mxu0
    %v5369 = vadd.f32 0.0, %v5368
    %v5370 = vpop.f32.mrb[0].mxu0
    %v5371 = vadd.f32 0.0, %v5370
    %5372 = vmatprep.mubr.f32.mxu0 %v1550
    %5373 = vmatmul.mubr.f32.gmra.mrb[0].mxu0 %v1549
    %v5374 = vpop.f32.mrb[0].mxu0
    %v5375 = vadd.f32 0.0, %v5374
    %v5376 = vpop.f32.mrb[0].mxu0
    %v5377 = vadd.f32 0.0, %v5376
    %5378 = vmatprep.mubr.f32.mxu0 %v1554
    %5379 = vmatmul.mubr.f32.gmra.mrb[0].mxu0 %v1553
    %v5380 = vpop.f32.mrb[0].mxu0
    %v5381 = vadd.f32 0.0, %v5380
    %v5382 = vpop.f32.mrb[0].mxu0
    %v5383 = vadd.f32 0.0, %v5382
    %5384 = vmatprep.mubr.f32.mxu0 %v1558
    %5385 = vmatmul.mubr.f32.gmra.mrb[0].mxu0 %v1557
    %v5386 = vpop.f32.mrb[0].mxu0
    %v5387 = vadd.f32 0.0, %v5386
    %v5388 = vpop.f32.mrb[0].mxu0
    %v5389 = vadd.f32 0.0, %v5388
    %5390 = vmatprep.mubr.f32.mxu0 %v1562
    %5391 = vmatmul.mubr.f32.gmra.mrb[0].mxu0 %v1561
    %v5392 = vpop.f32.mrb[0].mxu0
    %v5393 = vadd.f32 0.0, %v5392
    %v5394 = vpop.f32.mrb[0].mxu0
    %v5395 = vadd.f32 0.0, %v5394
    %5396 = vmatprep.mubr.f32.mxu0 %v1566
    %5397 = vmatmul.mubr.f32.gmra.mrb[0].mxu0 %v1565
    %v5398 = vpop.f32.mrb[0].mxu0
    %v5399 = vadd.f32 0.0, %v5398
    %v5400 = vpop.f32.mrb[0].mxu0
    %v5401 = vadd.f32 0.0, %v5400
    %5402 = vmatprep.mubr.f32.mxu0 %v1570
    %5403 = vmatmul.mubr.f32.gmra.mrb[0].mxu0 %v1569
    %v5404 = vpop.f32.mrb[0].mxu0
    %v5405 = vadd.f32 0.0, %v5404
    %v5406 = vpop.f32.mrb[0].mxu0
    %v5407 = vadd.f32 0.0, %v5406
    %5408 = vmatprep.mubr.f32.mxu0 %v1574
    %5409 = vmatmul.mubr.f32.gmra.mrb[0].mxu0 %v1573
    %v5410 = vpop.f32.mrb[0].mxu0
    %v5411 = vadd.f32 0.0, %v5410
    %v5412 = vpop.f32.mrb[0].mxu0
    %v5413 = vadd.f32 0.0, %v5412
    %5414 = vmatprep.mubr.f32.mxu0 %v1578
    %5415 = vmatmul.mubr.f32.gmra.mrb[0].mxu0 %v1577
    %v5416 = vpop.f32.mrb[0].mxu0
    %v5417 = vadd.f32 0.0, %v5416
    %v5418 = vpop.f32.mrb[0].mxu0
    %v5419 = vadd.f32 0.0, %v5418
    %5420 = vmatprep.mubr.f32.mxu0 %v1582
    %5421 = vmatmul.mubr.f32.gmra.mrb[0].mxu0 %v1581
    %v5422 = vpop.f32.mrb[0].mxu0
    %v5423 = vadd.f32 0.0, %v5422
    %v5424 = vpop.f32.mrb[0].mxu0
    %v5425 = vadd.f32 0.0, %v5424
    %5426 = vmatprep.mubr.f32.mxu0 %v1586
    %5427 = vmatmul.mubr.f32.gmra.mrb[0].mxu0 %v1585
    %v5428 = vpop.f32.mrb[0].mxu0
    %v5429 = vadd.f32 0.0, %v5428
    %v5430 = vpop.f32.mrb[0].mxu0
    %v5431 = vadd.f32 0.0, %v5430
    %5432 = vmatprep.mubr.f32.mxu0 %v1590
    %5433 = vmatmul.mubr.f32.gmra.mrb[0].mxu0 %v1589
    %v5434 = vpop.f32.mrb[0].mxu0
    %v5435 = vadd.f32 0.0, %v5434
    %v5436 = vpop.f32.mrb[0].mxu0
    %v5437 = vadd.f32 0.0, %v5436
    %5438 = vmatprep.mubr.f32.mxu0 %v1594
    %5439 = vmatmul.mubr.f32.gmra.mrb[0].mxu0 %v1593
    %v5440 = vpop.f32.mrb[0].mxu0
    %v5441 = vadd.f32 0.0, %v5440
    %v5442 = vpop.f32.mrb[0].mxu0
    %v5443 = vadd.f32 0.0, %v5442
    %5444 = vmatprep.mubr.f32.mxu0 %v1598
    %5445 = vmatmul.mubr.f32.gmra.mrb[0].mxu0 %v1597
    %v5446 = vpop.f32.mrb[0].mxu0
    %v5447 = vadd.f32 0.0, %v5446
    %v5448 = vpop.f32.mrb[0].mxu0
    %v5449 = vadd.f32 0.0, %v5448
    %5450 = vmatprep.mubr.f32.mxu0 %v1602
    %5451 = vmatmul.mubr.f32.gmra.mrb[0].mxu0 %v1601
    %v5452 = vpop.f32.mrb[0].mxu0
    %v5453 = vadd.f32 0.0, %v5452
    %v5454 = vpop.f32.mrb[0].mxu0
    %v5455 = vadd.f32 0.0, %v5454
    %5456 = vmatprep.mubr.f32.mxu0 %v1606
    %5457 = vmatmul.mubr.f32.gmra.mrb[0].mxu0 %v1605
    %v5458 = vpop.f32.mrb[0].mxu0
    %v5459 = vadd.f32 0.0, %v5458
    %v5460 = vpop.f32.mrb[0].mxu0
    %v5461 = vadd.f32 0.0, %v5460
    %5462 = vmatprep.mubr.f32.mxu0 %v1610
    %5463 = vmatmul.mubr.f32.gmra.mrb[0].mxu0 %v1609
    %v5464 = vpop.f32.mrb[0].mxu0
    %v5465 = vadd.f32 0.0, %v5464
    %v5466 = vpop.f32.mrb[0].mxu0
    %v5467 = vadd.f32 0.0, %v5466
    %5468 = vdwg.mxu0
    %5469 = vmatprep.subr.mxu0 %v5231
    %5470 = vmatpush1.msra.mxu0 %v5230
    %5471 = vmatprep.subr.mxu0 %v5233
    %5472 = vmatpush1.msra.mxu0 %v5232
    %5473 = vmatprep.subr.mxu0 %v5235
    %5474 = vmatpush1.msra.mxu0 %v5234
    %5475 = vmatprep.subr.mxu0 %v5237
    %5476 = vmatpush1.msra.mxu0 %v5236
    %5477 = vmatprep.subr.mxu0 %v5239
    %5478 = vmatpush1.msra.mxu0 %v5238
    %5479 = vmatprep.subr.mxu0 %v5241
    %5480 = vmatpush1.msra.mxu0 %v5240
    %5481 = vmatprep.subr.mxu0 %v5243
    %5482 = vmatpush1.msra.mxu0 %v5242
    %5483 = vmatprep.subr.mxu0 %v5245
    %5484 = vmatpush1.msra.mxu0 %v5244
    %5485 = vmatprep.subr.mxu0 %v5247
    %5486 = vmatpush1.msra.mxu0 %v5246
    %5487 = vmatprep.subr.mxu0 %v5249
    %5488 = vmatpush1.msra.mxu0 %v5248
    %5489 = vmatprep.subr.mxu0 %v5251
    %5490 = vmatpush1.msra.mxu0 %v5250
    %5491 = vmatprep.subr.mxu0 %v5253
    %5492 = vmatpush1.msra.mxu0 %v5252
    %5493 = vmatprep.subr.mxu0 %v5255
    %5494 = vmatpush1.msra.mxu0 %v5254
    %5495 = vmatprep.subr.mxu0 %v5257
    %5496 = vmatpush1.msra.mxu0 %v5256
    %5497 = vmatprep.subr.mxu0 %v5259
    %5498 = vmatpush1.msra.mxu0 %v5258
    %5499 = vmatprep.subr.mxu0 %v5261
    %5500 = vmatpush1.msra.mxu0 %v5260
    %5501 = vmatprep.subr.mxu0 %v5263
    %5502 = vmatpush1.msra.mxu0 %v5262
    %5503 = vmatprep.subr.mxu0 %v5265
    %5504 = vmatpush1.msra.mxu0 %v5264
    %5505 = vmatprep.subr.mxu0 0.0
    %5506 = vmatpush1.msra.mxu0 0.0
    %5507 = vmatprep.subr.mxu0 0.0
    %5508 = vmatpush1.msra.mxu0 0.0
    %5509 = vmatprep.subr.mxu0 0.0
    %5510 = vmatpush1.msra.mxu0 0.0
    %5511 = vmatprep.subr.mxu0 0.0
    %5512 = vmatpush1.msra.mxu0 0.0
    %5513 = vmatprep.subr.mxu0 0.0
    %5514 = vmatpush1.msra.mxu0 0.0
    %5515 = vmatprep.subr.mxu0 0.0
    %5516 = vmatpush1.msra.mxu0 0.0
    %5517 = vmatprep.subr.mxu0 0.0
    %5518 = vmatpush1.msra.mxu0 0.0
    %5519 = vmatprep.subr.mxu0 0.0
    %5520 = vmatpush1.msra.mxu0 0.0
    %5521 = vmatprep.subr.mxu0 0.0
    %5522 = vmatpush1.msra.mxu0 0.0
    %5523 = vmatprep.subr.mxu0 0.0
    %5524 = vmatpush1.msra.mxu0 0.0
    %5525 = vmatprep.subr.mxu0 0.0
    %5526 = vmatpush1.msra.mxu0 0.0
    %5527 = vmatprep.subr.mxu0 0.0
    %5528 = vmatpush1.msra.mxu0 0.0
    %5529 = vmatprep.subr.mxu0 0.0
    %5530 = vmatpush1.msra.mxu0 0.0
    %5531 = vmatprep.subr.mxu0 0.0
    %5532 = vmatpush1.msra.mxu0 0.0
    %5533 = vmatprep.mubr.f32.mxu0 %v4070
    %5534 = vmatmul.mubr.f32.gmra.mrb[0].mxu0 %v1523
    %v5535 = vpop.f32.mrb[0].mxu0
    %v5536 = vadd.f32 %v5333, %v5535
    %v5537 = vpop.f32.mrb[0].mxu0
    %v5538 = vadd.f32 %v5335, %v5537
    %5539 = vmatprep.mubr.f32.mxu0 %v4073
    %5540 = vmatmul.mubr.f32.gmra.mrb[0].mxu0 %v1527
    %v5541 = vpop.f32.mrb[0].mxu0
    %v5542 = vadd.f32 %v5339, %v5541
    %v5543 = vpop.f32.mrb[0].mxu0
    %v5544 = vadd.f32 %v5341, %v5543
    %5545 = vmatprep.mubr.f32.mxu0 %v4076
    %5546 = vmatmul.mubr.f32.gmra.mrb[0].mxu0 %v1531
    %v5547 = vpop.f32.mrb[0].mxu0
    %v5548 = vadd.f32 %v5345, %v5547
    %v5549 = vpop.f32.mrb[0].mxu0
    %v5550 = vadd.f32 %v5347, %v5549
    %5551 = vmatprep.mubr.f32.mxu0 %v4079
    %5552 = vmatmul.mubr.f32.gmra.mrb[0].mxu0 %v1535
    %v5553 = vpop.f32.mrb[0].mxu0
    %v5554 = vadd.f32 %v5351, %v5553
    %v5555 = vpop.f32.mrb[0].mxu0
    %v5556 = vadd.f32 %v5353, %v5555
    %5557 = vmatprep.mubr.f32.mxu0 %v4082
    %5558 = vmatmul.mubr.f32.gmra.mrb[0].mxu0 %v1539
    %v5559 = vpop.f32.mrb[0].mxu0
    %v5560 = vadd.f32 %v5357, %v5559
    %v5561 = vpop.f32.mrb[0].mxu0
    %v5562 = vadd.f32 %v5359, %v5561
    %5563 = vmatprep.mubr.f32.mxu0 %v4085
    %5564 = vmatmul.mubr.f32.gmra.mrb[0].mxu0 %v1543
    %v5565 = vpop.f32.mrb[0].mxu0
    %v5566 = vadd.f32 %v5363, %v5565
    %v5567 = vpop.f32.mrb[0].mxu0
    %v5568 = vadd.f32 %v5365, %v5567
    %5569 = vmatprep.mubr.f32.mxu0 %v4088
    %5570 = vmatmul.mubr.f32.gmra.mrb[0].mxu0 %v1547
    %v5571 = vpop.f32.mrb[0].mxu0
    %v5572 = vadd.f32 %v5369, %v5571
    %v5573 = vpop.f32.mrb[0].mxu0
    %v5574 = vadd.f32 %v5371, %v5573
    %5575 = vmatprep.mubr.f32.mxu0 %v4091
    %5576 = vmatmul.mubr.f32.gmra.mrb[0].mxu0 %v1551
    %v5577 = vpop.f32.mrb[0].mxu0
    %v5578 = vadd.f32 %v5375, %v5577
    %v5579 = vpop.f32.mrb[0].mxu0
    %v5580 = vadd.f32 %v5377, %v5579
    %5581 = vmatprep.mubr.f32.mxu0 %v4094
    %5582 = vmatmul.mubr.f32.gmra.mrb[0].mxu0 %v1555
    %v5583 = vpop.f32.mrb[0].mxu0
    %v5584 = vadd.f32 %v5381, %v5583
    %v5585 = vpop.f32.mrb[0].mxu0
    %v5586 = vadd.f32 %v5383, %v5585
    %5587 = vmatprep.mubr.f32.mxu0 %v4097
    %5588 = vmatmul.mubr.f32.gmra.mrb[0].mxu0 %v1559
    %v5589 = vpop.f32.mrb[0].mxu0
    %v5590 = vadd.f32 %v5387, %v5589
    %v5591 = vpop.f32.mrb[0].mxu0
    %v5592 = vadd.f32 %v5389, %v5591
    %5593 = vmatprep.mubr.f32.mxu0 %v4100
    %5594 = vmatmul.mubr.f32.gmra.mrb[0].mxu0 %v1563
    %v5595 = vpop.f32.mrb[0].mxu0
    %v5596 = vadd.f32 %v5393, %v5595
    %v5597 = vpop.f32.mrb[0].mxu0
    %v5598 = vadd.f32 %v5395, %v5597
    %5599 = vmatprep.mubr.f32.mxu0 %v4103
    %5600 = vmatmul.mubr.f32.gmra.mrb[0].mxu0 %v1567
    %v5601 = vpop.f32.mrb[0].mxu0
    %v5602 = vadd.f32 %v5399, %v5601
    %v5603 = vpop.f32.mrb[0].mxu0
    %v5604 = vadd.f32 %v5401, %v5603
    %5605 = vmatprep.mubr.f32.mxu0 %v4106
    %5606 = vmatmul.mubr.f32.gmra.mrb[0].mxu0 %v1571
    %v5607 = vpop.f32.mrb[0].mxu0
    %v5608 = vadd.f32 %v5405, %v5607
    %v5609 = vpop.f32.mrb[0].mxu0
    %v5610 = vadd.f32 %v5407, %v5609
    %5611 = vmatprep.mubr.f32.mxu0 %v4109
    %5612 = vmatmul.mubr.f32.gmra.mrb[0].mxu0 %v1575
    %v5613 = vpop.f32.mrb[0].mxu0
    %v5614 = vadd.f32 %v5411, %v5613
    %v5615 = vpop.f32.mrb[0].mxu0
    %v5616 = vadd.f32 %v5413, %v5615
    %5617 = vmatprep.mubr.f32.mxu0 %v4112
    %5618 = vmatmul.mubr.f32.gmra.mrb[0].mxu0 %v1579
    %v5619 = vpop.f32.mrb[0].mxu0
    %v5620 = vadd.f32 %v5417, %v5619
    %v5621 = vpop.f32.mrb[0].mxu0
    %v5622 = vadd.f32 %v5419, %v5621
    %5623 = vmatprep.mubr.f32.mxu0 %v4115
    %5624 = vmatmul.mubr.f32.gmra.mrb[0].mxu0 %v1583
    %v5625 = vpop.f32.mrb[0].mxu0
    %v5626 = vadd.f32 %v5423, %v5625
    %v5627 = vpop.f32.mrb[0].mxu0
    %v5628 = vadd.f32 %v5425, %v5627
    %5629 = vmatprep.mubr.f32.mxu0 %v4118
    %5630 = vmatmul.mubr.f32.gmra.mrb[0].mxu0 %v1587
    %v5631 = vpop.f32.mrb[0].mxu0
    %v5632 = vadd.f32 %v5429, %v5631
    %v5633 = vpop.f32.mrb[0].mxu0
    %v5634 = vadd.f32 %v5431, %v5633
    %5635 = vmatprep.mubr.f32.mxu0 %v4121
    %5636 = vmatmul.mubr.f32.gmra.mrb[0].mxu0 %v1591
    %v5637 = vpop.f32.mrb[0].mxu0
    %v5638 = vadd.f32 %v5435, %v5637
    %v5639 = vpop.f32.mrb[0].mxu0
    %v5640 = vadd.f32 %v5437, %v5639
    %5641 = vmatprep.mubr.f32.mxu0 %v4124
    %5642 = vmatmul.mubr.f32.gmra.mrb[0].mxu0 %v1595
    %v5643 = vpop.f32.mrb[0].mxu0
    %v5644 = vadd.f32 %v5441, %v5643
    %v5645 = vpop.f32.mrb[0].mxu0
    %v5646 = vadd.f32 %v5443, %v5645
    %5647 = vmatprep.mubr.f32.mxu0 %v4127
    %5648 = vmatmul.mubr.f32.gmra.mrb[0].mxu0 %v1599
    %v5649 = vpop.f32.mrb[0].mxu0
    %v5650 = vadd.f32 %v5447, %v5649
    %v5651 = vpop.f32.mrb[0].mxu0
    %v5652 = vadd.f32 %v5449, %v5651
    %5653 = vmatprep.mubr.f32.mxu0 %v4130
    %5654 = vmatmul.mubr.f32.gmra.mrb[0].mxu0 %v1603
    %v5655 = vpop.f32.mrb[0].mxu0
    %v5656 = vadd.f32 %v5453, %v5655
    %v5657 = vpop.f32.mrb[0].mxu0
    %v5658 = vadd.f32 %v5455, %v5657
    %5659 = vmatprep.mubr.f32.mxu0 %v4133
    %5660 = vmatmul.mubr.f32.gmra.mrb[0].mxu0 %v1607
    %v5661 = vpop.f32.mrb[0].mxu0
    %v5662 = vadd.f32 %v5459, %v5661
    %v5663 = vpop.f32.mrb[0].mxu0
    %v5664 = vadd.f32 %v5461, %v5663
    %5665 = vmatprep.mubr.f32.mxu0 %v4136
    %5666 = vmatmul.mubr.f32.gmra.mrb[0].mxu0 %v1611
    %v5667 = vpop.f32.mrb[0].mxu0
    %v5668 = vadd.f32 %v5465, %v5667
    %v5669 = vpop.f32.mrb[0].mxu0
    %v5670 = vadd.f32 %v5467, %v5669
    %5671 = vdwg.mxu0
    %v5672 = vld [vmem:[%s7] sm:$0xff]
    %v5673 = vld [vmem:[%s7 + $0x8] sm:$0xff]
    %v5674 = vld [vmem:[%s7 + $0x10] sm:$0xff]
    %v5675 = vld [vmem:[%s7 + $0x18] sm:$0xff]
    %v5676 = vld [vmem:[%s7 + $0x20] sm:$0xff]
    %v5677 = vld [vmem:[%s7 + $0x28] sm:$0xff]
    %v5678 = vld [vmem:[%s7 + $0x30] sm:$0xff]
    %v5679 = vld [vmem:[%s7 + $0x38] sm:$0xff]
    %v5680 = vld [vmem:[%s7 + $0x40] sm:$0xff]
    %v5681 = vld [vmem:[%s7 + $0x48] sm:$0xff]
    %v5682 = vld [vmem:[%s7 + $0x50] sm:$0xff]
    %v5683 = vld [vmem:[%s7 + $0x58] sm:$0xff]
    %v5684 = vld [vmem:[%s7 + $0x60] sm:$0xff]
    %v5685 = vld [vmem:[%s7 + $0x68] sm:$0xff]
    %v5686 = vld [vmem:[%s7 + $0x70] sm:$0xff]
    %v5687 = vld [vmem:[%s7 + $0x78] sm:$0xff]
    %v5688 = vld [vmem:[%s7 + $0x80] sm:$0x1]
    %v5689 = vld [vmem:[%s8] sm:$0x1]
    %v5691 = vlaneseq
    %v5692 = vshrl.u32 %v5691, 7
    %v5693 = vsub.s32 0, %v5692
    %v5694 = vrot.slane %v5689, %v5693
    %vm5696 = vcmask 7168
    %v5698 = vsel %vm5696, %v5538, 0
    %v5701 = vsel %vm5696, %v5544, 0
    %v5704 = vsel %vm5696, %v5550, 0
    %v5707 = vsel %vm5696, %v5556, 0
    %v5710 = vsel %vm5696, %v5562, 0
    %v5713 = vsel %vm5696, %v5568, 0
    %v5716 = vsel %vm5696, %v5574, 0
    %v5719 = vsel %vm5696, %v5580, 0
    %v5722 = vsel %vm5696, %v5586, 0
    %v5725 = vsel %vm5696, %v5592, 0
    %v5728 = vsel %vm5696, %v5598, 0
    %v5731 = vsel %vm5696, %v5604, 0
    %v5734 = vsel %vm5696, %v5610, 0
    %v5737 = vsel %vm5696, %v5616, 0
    %v5740 = vsel %vm5696, %v5622, 0
    %v5743 = vsel %vm5696, %v5628, 0
    %v5746 = vsel %vm5696, %v5634, 0
    %v5749 = vsel %vm5696, %v5640, 0
    %v5752 = vsel %vm5696, %v5646, 0
    %v5755 = vsel %vm5696, %v5652, 0
    %v5758 = vsel %vm5696, %v5658, 0
    %v5761 = vsel %vm5696, %v5664, 0
    %v5764 = vsel %vm5696, %v5670, 0
    %v5767 = vsel %vm1764, %v5688, 0
    %5769 = vmatprep.subr.mxu0 0.0
    %5770 = vmatpush1.msra.mxu0 %v5672
    %5771 = vmatprep.subr.mxu0 0.0
    %5772 = vmatpush1.msra.mxu0 %v5673
    %5773 = vmatprep.subr.mxu0 0.0
    %5774 = vmatpush1.msra.mxu0 %v5674
    %5775 = vmatprep.subr.mxu0 0.0
    %5776 = vmatpush1.msra.mxu0 %v5675
    %5777 = vmatprep.subr.mxu0 0.0
    %5778 = vmatpush1.msra.mxu0 %v5676
    %5779 = vmatprep.subr.mxu0 0.0
    %5780 = vmatpush1.msra.mxu0 %v5677
    %5781 = vmatprep.subr.mxu0 0.0
    %5782 = vmatpush1.msra.mxu0 %v5678
    %5783 = vmatprep.subr.mxu0 0.0
    %5784 = vmatpush1.msra.mxu0 %v5679
    %5785 = vmatprep.subr.mxu0 0.0
    %5786 = vmatpush1.msra.mxu0 %v5680
    %5787 = vmatprep.subr.mxu0 0.0
    %5788 = vmatpush1.msra.mxu0 %v5681
    %5789 = vmatprep.subr.mxu0 0.0
    %5790 = vmatpush1.msra.mxu0 %v5682
    %5791 = vmatprep.subr.mxu0 0.0
    %5792 = vmatpush1.msra.mxu0 %v5683
    %5793 = vmatprep.subr.mxu0 0.0
    %5794 = vmatpush1.msra.mxu0 %v5684
    %5795 = vmatprep.subr.mxu0 0.0
    %5796 = vmatpush1.msra.mxu0 %v5685
    %5797 = vmatprep.subr.mxu0 0.0
    %5798 = vmatpush1.msra.mxu0 %v5686
    %5799 = vmatprep.subr.mxu0 0.0
    %5800 = vmatpush1.msra.mxu0 %v5687
    %5801 = vmatprep.subr.mxu0 0.0
    %5802 = vmatpush1.msra.mxu0 %v5767
    %5803 = vmatprep.subr.mxu0 0.0
    %5804 = vmatpush1.msra.mxu0 0.0
    %5805 = vmatprep.subr.mxu0 0.0
    %5806 = vmatpush1.msra.mxu0 0.0
    %5807 = vmatprep.subr.mxu0 0.0
    %5808 = vmatpush1.msra.mxu0 0.0
    %5809 = vmatprep.subr.mxu0 0.0
    %5810 = vmatpush1.msra.mxu0 0.0
    %5811 = vmatprep.subr.mxu0 0.0
    %5812 = vmatpush1.msra.mxu0 0.0
    %5813 = vmatprep.subr.mxu0 0.0
    %5814 = vmatpush1.msra.mxu0 0.0
    %5815 = vmatprep.subr.mxu0 0.0
    %5816 = vmatpush1.msra.mxu0 0.0
    %5817 = vmatprep.subr.mxu0 0.0
    %5818 = vmatpush1.msra.mxu0 0.0
    %5819 = vmatprep.subr.mxu0 0.0
    %5820 = vmatpush1.msra.mxu0 0.0
    %5821 = vmatprep.subr.mxu0 0.0
    %5822 = vmatpush1.msra.mxu0 0.0
    %5823 = vmatprep.subr.mxu0 0.0
    %5824 = vmatpush1.msra.mxu0 0.0
    %5825 = vmatprep.subr.mxu0 0.0
    %5826 = vmatpush1.msra.mxu0 0.0
    %5827 = vmatprep.subr.mxu0 0.0
    %5828 = vmatpush1.msra.mxu0 0.0
    %5829 = vmatprep.subr.mxu0 0.0
    %5830 = vmatpush1.msra.mxu0 0.0
    %5831 = vmatprep.subr.mxu0 0.0
    %5832 = vmatpush1.msra.mxu0 0.0
    %5833 = vmatprep.mubr.f32.mxu0 %v5698
    %5834 = vmatmul.mubr.f32.gmra.mrb[0].mxu0 %v5536
    %v5835 = vpop.f32.mrb[0].mxu0
    %v5836 = vadd.f32 %v5694, %v5835
    %v5837 = vpop.f32.mrb[0].mxu0
    %5838 = vmatprep.mubr.f32.mxu0 %v5701
    %5839 = vmatmul.mubr.f32.gmra.mrb[0].mxu0 %v5542
    %v5840 = vpop.f32.mrb[0].mxu0
    %v5841 = vadd.f32 %v5694, %v5840
    %v5842 = vpop.f32.mrb[0].mxu0
    %5843 = vmatprep.mubr.f32.mxu0 %v5704
    %5844 = vmatmul.mubr.f32.gmra.mrb[0].mxu0 %v5548
    %v5845 = vpop.f32.mrb[0].mxu0
    %v5846 = vadd.f32 %v5694, %v5845
    %v5847 = vpop.f32.mrb[0].mxu0
    %5848 = vmatprep.mubr.f32.mxu0 %v5707
    %5849 = vmatmul.mubr.f32.gmra.mrb[0].mxu0 %v5554
    %v5850 = vpop.f32.mrb[0].mxu0
    %v5851 = vadd.f32 %v5694, %v5850
    %v5852 = vpop.f32.mrb[0].mxu0
    %5853 = vmatprep.mubr.f32.mxu0 %v5710
    %5854 = vmatmul.mubr.f32.gmra.mrb[0].mxu0 %v5560
    %v5855 = vpop.f32.mrb[0].mxu0
    %v5856 = vadd.f32 %v5694, %v5855
    %v5857 = vpop.f32.mrb[0].mxu0
    %5858 = vmatprep.mubr.f32.mxu0 %v5713
    %5859 = vmatmul.mubr.f32.gmra.mrb[0].mxu0 %v5566
    %v5860 = vpop.f32.mrb[0].mxu0
    %v5861 = vadd.f32 %v5694, %v5860
    %v5862 = vpop.f32.mrb[0].mxu0
    %5863 = vmatprep.mubr.f32.mxu0 %v5716
    %5864 = vmatmul.mubr.f32.gmra.mrb[0].mxu0 %v5572
    %v5865 = vpop.f32.mrb[0].mxu0
    %v5866 = vadd.f32 %v5694, %v5865
    %v5867 = vpop.f32.mrb[0].mxu0
    %5868 = vmatprep.mubr.f32.mxu0 %v5719
    %5869 = vmatmul.mubr.f32.gmra.mrb[0].mxu0 %v5578
    %v5870 = vpop.f32.mrb[0].mxu0
    %v5871 = vadd.f32 %v5694, %v5870
    %v5872 = vpop.f32.mrb[0].mxu0
    %5873 = vmatprep.mubr.f32.mxu0 %v5722
    %5874 = vmatmul.mubr.f32.gmra.mrb[0].mxu0 %v5584
    %v5875 = vpop.f32.mrb[0].mxu0
    %v5876 = vadd.f32 %v5694, %v5875
    %v5877 = vpop.f32.mrb[0].mxu0
    %5878 = vmatprep.mubr.f32.mxu0 %v5725
    %5879 = vmatmul.mubr.f32.gmra.mrb[0].mxu0 %v5590
    %v5880 = vpop.f32.mrb[0].mxu0
    %v5881 = vadd.f32 %v5694, %v5880
    %v5882 = vpop.f32.mrb[0].mxu0
    %5883 = vmatprep.mubr.f32.mxu0 %v5728
    %5884 = vmatmul.mubr.f32.gmra.mrb[0].mxu0 %v5596
    %v5885 = vpop.f32.mrb[0].mxu0
    %v5886 = vadd.f32 %v5694, %v5885
    %v5887 = vpop.f32.mrb[0].mxu0
    %5888 = vmatprep.mubr.f32.mxu0 %v5731
    %5889 = vmatmul.mubr.f32.gmra.mrb[0].mxu0 %v5602
    %v5890 = vpop.f32.mrb[0].mxu0
    %v5891 = vadd.f32 %v5694, %v5890
    %v5892 = vpop.f32.mrb[0].mxu0
    %5893 = vmatprep.mubr.f32.mxu0 %v5734
    %5894 = vmatmul.mubr.f32.gmra.mrb[0].mxu0 %v5608
    %v5895 = vpop.f32.mrb[0].mxu0
    %v5896 = vadd.f32 %v5694, %v5895
    %v5897 = vpop.f32.mrb[0].mxu0
    %5898 = vmatprep.mubr.f32.mxu0 %v5737
    %5899 = vmatmul.mubr.f32.gmra.mrb[0].mxu0 %v5614
    %v5900 = vpop.f32.mrb[0].mxu0
    %v5901 = vadd.f32 %v5694, %v5900
    %v5902 = vpop.f32.mrb[0].mxu0
    %5903 = vmatprep.mubr.f32.mxu0 %v5740
    %5904 = vmatmul.mubr.f32.gmra.mrb[0].mxu0 %v5620
    %v5905 = vpop.f32.mrb[0].mxu0
    %v5906 = vadd.f32 %v5694, %v5905
    %v5907 = vpop.f32.mrb[0].mxu0
    %5908 = vmatprep.mubr.f32.mxu0 %v5743
    %5909 = vmatmul.mubr.f32.gmra.mrb[0].mxu0 %v5626
    %v5910 = vpop.f32.mrb[0].mxu0
    %v5911 = vadd.f32 %v5694, %v5910
    %v5912 = vpop.f32.mrb[0].mxu0
    %5913 = vmatprep.mubr.f32.mxu0 %v5746
    %5914 = vmatmul.mubr.f32.gmra.mrb[0].mxu0 %v5632
    %v5915 = vpop.f32.mrb[0].mxu0
    %v5916 = vadd.f32 %v5694, %v5915
    %v5917 = vpop.f32.mrb[0].mxu0
    %5918 = vmatprep.mubr.f32.mxu0 %v5749
    %5919 = vmatmul.mubr.f32.gmra.mrb[0].mxu0 %v5638
    %v5920 = vpop.f32.mrb[0].mxu0
    %v5921 = vadd.f32 %v5694, %v5920
    %v5922 = vpop.f32.mrb[0].mxu0
    %5923 = vmatprep.mubr.f32.mxu0 %v5752
    %5924 = vmatmul.mubr.f32.gmra.mrb[0].mxu0 %v5644
    %v5925 = vpop.f32.mrb[0].mxu0
    %v5926 = vadd.f32 %v5694, %v5925
    %v5927 = vpop.f32.mrb[0].mxu0
    %5928 = vmatprep.mubr.f32.mxu0 %v5755
    %5929 = vmatmul.mubr.f32.gmra.mrb[0].mxu0 %v5650
    %v5930 = vpop.f32.mrb[0].mxu0
    %v5931 = vadd.f32 %v5694, %v5930
    %v5932 = vpop.f32.mrb[0].mxu0
    %5933 = vmatprep.mubr.f32.mxu0 %v5758
    %5934 = vmatmul.mubr.f32.gmra.mrb[0].mxu0 %v5656
    %v5935 = vpop.f32.mrb[0].mxu0
    %v5936 = vadd.f32 %v5694, %v5935
    %v5937 = vpop.f32.mrb[0].mxu0
    %5938 = vmatprep.mubr.f32.mxu0 %v5761
    %5939 = vmatmul.mubr.f32.gmra.mrb[0].mxu0 %v5662
    %v5940 = vpop.f32.mrb[0].mxu0
    %v5941 = vadd.f32 %v5694, %v5940
    %v5942 = vpop.f32.mrb[0].mxu0
    %5943 = vmatprep.mubr.f32.mxu0 %v5764
    %5944 = vmatmul.mubr.f32.gmra.mrb[0].mxu0 %v5668
    %v5945 = vpop.f32.mrb[0].mxu0
    %v5946 = vadd.f32 %v5694, %v5945
    %v5947 = vpop.f32.mrb[0].mxu0
    %5948 = vdwg.mxu0
    %5949 = vst [vmem:[#allocation3] sm:$0xff] %v5836
    %5950 = vst [vmem:[#allocation3 + $0x8] sm:$0xff] %v5841
    %5951 = vst [vmem:[#allocation3 + $0x10] sm:$0xff] %v5846
    %5952 = vst [vmem:[#allocation3 + $0x18] sm:$0xff] %v5851
    %5953 = vst [vmem:[#allocation3 + $0x20] sm:$0xff] %v5856
    %5954 = vst [vmem:[#allocation3 + $0x28] sm:$0xff] %v5861
    %5955 = vst [vmem:[#allocation3 + $0x30] sm:$0xff] %v5866
    %5956 = vst [vmem:[#allocation3 + $0x38] sm:$0xff] %v5871
    %5957 = vst [vmem:[#allocation3 + $0x40] sm:$0xff] %v5876
    %5958 = vst [vmem:[#allocation3 + $0x48] sm:$0xff] %v5881
    %5959 = vst [vmem:[#allocation3 + $0x50] sm:$0xff] %v5886
    %5960 = vst [vmem:[#allocation3 + $0x58] sm:$0xff] %v5891
    %5961 = vst [vmem:[#allocation3 + $0x60] sm:$0xff] %v5896
    %5962 = vst [vmem:[#allocation3 + $0x68] sm:$0xff] %v5901
    %5963 = vst [vmem:[#allocation3 + $0x70] sm:$0xff] %v5906
    %5964 = vst [vmem:[#allocation3 + $0x78] sm:$0xff] %v5911
    %5965 = vst [vmem:[#allocation3 + $0x80] sm:$0xff] %v5916
    %5966 = vst [vmem:[#allocation3 + $0x88] sm:$0xff] %v5921
    %5967 = vst [vmem:[#allocation3 + $0x90] sm:$0xff] %v5926
    %5968 = vst [vmem:[#allocation3 + $0x98] sm:$0xff] %v5931
    %5969 = vst [vmem:[#allocation3 + $0xa0] sm:$0xff] %v5936
    %5970 = vst [vmem:[#allocation3 + $0xa8] sm:$0xff] %v5941
    %5971 = vst [vmem:[#allocation3 + $0xb0] sm:$0x1] %v5946
    // Predicated region
    $region38: #{tpu_custom_call.1} parent=1 // pred_check
      _
    $region39: #{tpu_custom_call.1} parent=1 // pred_check_branch
      %5973 = sbr.rel (0) target = $region41
    $region40: #{tpu_custom_call.1} parent=1 // pred_region
      %s5975 = ssub.s32 2944, 2944
      %5976 = vsyncadd [#allocation4], %s5975
      %s5977 = sshll.u32 [#allocation3], 4
      %s5978 = int_to_ptr.vmem [resolvable:$true] %s5977
      %5983 = dma.vmem_to_hbm [thread:$0]  %s5978, 2944, %s9, [#allocation4], 128, 128, 8
    $region41: #{tpu_custom_call.1} parent=1 // pred_fallthru
      _
    // Predicated region
    $region42: #{tpu_custom_call.1} parent=1 // pred_check
      _
    $region43: #{tpu_custom_call.1} parent=1 // pred_check_branch
      %5985 = sbr.rel (0) target = $region45
    $region44: #{tpu_custom_call.1} parent=1 // pred_region
      %5986 = dma.done [#allocation4], 2944
    $region45: #{tpu_custom_call.1} parent=1 // pred_fallthru
      _
    %5987 = vsyncpa [#allocation4], 1

</llo_original>
